<compile_context>
chip_gen: v7x
topology: tpu7x:2x2x1
jax: 0.10.0
libtpu: 0.0.40
codegen_flags: <defaults>
</compile_context>

<pallas_src>
import functools

import jax
import jax.numpy as jnp
from jax.experimental import pallas as pl
from jax.experimental.pallas import tpu as pltpu


def _round_up(x, m):
    return (x + m - 1) // m * m


# ----------------------------------------------------------------------------
# Fused kernel: per grid step = one tile of Bt batch elements.
#   inputs : merged padded embedding slab (Bt*P8, E) bf16, mask (Bt*S8, 1),
#            all weights (bf16 matmul operands, f32 biases / BN params)
#   output : class logits (Bt, C) f32
# ----------------------------------------------------------------------------
def _drnn_kernel(slab_ref, mask_ref,
                 wih_f_ref, whh_f_ref, bgi_f_ref, bhn_f_ref,
                 wih_b_ref, whh_b_ref, bgi_b_ref, bhn_b_ref,
                 bns_f_ref, bns_b_ref, bnb_f_ref, bnb_b_ref,
                 wm_f_ref, wm_b_ref, bm_ref, wl_ref, bl_ref,
                 out_ref,
                 gi_f_ref, gi_b_ref, hf_ref, hb_ref,
                 *, seq_len, padded_len, window, hidden, batch_tile):
    S, P, W, H, Bt = seq_len, padded_len, window, hidden, batch_tile
    f32 = jnp.float32
    bf16 = jnp.bfloat16

    slab = slab_ref[...]                                       # (Bt*P, E) bf16

    # Hoisted input->hidden gates: ONE big matmul per direction (M = Bt*P),
    # bf16 operands with f32 accumulation; b_ih (+ the r/z half of b_hh) is
    # folded into the bias added here.  Results go to VMEM scratch so the
    # per-step slices below are cheap ref loads, not in-register relayouts.
    gi_f = jnp.dot(slab, wih_f_ref[...], preferred_element_type=f32) + bgi_f_ref[...]
    gi_b = jnp.dot(slab, wih_b_ref[...], preferred_element_type=f32) + bgi_b_ref[...]
    gi_f_ref[...] = gi_f.reshape(Bt, P, 3 * H)
    gi_b_ref[...] = gi_b.reshape(Bt, P, 3 * H)

    hf_ref[...] = jnp.zeros_like(hf_ref)
    hb_ref[...] = jnp.zeros_like(hb_ref)

    whh_f = whh_f_ref[...]                                     # (H, 3H) bf16
    whh_b = whh_b_ref[...]
    bhn_f = jnp.broadcast_to(bhn_f_ref[...], (Bt * S, H))      # hoisted broadcasts
    bhn_b = jnp.broadcast_to(bhn_b_ref[...], (Bt * S, H))

    def gru_step(h_ref, gi_t, whh, bhn):
        # PyTorch GRU gate order (r, z, n); r applied to (h @ W_hn + b_hn).
        h = h_ref[...]                                         # (Bt*S, H) f32
        gh = jnp.dot(h.astype(bf16), whh, preferred_element_type=f32)
        rz = jax.nn.sigmoid(gi_t[:, :2 * H] + gh[:, :2 * H])
        r = rz[:, :H]
        z = rz[:, H:]
        n = jnp.tanh(gi_t[:, 2 * H:] + r * (gh[:, 2 * H:] + bhn))
        h_ref[...] = (1.0 - z) * n + z * h

    # window_size is a small static constant: all slice starts below are
    # compile-time constants and the recurrent state lives in VMEM scratch,
    # so this unrolled loop carries no large live values across iterations.
    for t in range(W):
        gf = gi_f_ref[:, t:t + S, :].reshape(Bt * S, 3 * H)
        tb = 2 * (W - 1) - t       # backward GRU consumes its window back-to-front
        gb = gi_b_ref[:, tb:tb + S, :].reshape(Bt * S, 3 * H)
        gru_step(hf_ref, gf, whh_f, bhn_f)
        gru_step(hb_ref, gb, whh_b, bhn_b)
    # TODO(synk): nn.Dropout between GRU steps / before the classifier is
    # identity in eval mode.

    # ---- head: mask -> eval-mode BN (scale/shift) -> mask -> MLP -> pad mask
    #      -> max-pool over S -> final linear.  Forward/backward halves are
    #      kept split -> no lane-dim concatenation, two clean MXU matmuls.
    m = mask_ref[...]                                          # (Bt*S, 1) f32
    hf = hf_ref[...] * m
    hb = hb_ref[...] * m
    bn_f = (hf * bns_f_ref[...] + bnb_f_ref[...]) * m
    bn_b = (hb * bns_b_ref[...] + bnb_b_ref[...]) * m
    mlp = (jnp.dot(bn_f.astype(bf16), wm_f_ref[...], preferred_element_type=f32)
           + jnp.dot(bn_b.astype(bf16), wm_b_ref[...], preferred_element_type=f32)
           + bm_ref[...])                                      # (Bt*S, 2H) f32
    mlp = mlp * m + (m - 1.0) * 65500.0
    pooled = jnp.max(mlp.reshape(Bt, S, 2 * H), axis=1)        # (Bt, 2H)
    out_ref[...] = (jnp.dot(pooled.astype(bf16), wl_ref[...],
                            preferred_element_type=f32) + bl_ref[...])


# ----------------------------------------------------------------------------
# Wrapper reproducing DRNN.forward (x_pre, x_alt, x_cur, seq_lens are unused by
# the original forward as well).
# ----------------------------------------------------------------------------
def drnn_forward(x, params, *, window_size, batch_tile=None):
    emb = params["embedding"]                     # (V, E) f32
    B, S = x.shape
    E = emb.shape[1]
    H = params["whh_f"].shape[0]
    C = params["lin_w"].shape[1]
    W = window_size

    S8 = _round_up(S, 8)                          # padded #windows per element
    P = S8 + 2 * (W - 1)                          # both-ends padded length
    P8 = _round_up(P, 8)

    if batch_tile is None:
        # Target M = Bt*S8 >= 256 for the recurrence matmul, Bt a multiple of 8.
        batch_tile = min(_round_up(B, 8), _round_up(max(1, 256 // S8), 8))
    Bt = _round_up(batch_tile, 8)
    Bp = _round_up(B, Bt)                         # padded batch (tail rows masked)
    grid = Bp // Bt

    # --- token-level prep (XLA): pad batch/seq, build ONE merged padded slab.
    x_pad = jnp.zeros((Bp, S8), x.dtype).at[:B, :S].set(x)
    # mask = where(x > 0, 1, x).float()  (pad rows/cols -> 0)
    mask = jnp.where(x_pad > 0, jnp.ones_like(x_pad), x_pad).astype(jnp.float32)
    mask_flat = mask.reshape(Bp * S8, 1)

    x_slab = jnp.zeros((Bp, P8), x.dtype).at[:, W - 1:W - 1 + S8].set(x_pad)
    emb_bf16 = emb.astype(jnp.bfloat16)
    slab = jnp.take(emb_bf16, x_slab, axis=0).reshape(Bp * P8, E)   # bf16
    # TODO(synk): on v5e one could go further and gather embedding rows
    # in-kernel from HBM (scalar-prefetched token ids) to skip this slab.

    def fold_bias(bih, bhh):
        # b_hr, b_hz add linearly inside the sigmoid -> fold into the hoisted
        # input-gate bias; only b_hn stays separate (it sits inside r * (...)).
        folded = bih + jnp.concatenate(
            [bhh[:, :2 * H], jnp.zeros((1, H), jnp.float32)], axis=1)
        return folded.astype(jnp.float32), bhh[:, 2 * H:].astype(jnp.float32)

    bgi_f, bhn_f = fold_bias(params["bih_f"], params["bhh_f"])
    bgi_b, bhn_b = fold_bias(params["bih_b"], params["bhh_b"])

    bf = jnp.bfloat16
    wih_f = params["wih_f"].astype(bf)
    whh_f = params["whh_f"].astype(bf)
    wih_b = params["wih_b"].astype(bf)
    whh_b = params["whh_b"].astype(bf)
    wm_f = params["mlp_w"][:H, :].astype(bf)      # forward-half of the MLP weight
    wm_b = params["mlp_w"][H:, :].astype(bf)      # backward-half
    bm = params["mlp_b"].astype(jnp.float32)
    wl = params["lin_w"].astype(bf)
    bl = params["lin_b"].astype(jnp.float32)
    bns_f = params["bn_scale"][:, :H]
    bns_b = params["bn_scale"][:, H:]
    bnb_f = params["bn_shift"][:, :H]
    bnb_b = params["bn_shift"][:, H:]

    kernel = functools.partial(_drnn_kernel, seq_len=S8, padded_len=P8,
                               window=W, hidden=H, batch_tile=Bt)
    rep = lambda i: (0, 0)            # weight blocks: same block every step

    out = pl.pallas_call(
        kernel,
        out_shape=jax.ShapeDtypeStruct((Bp, C), jnp.float32),
        grid_spec=pltpu.PrefetchScalarGridSpec(
            num_scalar_prefetch=0,
            grid=(grid,),
            in_specs=[
                pl.BlockSpec((Bt * P8, E), lambda i: (i, 0)),   # merged emb slab
                pl.BlockSpec((Bt * S8, 1), lambda i: (i, 0)),   # mask
                pl.BlockSpec((E, 3 * H), rep),                  # wih_f
                pl.BlockSpec((H, 3 * H), rep),                  # whh_f
                pl.BlockSpec((1, 3 * H), rep),                  # bgi_f
                pl.BlockSpec((1, H), rep),                      # bhn_f
                pl.BlockSpec((E, 3 * H), rep),                  # wih_b
                pl.BlockSpec((H, 3 * H), rep),                  # whh_b
                pl.BlockSpec((1, 3 * H), rep),                  # bgi_b
                pl.BlockSpec((1, H), rep),                      # bhn_b
                pl.BlockSpec((1, H), rep),                      # bn_scale fwd
                pl.BlockSpec((1, H), rep),                      # bn_scale bwd
                pl.BlockSpec((1, H), rep),                      # bn_shift fwd
                pl.BlockSpec((1, H), rep),                      # bn_shift bwd
                pl.BlockSpec((H, 2 * H), rep),                  # mlp_w fwd half
                pl.BlockSpec((H, 2 * H), rep),                  # mlp_w bwd half
                pl.BlockSpec((1, 2 * H), rep),                  # mlp_b
                pl.BlockSpec((2 * H, C), rep),                  # lin_w
                pl.BlockSpec((1, C), rep),                      # lin_b
            ],
            out_specs=pl.BlockSpec((Bt, C), lambda i: (i, 0)),
            scratch_shapes=[
                pltpu.VMEM((Bt, P8, 3 * H), jnp.float32),       # gi_f
                pltpu.VMEM((Bt, P8, 3 * H), jnp.float32),       # gi_b
                pltpu.VMEM((Bt * S8, H), jnp.float32),          # h_f
                pltpu.VMEM((Bt * S8, H), jnp.float32),          # h_b
            ],
        ),
        compiler_params=pltpu.CompilerParams(
            dimension_semantics=("parallel",)),
    )(slab, mask_flat,
      wih_f, whh_f, bgi_f, bhn_f,
      wih_b, whh_b, bgi_b, bhn_b,
      bns_f, bns_b, bnb_f, bnb_b,
      wm_f, wm_b, bm, wl, bl)
    return out[:B]


# ----------------------------------------------------------------------------
# Pure-JAX f32 reference (for correctness check only).
# ----------------------------------------------------------------------------
def _gru_ref(windows, wih, whh, bih, bhh):
    N, W, E = windows.shape
    H = whh.shape[0]
    h = jnp.zeros((N, H), jnp.float32)
    for t in range(W):
        gi = windows[:, t, :] @ wih + bih
        gh = h @ whh + bhh
        r = jax.nn.sigmoid(gi[:, :H] + gh[:, :H])
        z = jax.nn.sigmoid(gi[:, H:2 * H] + gh[:, H:2 * H])
        n = jnp.tanh(gi[:, 2 * H:] + r * gh[:, 2 * H:])
        h = (1.0 - z) * n + z * h
    return h


def _ref_forward(x, params, *, window_size):
    emb = params["embedding"]
    B, S = x.shape
    H = params["whh_f"].shape[0]
    W = window_size
    mask = jnp.where(x > 0, jnp.ones_like(x), x).astype(jnp.float32)
    mask3 = mask[:, :, None]
    front_emb = emb[jnp.pad(x, ((0, 0), (W - 1, 0)))]
    tail_emb = emb[jnp.pad(x, ((0, 0), (0, W - 1)))]
    fw = jnp.stack([front_emb[:, i:i + W] for i in range(S)], 0).reshape(S * B, W, -1)
    tw = jnp.stack([tail_emb[:, i:i + W] for i in range(S)], 0).reshape(S * B, W, -1)
    tw = tw[:, ::-1, :]
    fh = _gru_ref(fw, params["wih_f"], params["whh_f"], params["bih_f"],
                  params["bhh_f"]).reshape(S, B, H).transpose(1, 0, 2)
    th = _gru_ref(tw, params["wih_b"], params["whh_b"], params["bih_b"],
                  params["bhh_b"]).reshape(S, B, H).transpose(1, 0, 2)
    hidden = jnp.concatenate([fh, th], axis=2) * mask3
    hidden = hidden * params["bn_scale"][None] + params["bn_shift"][None]
    hidden = hidden * mask3
    mlp = jnp.einsum("bsh,hk->bsk", hidden, params["mlp_w"]) + params["mlp_b"][None]
    mlp = mlp * mask3 + (mask3 - 1.0) * 65500.0
    pooled = jnp.max(mlp, axis=1)                          # (B, 2H)
    return pooled @ params["lin_w"] + params["lin_b"]


if __name__ == "__main__":
    # Small synthetic config: batch=2, seq=8, vocab=50, emb=32, hidden=32,
    # window_size=3, n_class=8.
    B, S = 2, 8
    V, E, H, C, W = 50, 32, 32, 8, 3

    key = jax.random.PRNGKey(0)
    ks = jax.random.split(key, 20)

    def nrm(k, shape, s=0.1):
        return (jax.random.normal(k, shape) * s).astype(jnp.float32)

    params = dict(
        embedding=nrm(ks[0], (V, E), 0.5),
        wih_f=nrm(ks[1], (E, 3 * H)), whh_f=nrm(ks[2], (H, 3 * H)),
        bih_f=nrm(ks[3], (1, 3 * H)), bhh_f=nrm(ks[4], (1, 3 * H)),
        wih_b=nrm(ks[5], (E, 3 * H)), whh_b=nrm(ks[6], (H, 3 * H)),
        bih_b=nrm(ks[7], (1, 3 * H)), bhh_b=nrm(ks[8], (1, 3 * H)),
        mlp_w=nrm(ks[9], (2 * H, 2 * H)), mlp_b=nrm(ks[10], (1, 2 * H)),
        lin_w=nrm(ks[11], (2 * H, C)), lin_b=nrm(ks[12], (1, C)),
    )
    # BatchNorm1d(2H), eval mode: fold (gamma, beta, running stats) to scale/shift.
    gamma = 1.0 + nrm(ks[13], (2 * H,))
    beta = nrm(ks[14], (2 * H,))
    running_mean = nrm(ks[15], (2 * H,))
    running_var = 1.0 + 0.1 * jnp.abs(jax.random.normal(ks[16], (2 * H,)))
    scale = gamma / jnp.sqrt(running_var + 1e-5)
    params["bn_scale"] = scale.reshape(1, 2 * H).astype(jnp.float32)
    params["bn_shift"] = (beta - running_mean * scale).reshape(1, 2 * H).astype(jnp.float32)

    x = jax.random.randint(ks[17], (B, S), 1, V, dtype=jnp.int32)
    x = x.at[0, -2:].set(0)   # a couple of padding tokens to exercise the mask
    x = x.at[1, -1:].set(0)

    out = drnn_forward(x, params, window_size=W)
    out = jax.block_until_ready(out)

    ref = _ref_forward(x, params, window_size=W)
    assert out.shape == (B, C)
    # bf16 MXU operands (f32 accumulation) -> compare to the f32 reference with
    # a bf16-appropriate tolerance.
    assert jnp.allclose(out, ref, rtol=2e-2, atol=2e-2), (out, ref)

    print("KERNEL_OK")
</pallas_src>

<mosaic_0001>
module attributes {stable_mosaic.version = 11 : i64} {
  func.func @_drnn_kernel(%arg0: i32, %arg1: memref<128x32xbf16, #tpu.memory_space<vmem>>, %arg2: memref<64x1xf32, #tpu.memory_space<vmem>>, %arg3: memref<32x96xbf16, #tpu.memory_space<vmem>>, %arg4: memref<32x96xbf16, #tpu.memory_space<vmem>>, %arg5: memref<1x96xf32, #tpu.memory_space<vmem>>, %arg6: memref<1x32xf32, #tpu.memory_space<vmem>>, %arg7: memref<32x96xbf16, #tpu.memory_space<vmem>>, %arg8: memref<32x96xbf16, #tpu.memory_space<vmem>>, %arg9: memref<1x96xf32, #tpu.memory_space<vmem>>, %arg10: memref<1x32xf32, #tpu.memory_space<vmem>>, %arg11: memref<1x32xf32, #tpu.memory_space<vmem>>, %arg12: memref<1x32xf32, #tpu.memory_space<vmem>>, %arg13: memref<1x32xf32, #tpu.memory_space<vmem>>, %arg14: memref<1x32xf32, #tpu.memory_space<vmem>>, %arg15: memref<32x64xbf16, #tpu.memory_space<vmem>>, %arg16: memref<32x64xbf16, #tpu.memory_space<vmem>>, %arg17: memref<1x64xf32, #tpu.memory_space<vmem>>, %arg18: memref<64x8xbf16, #tpu.memory_space<vmem>>, %arg19: memref<1x8xf32, #tpu.memory_space<vmem>>, %arg20: memref<8x8xf32, #tpu.memory_space<vmem>>, %arg21: memref<8x16x96xf32, #tpu.memory_space<vmem>>, %arg22: memref<8x16x96xf32, #tpu.memory_space<vmem>>, %arg23: memref<64x32xf32, #tpu.memory_space<vmem>>, %arg24: memref<64x32xf32, #tpu.memory_space<vmem>>) attributes {dimension_semantics = [#tpu.dimension_semantics<parallel>], iteration_bounds = array<i64: 1>, scalar_prefetch = 0 : i64, scratch_operands = 4 : i64, tpu.core_type = #tpu.core_type<tc>, window_params = [{transform_indices = @transform_0, window_bounds = array<i64: 128, 32>}, {transform_indices = @transform_1, window_bounds = array<i64: 64, 1>}, {pipeline_mode = #tpu.pipeline_mode<synchronous>, transform_indices = @transform_2, window_bounds = array<i64: 32, 96>}, {pipeline_mode = #tpu.pipeline_mode<synchronous>, transform_indices = @transform_3, window_bounds = array<i64: 32, 96>}, {pipeline_mode = #tpu.pipeline_mode<synchronous>, transform_indices = @transform_4, window_bounds = array<i64: 1, 96>}, {pipeline_mode = #tpu.pipeline_mode<synchronous>, transform_indices = @transform_5, window_bounds = array<i64: 1, 32>}, {pipeline_mode = #tpu.pipeline_mode<synchronous>, transform_indices = @transform_6, window_bounds = array<i64: 32, 96>}, {pipeline_mode = #tpu.pipeline_mode<synchronous>, transform_indices = @transform_7, window_bounds = array<i64: 32, 96>}, {pipeline_mode = #tpu.pipeline_mode<synchronous>, transform_indices = @transform_8, window_bounds = array<i64: 1, 96>}, {pipeline_mode = #tpu.pipeline_mode<synchronous>, transform_indices = @transform_9, window_bounds = array<i64: 1, 32>}, {pipeline_mode = #tpu.pipeline_mode<synchronous>, transform_indices = @transform_10, window_bounds = array<i64: 1, 32>}, {pipeline_mode = #tpu.pipeline_mode<synchronous>, transform_indices = @transform_11, window_bounds = array<i64: 1, 32>}, {pipeline_mode = #tpu.pipeline_mode<synchronous>, transform_indices = @transform_12, window_bounds = array<i64: 1, 32>}, {pipeline_mode = #tpu.pipeline_mode<synchronous>, transform_indices = @transform_13, window_bounds = array<i64: 1, 32>}, {pipeline_mode = #tpu.pipeline_mode<synchronous>, transform_indices = @transform_14, window_bounds = array<i64: 32, 64>}, {pipeline_mode = #tpu.pipeline_mode<synchronous>, transform_indices = @transform_15, window_bounds = array<i64: 32, 64>}, {pipeline_mode = #tpu.pipeline_mode<synchronous>, transform_indices = @transform_16, window_bounds = array<i64: 1, 64>}, {pipeline_mode = #tpu.pipeline_mode<synchronous>, transform_indices = @transform_17, window_bounds = array<i64: 64, 8>}, {pipeline_mode = #tpu.pipeline_mode<synchronous>, transform_indices = @transform_18, window_bounds = array<i64: 1, 8>}, {transform_indices = @transform_19, window_bounds = array<i64: 8, 8>}]} {
    %c0 = arith.constant 0 : index
    %c0_0 = arith.constant 0 : index
    %0 = vector.load %arg1[%c0, %c0_0] : memref<128x32xbf16, #tpu.memory_space<vmem>>, vector<128x32xbf16>
    %c0_1 = arith.constant 0 : index
    %c0_2 = arith.constant 0 : index
    %1 = vector.load %arg3[%c0_1, %c0_2] : memref<32x96xbf16, #tpu.memory_space<vmem>>, vector<32x96xbf16>
    %cst = arith.constant dense<0.000000e+00> : vector<128x96xf32>
    %2 = tpu.matmul %0, %1, %cst {dimension_numbers = #tpu.dot_dimension_numbers<[1], [0], [0], [1], [0, 0, 1, 1], [], []>} : vector<128x32xbf16>, vector<32x96xbf16>, vector<128x96xf32> -> vector<128x96xf32>
    %c0_3 = arith.constant 0 : index
    %c0_4 = arith.constant 0 : index
    %3 = vector.load %arg5[%c0_3, %c0_4] : memref<1x96xf32, #tpu.memory_space<vmem>>, vector<1x96xf32>
    %4 = vector.broadcast %3 : vector<1x96xf32> to vector<128x96xf32>
    %5 = arith.addf %2, %4 : vector<128x96xf32>
    %c0_5 = arith.constant 0 : index
    %c0_6 = arith.constant 0 : index
    %6 = vector.load %arg7[%c0_5, %c0_6] : memref<32x96xbf16, #tpu.memory_space<vmem>>, vector<32x96xbf16>
    %cst_7 = arith.constant dense<0.000000e+00> : vector<128x96xf32>
    %7 = tpu.matmul %0, %6, %cst_7 {dimension_numbers = #tpu.dot_dimension_numbers<[1], [0], [0], [1], [0, 0, 1, 1], [], []>} : vector<128x32xbf16>, vector<32x96xbf16>, vector<128x96xf32> -> vector<128x96xf32>
    %c0_8 = arith.constant 0 : index
    %c0_9 = arith.constant 0 : index
    %8 = vector.load %arg9[%c0_8, %c0_9] : memref<1x96xf32, #tpu.memory_space<vmem>>, vector<1x96xf32>
    %9 = vector.broadcast %8 : vector<1x96xf32> to vector<128x96xf32>
    %10 = arith.addf %7, %9 : vector<128x96xf32>
    %11 = vector.shape_cast %5 : vector<128x96xf32> to vector<8x16x96xf32>
    %c0_10 = arith.constant 0 : index
    %c0_11 = arith.constant 0 : index
    %c0_12 = arith.constant 0 : index
    %12 = vector.load %arg21[%c0_10, %c0_11, %c0_12] : memref<8x16x96xf32, #tpu.memory_space<vmem>>, vector<8x16x96xf32>
    tpu.vector_store %arg21[%c0_10, %c0_11, %c0_12], %11 {strides = array<i32>} : memref<8x16x96xf32, #tpu.memory_space<vmem>>, vector<8x16x96xf32>,
    %13 = vector.shape_cast %10 : vector<128x96xf32> to vector<8x16x96xf32>
    %c0_13 = arith.constant 0 : index
    %c0_14 = arith.constant 0 : index
    %c0_15 = arith.constant 0 : index
    %14 = vector.load %arg22[%c0_13, %c0_14, %c0_15] : memref<8x16x96xf32, #tpu.memory_space<vmem>>, vector<8x16x96xf32>
    tpu.vector_store %arg22[%c0_13, %c0_14, %c0_15], %13 {strides = array<i32>} : memref<8x16x96xf32, #tpu.memory_space<vmem>>, vector<8x16x96xf32>,
    %cst_16 = arith.constant 0.000000e+00 : f32
    %15 = vector.broadcast %cst_16 : f32 to vector<64x32xf32>
    %c0_17 = arith.constant 0 : index
    %c0_18 = arith.constant 0 : index
    %16 = vector.load %arg23[%c0_17, %c0_18] : memref<64x32xf32, #tpu.memory_space<vmem>>, vector<64x32xf32>
    tpu.vector_store %arg23[%c0_17, %c0_18], %15 {strides = array<i32>} : memref<64x32xf32, #tpu.memory_space<vmem>>, vector<64x32xf32>,
    %cst_19 = arith.constant 0.000000e+00 : f32
    %17 = vector.broadcast %cst_19 : f32 to vector<64x32xf32>
    %c0_20 = arith.constant 0 : index
    %c0_21 = arith.constant 0 : index
    %18 = vector.load %arg24[%c0_20, %c0_21] : memref<64x32xf32, #tpu.memory_space<vmem>>, vector<64x32xf32>
    tpu.vector_store %arg24[%c0_20, %c0_21], %17 {strides = array<i32>} : memref<64x32xf32, #tpu.memory_space<vmem>>, vector<64x32xf32>,
    %c0_22 = arith.constant 0 : index
    %c0_23 = arith.constant 0 : index
    %19 = vector.load %arg4[%c0_22, %c0_23] : memref<32x96xbf16, #tpu.memory_space<vmem>>, vector<32x96xbf16>
    %c0_24 = arith.constant 0 : index
    %c0_25 = arith.constant 0 : index
    %20 = vector.load %arg8[%c0_24, %c0_25] : memref<32x96xbf16, #tpu.memory_space<vmem>>, vector<32x96xbf16>
    %c0_26 = arith.constant 0 : index
    %c0_27 = arith.constant 0 : index
    %21 = vector.load %arg6[%c0_26, %c0_27] : memref<1x32xf32, #tpu.memory_space<vmem>>, vector<1x32xf32>
    %22 = vector.shape_cast %21 : vector<1x32xf32> to vector<1x32xf32>
    %23 = vector.broadcast %22 : vector<1x32xf32> to vector<64x32xf32>
    %c0_28 = arith.constant 0 : index
    %c0_29 = arith.constant 0 : index
    %24 = vector.load %arg10[%c0_28, %c0_29] : memref<1x32xf32, #tpu.memory_space<vmem>>, vector<1x32xf32>
    %25 = vector.shape_cast %24 : vector<1x32xf32> to vector<1x32xf32>
    %26 = vector.broadcast %25 : vector<1x32xf32> to vector<64x32xf32>
    %c0_30 = arith.constant 0 : index
    %c0_31 = arith.constant 0 : index
    %c0_32 = arith.constant 0 : index
    %27 = vector.load %arg21[%c0_30, %c0_31, %c0_32] : memref<8x16x96xf32, #tpu.memory_space<vmem>>, vector<8x8x96xf32>
    %28 = vector.shape_cast %27 : vector<8x8x96xf32> to vector<64x96xf32>
    %c0_33 = arith.constant 0 : index
    %c4 = arith.constant 4 : index
    %c0_34 = arith.constant 0 : index
    %29 = vector.load %arg22[%c0_33, %c4, %c0_34] : memref<8x16x96xf32, #tpu.memory_space<vmem>>, vector<8x8x96xf32>
    %30 = vector.shape_cast %29 : vector<8x8x96xf32> to vector<64x96xf32>
    %c0_35 = arith.constant 0 : index
    %c0_36 = arith.constant 0 : index
    %31 = vector.load %arg23[%c0_35, %c0_36] : memref<64x32xf32, #tpu.memory_space<vmem>>, vector<64x32xf32>
    %32 = arith.truncf %31 : vector<64x32xf32> to vector<64x32xbf16>
    %cst_37 = arith.constant dense<0.000000e+00> : vector<64x96xf32>
    %33 = tpu.matmul %32, %19, %cst_37 {dimension_numbers = #tpu.dot_dimension_numbers<[1], [0], [0], [1], [0, 0, 1, 1], [], []>} : vector<64x32xbf16>, vector<32x96xbf16>, vector<64x96xf32> -> vector<64x96xf32>
    %34 = vector.extract_strided_slice %28 {offsets = [0, 0], sizes = [64, 64], strides = [1, 1]} : vector<64x96xf32> to vector<64x64xf32>
    %35 = vector.extract_strided_slice %33 {offsets = [0, 0], sizes = [64, 64], strides = [1, 1]} : vector<64x96xf32> to vector<64x64xf32>
    %36 = arith.addf %34, %35 : vector<64x64xf32>
    %37 = arith.negf %36 : vector<64x64xf32>
    %38 = math.exp %37 : vector<64x64xf32>
    %cst_38 = arith.constant 1.000000e+00 : f32
    %39 = vector.broadcast %cst_38 : f32 to vector<64x64xf32>
    %40 = arith.addf %39, %38 : vector<64x64xf32>
    %41 = arith.divf %39, %40 : vector<64x64xf32>
    %42 = vector.extract_strided_slice %41 {offsets = [0, 0], sizes = [64, 32], strides = [1, 1]} : vector<64x64xf32> to vector<64x32xf32>
    %43 = vector.extract_strided_slice %41 {offsets = [0, 32], sizes = [64, 32], strides = [1, 1]} : vector<64x64xf32> to vector<64x32xf32>
    %44 = vector.extract_strided_slice %28 {offsets = [0, 64], sizes = [64, 32], strides = [1, 1]} : vector<64x96xf32> to vector<64x32xf32>
    %45 = vector.extract_strided_slice %33 {offsets = [0, 64], sizes = [64, 32], strides = [1, 1]} : vector<64x96xf32> to vector<64x32xf32>
    %46 = arith.addf %45, %23 : vector<64x32xf32>
    %47 = arith.mulf %42, %46 : vector<64x32xf32>
    %48 = arith.addf %44, %47 : vector<64x32xf32>
    %49 = math.tanh %48 : vector<64x32xf32>
    %cst_39 = arith.constant 1.000000e+00 : f32
    %50 = vector.broadcast %cst_39 : f32 to vector<64x32xf32>
    %51 = arith.subf %50, %43 : vector<64x32xf32>
    %52 = arith.mulf %51, %49 : vector<64x32xf32>
    %53 = arith.mulf %43, %31 : vector<64x32xf32>
    %54 = arith.addf %52, %53 : vector<64x32xf32>
    %c0_40 = arith.constant 0 : index
    %c0_41 = arith.constant 0 : index
    %55 = vector.load %arg23[%c0_40, %c0_41] : memref<64x32xf32, #tpu.memory_space<vmem>>, vector<64x32xf32>
    tpu.vector_store %arg23[%c0_40, %c0_41], %54 {strides = array<i32>} : memref<64x32xf32, #tpu.memory_space<vmem>>, vector<64x32xf32>,
    %c0_42 = arith.constant 0 : index
    %c0_43 = arith.constant 0 : index
    %56 = vector.load %arg24[%c0_42, %c0_43] : memref<64x32xf32, #tpu.memory_space<vmem>>, vector<64x32xf32>
    %57 = arith.truncf %56 : vector<64x32xf32> to vector<64x32xbf16>
    %cst_44 = arith.constant dense<0.000000e+00> : vector<64x96xf32>
    %58 = tpu.matmul %57, %20, %cst_44 {dimension_numbers = #tpu.dot_dimension_numbers<[1], [0], [0], [1], [0, 0, 1, 1], [], []>} : vector<64x32xbf16>, vector<32x96xbf16>, vector<64x96xf32> -> vector<64x96xf32>
    %59 = vector.extract_strided_slice %30 {offsets = [0, 0], sizes = [64, 64], strides = [1, 1]} : vector<64x96xf32> to vector<64x64xf32>
    %60 = vector.extract_strided_slice %58 {offsets = [0, 0], sizes = [64, 64], strides = [1, 1]} : vector<64x96xf32> to vector<64x64xf32>
    %61 = arith.addf %59, %60 : vector<64x64xf32>
    %62 = arith.negf %61 : vector<64x64xf32>
    %63 = math.exp %62 : vector<64x64xf32>
    %cst_45 = arith.constant 1.000000e+00 : f32
    %64 = vector.broadcast %cst_45 : f32 to vector<64x64xf32>
    %65 = arith.addf %64, %63 : vector<64x64xf32>
    %66 = arith.divf %64, %65 : vector<64x64xf32>
    %67 = vector.extract_strided_slice %66 {offsets = [0, 0], sizes = [64, 32], strides = [1, 1]} : vector<64x64xf32> to vector<64x32xf32>
    %68 = vector.extract_strided_slice %66 {offsets = [0, 32], sizes = [64, 32], strides = [1, 1]} : vector<64x64xf32> to vector<64x32xf32>
    %69 = vector.extract_strided_slice %30 {offsets = [0, 64], sizes = [64, 32], strides = [1, 1]} : vector<64x96xf32> to vector<64x32xf32>
    %70 = vector.extract_strided_slice %58 {offsets = [0, 64], sizes = [64, 32], strides = [1, 1]} : vector<64x96xf32> to vector<64x32xf32>
    %71 = arith.addf %70, %26 : vector<64x32xf32>
    %72 = arith.mulf %67, %71 : vector<64x32xf32>
    %73 = arith.addf %69, %72 : vector<64x32xf32>
    %74 = math.tanh %73 : vector<64x32xf32>
    %cst_46 = arith.constant 1.000000e+00 : f32
    %75 = vector.broadcast %cst_46 : f32 to vector<64x32xf32>
    %76 = arith.subf %75, %68 : vector<64x32xf32>
    %77 = arith.mulf %76, %74 : vector<64x32xf32>
    %78 = arith.mulf %68, %56 : vector<64x32xf32>
    %79 = arith.addf %77, %78 : vector<64x32xf32>
    %c0_47 = arith.constant 0 : index
    %c0_48 = arith.constant 0 : index
    %80 = vector.load %arg24[%c0_47, %c0_48] : memref<64x32xf32, #tpu.memory_space<vmem>>, vector<64x32xf32>
    tpu.vector_store %arg24[%c0_47, %c0_48], %79 {strides = array<i32>} : memref<64x32xf32, #tpu.memory_space<vmem>>, vector<64x32xf32>,
    %c0_49 = arith.constant 0 : index
    %c1 = arith.constant 1 : index
    %c0_50 = arith.constant 0 : index
    %81 = vector.load %arg21[%c0_49, %c1, %c0_50] : memref<8x16x96xf32, #tpu.memory_space<vmem>>, vector<8x8x96xf32>
    %82 = vector.shape_cast %81 : vector<8x8x96xf32> to vector<64x96xf32>
    %c0_51 = arith.constant 0 : index
    %c3 = arith.constant 3 : index
    %c0_52 = arith.constant 0 : index
    %83 = vector.load %arg22[%c0_51, %c3, %c0_52] : memref<8x16x96xf32, #tpu.memory_space<vmem>>, vector<8x8x96xf32>
    %84 = vector.shape_cast %83 : vector<8x8x96xf32> to vector<64x96xf32>
    %c0_53 = arith.constant 0 : index
    %c0_54 = arith.constant 0 : index
    %85 = vector.load %arg23[%c0_53, %c0_54] : memref<64x32xf32, #tpu.memory_space<vmem>>, vector<64x32xf32>
    %86 = arith.truncf %85 : vector<64x32xf32> to vector<64x32xbf16>
    %cst_55 = arith.constant dense<0.000000e+00> : vector<64x96xf32>
    %87 = tpu.matmul %86, %19, %cst_55 {dimension_numbers = #tpu.dot_dimension_numbers<[1], [0], [0], [1], [0, 0, 1, 1], [], []>} : vector<64x32xbf16>, vector<32x96xbf16>, vector<64x96xf32> -> vector<64x96xf32>
    %88 = vector.extract_strided_slice %82 {offsets = [0, 0], sizes = [64, 64], strides = [1, 1]} : vector<64x96xf32> to vector<64x64xf32>
    %89 = vector.extract_strided_slice %87 {offsets = [0, 0], sizes = [64, 64], strides = [1, 1]} : vector<64x96xf32> to vector<64x64xf32>
    %90 = arith.addf %88, %89 : vector<64x64xf32>
    %91 = arith.negf %90 : vector<64x64xf32>
    %92 = math.exp %91 : vector<64x64xf32>
    %cst_56 = arith.constant 1.000000e+00 : f32
    %93 = vector.broadcast %cst_56 : f32 to vector<64x64xf32>
    %94 = arith.addf %93, %92 : vector<64x64xf32>
    %95 = arith.divf %93, %94 : vector<64x64xf32>
    %96 = vector.extract_strided_slice %95 {offsets = [0, 0], sizes = [64, 32], strides = [1, 1]} : vector<64x64xf32> to vector<64x32xf32>
    %97 = vector.extract_strided_slice %95 {offsets = [0, 32], sizes = [64, 32], strides = [1, 1]} : vector<64x64xf32> to vector<64x32xf32>
    %98 = vector.extract_strided_slice %82 {offsets = [0, 64], sizes = [64, 32], strides = [1, 1]} : vector<64x96xf32> to vector<64x32xf32>
    %99 = vector.extract_strided_slice %87 {offsets = [0, 64], sizes = [64, 32], strides = [1, 1]} : vector<64x96xf32> to vector<64x32xf32>
    %100 = arith.addf %99, %23 : vector<64x32xf32>
    %101 = arith.mulf %96, %100 : vector<64x32xf32>
    %102 = arith.addf %98, %101 : vector<64x32xf32>
    %103 = math.tanh %102 : vector<64x32xf32>
    %cst_57 = arith.constant 1.000000e+00 : f32
    %104 = vector.broadcast %cst_57 : f32 to vector<64x32xf32>
    %105 = arith.subf %104, %97 : vector<64x32xf32>
    %106 = arith.mulf %105, %103 : vector<64x32xf32>
    %107 = arith.mulf %97, %85 : vector<64x32xf32>
    %108 = arith.addf %106, %107 : vector<64x32xf32>
    %c0_58 = arith.constant 0 : index
    %c0_59 = arith.constant 0 : index
    %109 = vector.load %arg23[%c0_58, %c0_59] : memref<64x32xf32, #tpu.memory_space<vmem>>, vector<64x32xf32>
    tpu.vector_store %arg23[%c0_58, %c0_59], %108 {strides = array<i32>} : memref<64x32xf32, #tpu.memory_space<vmem>>, vector<64x32xf32>,
    %c0_60 = arith.constant 0 : index
    %c0_61 = arith.constant 0 : index
    %110 = vector.load %arg24[%c0_60, %c0_61] : memref<64x32xf32, #tpu.memory_space<vmem>>, vector<64x32xf32>
    %111 = arith.truncf %110 : vector<64x32xf32> to vector<64x32xbf16>
    %cst_62 = arith.constant dense<0.000000e+00> : vector<64x96xf32>
    %112 = tpu.matmul %111, %20, %cst_62 {dimension_numbers = #tpu.dot_dimension_numbers<[1], [0], [0], [1], [0, 0, 1, 1], [], []>} : vector<64x32xbf16>, vector<32x96xbf16>, vector<64x96xf32> -> vector<64x96xf32>
    %113 = vector.extract_strided_slice %84 {offsets = [0, 0], sizes = [64, 64], strides = [1, 1]} : vector<64x96xf32> to vector<64x64xf32>
    %114 = vector.extract_strided_slice %112 {offsets = [0, 0], sizes = [64, 64], strides = [1, 1]} : vector<64x96xf32> to vector<64x64xf32>
    %115 = arith.addf %113, %114 : vector<64x64xf32>
    %116 = arith.negf %115 : vector<64x64xf32>
    %117 = math.exp %116 : vector<64x64xf32>
    %cst_63 = arith.constant 1.000000e+00 : f32
    %118 = vector.broadcast %cst_63 : f32 to vector<64x64xf32>
    %119 = arith.addf %118, %117 : vector<64x64xf32>
    %120 = arith.divf %118, %119 : vector<64x64xf32>
    %121 = vector.extract_strided_slice %120 {offsets = [0, 0], sizes = [64, 32], strides = [1, 1]} : vector<64x64xf32> to vector<64x32xf32>
    %122 = vector.extract_strided_slice %120 {offsets = [0, 32], sizes = [64, 32], strides = [1, 1]} : vector<64x64xf32> to vector<64x32xf32>
    %123 = vector.extract_strided_slice %84 {offsets = [0, 64], sizes = [64, 32], strides = [1, 1]} : vector<64x96xf32> to vector<64x32xf32>
    %124 = vector.extract_strided_slice %112 {offsets = [0, 64], sizes = [64, 32], strides = [1, 1]} : vector<64x96xf32> to vector<64x32xf32>
    %125 = arith.addf %124, %26 : vector<64x32xf32>
    %126 = arith.mulf %121, %125 : vector<64x32xf32>
    %127 = arith.addf %123, %126 : vector<64x32xf32>
    %128 = math.tanh %127 : vector<64x32xf32>
    %cst_64 = arith.constant 1.000000e+00 : f32
    %129 = vector.broadcast %cst_64 : f32 to vector<64x32xf32>
    %130 = arith.subf %129, %122 : vector<64x32xf32>
    %131 = arith.mulf %130, %128 : vector<64x32xf32>
    %132 = arith.mulf %122, %110 : vector<64x32xf32>
    %133 = arith.addf %131, %132 : vector<64x32xf32>
    %c0_65 = arith.constant 0 : index
    %c0_66 = arith.constant 0 : index
    %134 = vector.load %arg24[%c0_65, %c0_66] : memref<64x32xf32, #tpu.memory_space<vmem>>, vector<64x32xf32>
    tpu.vector_store %arg24[%c0_65, %c0_66], %133 {strides = array<i32>} : memref<64x32xf32, #tpu.memory_space<vmem>>, vector<64x32xf32>,
    %c0_67 = arith.constant 0 : index
    %c2 = arith.constant 2 : index
    %c0_68 = arith.constant 0 : index
    %135 = vector.load %arg21[%c0_67, %c2, %c0_68] : memref<8x16x96xf32, #tpu.memory_space<vmem>>, vector<8x8x96xf32>
    %136 = vector.shape_cast %135 : vector<8x8x96xf32> to vector<64x96xf32>
    %c0_69 = arith.constant 0 : index
    %c2_70 = arith.constant 2 : index
    %c0_71 = arith.constant 0 : index
    %137 = vector.load %arg22[%c0_69, %c2_70, %c0_71] : memref<8x16x96xf32, #tpu.memory_space<vmem>>, vector<8x8x96xf32>
    %138 = vector.shape_cast %137 : vector<8x8x96xf32> to vector<64x96xf32>
    %c0_72 = arith.constant 0 : index
    %c0_73 = arith.constant 0 : index
    %139 = vector.load %arg23[%c0_72, %c0_73] : memref<64x32xf32, #tpu.memory_space<vmem>>, vector<64x32xf32>
    %140 = arith.truncf %139 : vector<64x32xf32> to vector<64x32xbf16>
    %cst_74 = arith.constant dense<0.000000e+00> : vector<64x96xf32>
    %141 = tpu.matmul %140, %19, %cst_74 {dimension_numbers = #tpu.dot_dimension_numbers<[1], [0], [0], [1], [0, 0, 1, 1], [], []>} : vector<64x32xbf16>, vector<32x96xbf16>, vector<64x96xf32> -> vector<64x96xf32>
    %142 = vector.extract_strided_slice %136 {offsets = [0, 0], sizes = [64, 64], strides = [1, 1]} : vector<64x96xf32> to vector<64x64xf32>
    %143 = vector.extract_strided_slice %141 {offsets = [0, 0], sizes = [64, 64], strides = [1, 1]} : vector<64x96xf32> to vector<64x64xf32>
    %144 = arith.addf %142, %143 : vector<64x64xf32>
    %145 = arith.negf %144 : vector<64x64xf32>
    %146 = math.exp %145 : vector<64x64xf32>
    %cst_75 = arith.constant 1.000000e+00 : f32
    %147 = vector.broadcast %cst_75 : f32 to vector<64x64xf32>
    %148 = arith.addf %147, %146 : vector<64x64xf32>
    %149 = arith.divf %147, %148 : vector<64x64xf32>
    %150 = vector.extract_strided_slice %149 {offsets = [0, 0], sizes = [64, 32], strides = [1, 1]} : vector<64x64xf32> to vector<64x32xf32>
    %151 = vector.extract_strided_slice %149 {offsets = [0, 32], sizes = [64, 32], strides = [1, 1]} : vector<64x64xf32> to vector<64x32xf32>
    %152 = vector.extract_strided_slice %136 {offsets = [0, 64], sizes = [64, 32], strides = [1, 1]} : vector<64x96xf32> to vector<64x32xf32>
    %153 = vector.extract_strided_slice %141 {offsets = [0, 64], sizes = [64, 32], strides = [1, 1]} : vector<64x96xf32> to vector<64x32xf32>
    %154 = arith.addf %153, %23 : vector<64x32xf32>
    %155 = arith.mulf %150, %154 : vector<64x32xf32>
    %156 = arith.addf %152, %155 : vector<64x32xf32>
    %157 = math.tanh %156 : vector<64x32xf32>
    %cst_76 = arith.constant 1.000000e+00 : f32
    %158 = vector.broadcast %cst_76 : f32 to vector<64x32xf32>
    %159 = arith.subf %158, %151 : vector<64x32xf32>
    %160 = arith.mulf %159, %157 : vector<64x32xf32>
    %161 = arith.mulf %151, %139 : vector<64x32xf32>
    %162 = arith.addf %160, %161 : vector<64x32xf32>
    %c0_77 = arith.constant 0 : index
    %c0_78 = arith.constant 0 : index
    %163 = vector.load %arg23[%c0_77, %c0_78] : memref<64x32xf32, #tpu.memory_space<vmem>>, vector<64x32xf32>
    tpu.vector_store %arg23[%c0_77, %c0_78], %162 {strides = array<i32>} : memref<64x32xf32, #tpu.memory_space<vmem>>, vector<64x32xf32>,
    %c0_79 = arith.constant 0 : index
    %c0_80 = arith.constant 0 : index
    %164 = vector.load %arg24[%c0_79, %c0_80] : memref<64x32xf32, #tpu.memory_space<vmem>>, vector<64x32xf32>
    %165 = arith.truncf %164 : vector<64x32xf32> to vector<64x32xbf16>
    %cst_81 = arith.constant dense<0.000000e+00> : vector<64x96xf32>
    %166 = tpu.matmul %165, %20, %cst_81 {dimension_numbers = #tpu.dot_dimension_numbers<[1], [0], [0], [1], [0, 0, 1, 1], [], []>} : vector<64x32xbf16>, vector<32x96xbf16>, vector<64x96xf32> -> vector<64x96xf32>
    %167 = vector.extract_strided_slice %138 {offsets = [0, 0], sizes = [64, 64], strides = [1, 1]} : vector<64x96xf32> to vector<64x64xf32>
    %168 = vector.extract_strided_slice %166 {offsets = [0, 0], sizes = [64, 64], strides = [1, 1]} : vector<64x96xf32> to vector<64x64xf32>
    %169 = arith.addf %167, %168 : vector<64x64xf32>
    %170 = arith.negf %169 : vector<64x64xf32>
    %171 = math.exp %170 : vector<64x64xf32>
    %cst_82 = arith.constant 1.000000e+00 : f32
    %172 = vector.broadcast %cst_82 : f32 to vector<64x64xf32>
    %173 = arith.addf %172, %171 : vector<64x64xf32>
    %174 = arith.divf %172, %173 : vector<64x64xf32>
    %175 = vector.extract_strided_slice %174 {offsets = [0, 0], sizes = [64, 32], strides = [1, 1]} : vector<64x64xf32> to vector<64x32xf32>
    %176 = vector.extract_strided_slice %174 {offsets = [0, 32], sizes = [64, 32], strides = [1, 1]} : vector<64x64xf32> to vector<64x32xf32>
    %177 = vector.extract_strided_slice %138 {offsets = [0, 64], sizes = [64, 32], strides = [1, 1]} : vector<64x96xf32> to vector<64x32xf32>
    %178 = vector.extract_strided_slice %166 {offsets = [0, 64], sizes = [64, 32], strides = [1, 1]} : vector<64x96xf32> to vector<64x32xf32>
    %179 = arith.addf %178, %26 : vector<64x32xf32>
    %180 = arith.mulf %175, %179 : vector<64x32xf32>
    %181 = arith.addf %177, %180 : vector<64x32xf32>
    %182 = math.tanh %181 : vector<64x32xf32>
    %cst_83 = arith.constant 1.000000e+00 : f32
    %183 = vector.broadcast %cst_83 : f32 to vector<64x32xf32>
    %184 = arith.subf %183, %176 : vector<64x32xf32>
    %185 = arith.mulf %184, %182 : vector<64x32xf32>
    %186 = arith.mulf %176, %164 : vector<64x32xf32>
    %187 = arith.addf %185, %186 : vector<64x32xf32>
    %c0_84 = arith.constant 0 : index
    %c0_85 = arith.constant 0 : index
    %188 = vector.load %arg24[%c0_84, %c0_85] : memref<64x32xf32, #tpu.memory_space<vmem>>, vector<64x32xf32>
    tpu.vector_store %arg24[%c0_84, %c0_85], %187 {strides = array<i32>} : memref<64x32xf32, #tpu.memory_space<vmem>>, vector<64x32xf32>,
    %c0_86 = arith.constant 0 : index
    %c0_87 = arith.constant 0 : index
    %189 = vector.load %arg2[%c0_86, %c0_87] : memref<64x1xf32, #tpu.memory_space<vmem>>, vector<64x1xf32>
    %c0_88 = arith.constant 0 : index
    %c0_89 = arith.constant 0 : index
    %190 = vector.load %arg23[%c0_88, %c0_89] : memref<64x32xf32, #tpu.memory_space<vmem>>, vector<64x32xf32>
    %191 = vector.broadcast %189 : vector<64x1xf32> to vector<64x32xf32>
    %192 = arith.mulf %190, %191 : vector<64x32xf32>
    %c0_90 = arith.constant 0 : index
    %c0_91 = arith.constant 0 : index
    %193 = vector.load %arg24[%c0_90, %c0_91] : memref<64x32xf32, #tpu.memory_space<vmem>>, vector<64x32xf32>
    %194 = vector.broadcast %189 : vector<64x1xf32> to vector<64x32xf32>
    %195 = arith.mulf %193, %194 : vector<64x32xf32>
    %c0_92 = arith.constant 0 : index
    %c0_93 = arith.constant 0 : index
    %196 = vector.load %arg11[%c0_92, %c0_93] : memref<1x32xf32, #tpu.memory_space<vmem>>, vector<1x32xf32>
    %197 = vector.broadcast %196 : vector<1x32xf32> to vector<64x32xf32>
    %198 = arith.mulf %192, %197 : vector<64x32xf32>
    %c0_94 = arith.constant 0 : index
    %c0_95 = arith.constant 0 : index
    %199 = vector.load %arg13[%c0_94, %c0_95] : memref<1x32xf32, #tpu.memory_space<vmem>>, vector<1x32xf32>
    %200 = vector.broadcast %199 : vector<1x32xf32> to vector<64x32xf32>
    %201 = arith.addf %198, %200 : vector<64x32xf32>
    %202 = vector.broadcast %189 : vector<64x1xf32> to vector<64x32xf32>
    %203 = arith.mulf %201, %202 : vector<64x32xf32>
    %c0_96 = arith.constant 0 : index
    %c0_97 = arith.constant 0 : index
    %204 = vector.load %arg12[%c0_96, %c0_97] : memref<1x32xf32, #tpu.memory_space<vmem>>, vector<1x32xf32>
    %205 = vector.broadcast %204 : vector<1x32xf32> to vector<64x32xf32>
    %206 = arith.mulf %195, %205 : vector<64x32xf32>
    %c0_98 = arith.constant 0 : index
    %c0_99 = arith.constant 0 : index
    %207 = vector.load %arg14[%c0_98, %c0_99] : memref<1x32xf32, #tpu.memory_space<vmem>>, vector<1x32xf32>
    %208 = vector.broadcast %207 : vector<1x32xf32> to vector<64x32xf32>
    %209 = arith.addf %206, %208 : vector<64x32xf32>
    %210 = vector.broadcast %189 : vector<64x1xf32> to vector<64x32xf32>
    %211 = arith.mulf %209, %210 : vector<64x32xf32>
    %212 = arith.truncf %203 : vector<64x32xf32> to vector<64x32xbf16>
    %c0_100 = arith.constant 0 : index
    %c0_101 = arith.constant 0 : index
    %213 = vector.load %arg15[%c0_100, %c0_101] : memref<32x64xbf16, #tpu.memory_space<vmem>>, vector<32x64xbf16>
    %cst_102 = arith.constant dense<0.000000e+00> : vector<64x64xf32>
    %214 = tpu.matmul %212, %213, %cst_102 {dimension_numbers = #tpu.dot_dimension_numbers<[1], [0], [0], [1], [0, 0, 1, 1], [], []>} : vector<64x32xbf16>, vector<32x64xbf16>, vector<64x64xf32> -> vector<64x64xf32>
    %215 = arith.truncf %211 : vector<64x32xf32> to vector<64x32xbf16>
    %c0_103 = arith.constant 0 : index
    %c0_104 = arith.constant 0 : index
    %216 = vector.load %arg16[%c0_103, %c0_104] : memref<32x64xbf16, #tpu.memory_space<vmem>>, vector<32x64xbf16>
    %cst_105 = arith.constant dense<0.000000e+00> : vector<64x64xf32>
    %217 = tpu.matmul %215, %216, %cst_105 {dimension_numbers = #tpu.dot_dimension_numbers<[1], [0], [0], [1], [0, 0, 1, 1], [], []>} : vector<64x32xbf16>, vector<32x64xbf16>, vector<64x64xf32> -> vector<64x64xf32>
    %218 = arith.addf %214, %217 : vector<64x64xf32>
    %c0_106 = arith.constant 0 : index
    %c0_107 = arith.constant 0 : index
    %219 = vector.load %arg17[%c0_106, %c0_107] : memref<1x64xf32, #tpu.memory_space<vmem>>, vector<1x64xf32>
    %220 = vector.broadcast %219 : vector<1x64xf32> to vector<64x64xf32>
    %221 = arith.addf %218, %220 : vector<64x64xf32>
    %222 = vector.broadcast %189 : vector<64x1xf32> to vector<64x64xf32>
    %223 = arith.mulf %221, %222 : vector<64x64xf32>
    %cst_108 = arith.constant 1.000000e+00 : f32
    %224 = vector.broadcast %cst_108 : f32 to vector<64x1xf32>
    %225 = arith.subf %189, %224 : vector<64x1xf32>
    %cst_109 = arith.constant 6.550000e+04 : f32
    %226 = vector.broadcast %cst_109 : f32 to vector<64x1xf32>
    %227 = arith.mulf %225, %226 : vector<64x1xf32>
    %228 = vector.broadcast %227 : vector<64x1xf32> to vector<64x64xf32>
    %229 = arith.addf %223, %228 : vector<64x64xf32>
    %230 = vector.shape_cast %229 : vector<64x64xf32> to vector<8x8x64xf32>
    %cst_110 = arith.constant dense<0xFF800000> : vector<8x64xf32>
    %231 = vector.multi_reduction <maximumf>, %230, %cst_110 [1] : vector<8x8x64xf32> to vector<8x64xf32>
    %232 = arith.truncf %231 : vector<8x64xf32> to vector<8x64xbf16>
    %c0_111 = arith.constant 0 : index
    %c0_112 = arith.constant 0 : index
    %233 = vector.load %arg18[%c0_111, %c0_112] : memref<64x8xbf16, #tpu.memory_space<vmem>>, vector<64x8xbf16>
    %cst_113 = arith.constant dense<0.000000e+00> : vector<8x8xf32>
    %234 = tpu.matmul %232, %233, %cst_113 {dimension_numbers = #tpu.dot_dimension_numbers<[1], [0], [0], [1], [0, 0, 1, 1], [], []>} : vector<8x64xbf16>, vector<64x8xbf16>, vector<8x8xf32> -> vector<8x8xf32>
    %c0_114 = arith.constant 0 : index
    %c0_115 = arith.constant 0 : index
    %235 = vector.load %arg19[%c0_114, %c0_115] : memref<1x8xf32, #tpu.memory_space<vmem>>, vector<1x8xf32>
    %236 = vector.broadcast %235 : vector<1x8xf32> to vector<8x8xf32>
    %237 = arith.addf %234, %236 : vector<8x8xf32>
    %c0_116 = arith.constant 0 : index
    %c0_117 = arith.constant 0 : index
    %238 = vector.load %arg20[%c0_116, %c0_117] : memref<8x8xf32, #tpu.memory_space<vmem>>, vector<8x8xf32>
    tpu.vector_store %arg20[%c0_116, %c0_117], %237 {strides = array<i32>} : memref<8x8xf32, #tpu.memory_space<vmem>>, vector<8x8xf32>,
    return
  }
  func.func @transform_0(%arg0: i32) -> (i32, i32) {
    %c0_i32 = arith.constant 0 : i32
    %c0_i32_0 = arith.constant 0 : i32
    return %arg0, %c0_i32 : i32, i32
  }
  func.func @transform_1(%arg0: i32) -> (i32, i32) {
    %c0_i32 = arith.constant 0 : i32
    %c0_i32_0 = arith.constant 0 : i32
    return %arg0, %c0_i32 : i32, i32
  }
  func.func @transform_2(%arg0: i32) -> (i32, i32) {
    %c0_i32 = arith.constant 0 : i32
    %c0_i32_0 = arith.constant 0 : i32
    %c0_i32_1 = arith.constant 0 : i32
    return %c0_i32, %c0_i32_0 : i32, i32
  }
  func.func @transform_3(%arg0: i32) -> (i32, i32) {
    %c0_i32 = arith.constant 0 : i32
    %c0_i32_0 = arith.constant 0 : i32
    %c0_i32_1 = arith.constant 0 : i32
    return %c0_i32, %c0_i32_0 : i32, i32
  }
  func.func @transform_4(%arg0: i32) -> (i32, i32) {
    %c0_i32 = arith.constant 0 : i32
    %c0_i32_0 = arith.constant 0 : i32
    %c0_i32_1 = arith.constant 0 : i32
    return %c0_i32, %c0_i32_0 : i32, i32
  }
  func.func @transform_5(%arg0: i32) -> (i32, i32) {
    %c0_i32 = arith.constant 0 : i32
    %c0_i32_0 = arith.constant 0 : i32
    %c0_i32_1 = arith.constant 0 : i32
    return %c0_i32, %c0_i32_0 : i32, i32
  }
  func.func @transform_6(%arg0: i32) -> (i32, i32) {
    %c0_i32 = arith.constant 0 : i32
    %c0_i32_0 = arith.constant 0 : i32
    %c0_i32_1 = arith.constant 0 : i32
    return %c0_i32, %c0_i32_0 : i32, i32
  }
  func.func @transform_7(%arg0: i32) -> (i32, i32) {
    %c0_i32 = arith.constant 0 : i32
    %c0_i32_0 = arith.constant 0 : i32
    %c0_i32_1 = arith.constant 0 : i32
    return %c0_i32, %c0_i32_0 : i32, i32
  }
  func.func @transform_8(%arg0: i32) -> (i32, i32) {
    %c0_i32 = arith.constant 0 : i32
    %c0_i32_0 = arith.constant 0 : i32
    %c0_i32_1 = arith.constant 0 : i32
    return %c0_i32, %c0_i32_0 : i32, i32
  }
  func.func @transform_9(%arg0: i32) -> (i32, i32) {
    %c0_i32 = arith.constant 0 : i32
    %c0_i32_0 = arith.constant 0 : i32
    %c0_i32_1 = arith.constant 0 : i32
    return %c0_i32, %c0_i32_0 : i32, i32
  }
  func.func @transform_10(%arg0: i32) -> (i32, i32) {
    %c0_i32 = arith.constant 0 : i32
    %c0_i32_0 = arith.constant 0 : i32
    %c0_i32_1 = arith.constant 0 : i32
    return %c0_i32, %c0_i32_0 : i32, i32
  }
  func.func @transform_11(%arg0: i32) -> (i32, i32) {
    %c0_i32 = arith.constant 0 : i32
    %c0_i32_0 = arith.constant 0 : i32
    %c0_i32_1 = arith.constant 0 : i32
    return %c0_i32, %c0_i32_0 : i32, i32
  }
  func.func @transform_12(%arg0: i32) -> (i32, i32) {
    %c0_i32 = arith.constant 0 : i32
    %c0_i32_0 = arith.constant 0 : i32
    %c0_i32_1 = arith.constant 0 : i32
    return %c0_i32, %c0_i32_0 : i32, i32
  }
  func.func @transform_13(%arg0: i32) -> (i32, i32) {
    %c0_i32 = arith.constant 0 : i32
    %c0_i32_0 = arith.constant 0 : i32
    %c0_i32_1 = arith.constant 0 : i32
    return %c0_i32, %c0_i32_0 : i32, i32
  }
  func.func @transform_14(%arg0: i32) -> (i32, i32) {
    %c0_i32 = arith.constant 0 : i32
    %c0_i32_0 = arith.constant 0 : i32
    %c0_i32_1 = arith.constant 0 : i32
    return %c0_i32, %c0_i32_0 : i32, i32
  }
  func.func @transform_15(%arg0: i32) -> (i32, i32) {
    %c0_i32 = arith.constant 0 : i32
    %c0_i32_0 = arith.constant 0 : i32
    %c0_i32_1 = arith.constant 0 : i32
    return %c0_i32, %c0_i32_0 : i32, i32
  }
  func.func @transform_16(%arg0: i32) -> (i32, i32) {
    %c0_i32 = arith.constant 0 : i32
    %c0_i32_0 = arith.constant 0 : i32
    %c0_i32_1 = arith.constant 0 : i32
    return %c0_i32, %c0_i32_0 : i32, i32
  }
  func.func @transform_17(%arg0: i32) -> (i32, i32) {
    %c0_i32 = arith.constant 0 : i32
    %c0_i32_0 = arith.constant 0 : i32
    %c0_i32_1 = arith.constant 0 : i32
    return %c0_i32, %c0_i32_0 : i32, i32
  }
  func.func @transform_18(%arg0: i32) -> (i32, i32) {
    %c0_i32 = arith.constant 0 : i32
    %c0_i32_0 = arith.constant 0 : i32
    %c0_i32_1 = arith.constant 0 : i32
    return %c0_i32, %c0_i32_0 : i32, i32
  }
  func.func @transform_19(%arg0: i32) -> (i32, i32) {
    %c0_i32 = arith.constant 0 : i32
    %c0_i32_0 = arith.constant 0 : i32
    return %arg0, %c0_i32 : i32, i32
  }
}

</mosaic_0001>

<llo_original>
// kernel: tpu_custom_call.1
$region0: #{tpu_custom_call.1}
  #allocation0 [shape = 'u32[]', space=smem, size = 0x4, offset = 0x4, fixed_abs, tag = 'smem constant byte address 0x4 - core index']
  #allocation1 [shape = 'u32[144,128]{1,0:T(1,128)}', space=vmem, size = 0x12000, scoped, tag = 'internal scratch']
  #allocation2 [shape = 'f32[8,16,96]{2,1,0:T(8,128)}', space=vmem, size = 0x10000, scoped, tag = 'scratch operand']
  #allocation3 [shape = 'f32[8,16,96]{2,1,0:T(8,128)}', space=vmem, size = 0x10000, scoped, tag = 'scratch operand']
  #allocation4 [shape = 'f32[64,32]{1,0:T(8,128)}', space=vmem, size = 0x8000, scoped, tag = 'scratch operand']
  #allocation5 [shape = 'f32[64,32]{1,0:T(8,128)}', space=vmem, size = 0x8000, scoped, tag = 'scratch operand']
  %s0 = inlined_call_operand.vmem [shape: bf16[128,32], index: 0, kind: input, shape index: {}]
  %s1 = inlined_call_operand.vmem [shape: f32[64,1], index: 1, kind: input, shape index: {}]
  %s2 = inlined_call_operand.vmem [shape: bf16[32,96], index: 2, kind: input, shape index: {}]
  %s3 = inlined_call_operand.vmem [shape: bf16[32,96], index: 3, kind: input, shape index: {}]
  %s4 = inlined_call_operand.vmem [shape: f32[1,96], index: 4, kind: input, shape index: {}]
  %s5 = inlined_call_operand.vmem [shape: f32[1,32], index: 5, kind: input, shape index: {}]
  %s6 = inlined_call_operand.vmem [shape: bf16[32,96], index: 6, kind: input, shape index: {}]
  %s7 = inlined_call_operand.vmem [shape: bf16[32,96], index: 7, kind: input, shape index: {}]
  %s8 = inlined_call_operand.vmem [shape: f32[1,96], index: 8, kind: input, shape index: {}]
  %s9 = inlined_call_operand.vmem [shape: f32[1,32], index: 9, kind: input, shape index: {}]
  %s10 = inlined_call_operand.vmem [shape: f32[1,32], index: 10, kind: input, shape index: {}]
  %s11 = inlined_call_operand.vmem [shape: f32[1,32], index: 11, kind: input, shape index: {}]
  %s12 = inlined_call_operand.vmem [shape: f32[1,32], index: 12, kind: input, shape index: {}]
  %s13 = inlined_call_operand.vmem [shape: f32[1,32], index: 13, kind: input, shape index: {}]
  %s14 = inlined_call_operand.vmem [shape: bf16[32,64], index: 14, kind: input, shape index: {}]
  %s15 = inlined_call_operand.vmem [shape: bf16[32,64], index: 15, kind: input, shape index: {}]
  %s16 = inlined_call_operand.vmem [shape: f32[1,64], index: 16, kind: input, shape index: {}]
  %s17 = inlined_call_operand.vmem [shape: bf16[64,8], index: 17, kind: input, shape index: {}]
  %s18 = inlined_call_operand.vmem [shape: f32[1,8], index: 18, kind: input, shape index: {}]
  %s19 = inlined_call_operand.hbm [shape: f32[8,8], index: 19, kind: output, shape index: {}]
  %s20 = sld [smem:[#allocation0]]
  $region86: #{tpu_custom_call.1} parent=0
    _
  %s22 = ssub.s32 1, %s20
  %s23 = scalar_select 0, %s22, %s20
  $region1: #{tpu_custom_call.1} parent=0
    #allocation6 [shape = 'u8[4096]{0}', space=vmem, size = 0x1000, scoped, tag = 'output window, operand 0, single buffered']
    #allocation7 [shape = 's32[1]{0}', space=sflag, size = 0x4, scoped, tag = 'scoped memory for tpu_custom_call.1']
    %24 = vsyncpa [#allocation7], 0
    // Predicated region
    $region2: #{tpu_custom_call.1} parent=1 // pred_check
      _
    $region3: #{tpu_custom_call.1} parent=1 // pred_check_branch
      %26 = sbr.rel (0) target = $region5
    $region4: #{tpu_custom_call.1} parent=1 // pred_region
      _
    $region5: #{tpu_custom_call.1} parent=1 // pred_fallthru
      _
    // Predicated region
    $region6: #{tpu_custom_call.1} parent=1 // pred_check
      _
    $region7: #{tpu_custom_call.1} parent=1 // pred_check_branch
      %28 = sbr.rel (0) target = $region9
    $region8: #{tpu_custom_call.1} parent=1 // pred_region
      _
    $region9: #{tpu_custom_call.1} parent=1 // pred_fallthru
      _
    // Predicated region
    $region10: #{tpu_custom_call.1} parent=1 // pred_check
      _
    $region11: #{tpu_custom_call.1} parent=1 // pred_check_branch
      %30 = sbr.rel (0) target = $region13
    $region12: #{tpu_custom_call.1} parent=1 // pred_region
      _
    $region13: #{tpu_custom_call.1} parent=1 // pred_fallthru
      _
    // Predicated region
    $region14: #{tpu_custom_call.1} parent=1 // pred_check
      _
    $region15: #{tpu_custom_call.1} parent=1 // pred_check_branch
      %32 = sbr.rel (0) target = $region17
    $region16: #{tpu_custom_call.1} parent=1 // pred_region
      _
    $region17: #{tpu_custom_call.1} parent=1 // pred_fallthru
      _
    // Predicated region
    $region18: #{tpu_custom_call.1} parent=1 // pred_check
      _
    $region19: #{tpu_custom_call.1} parent=1 // pred_check_branch
      %34 = sbr.rel (0) target = $region21
    $region20: #{tpu_custom_call.1} parent=1 // pred_region
      _
    $region21: #{tpu_custom_call.1} parent=1 // pred_fallthru
      _
    // Predicated region
    $region22: #{tpu_custom_call.1} parent=1 // pred_check
      _
    $region23: #{tpu_custom_call.1} parent=1 // pred_check_branch
      %36 = sbr.rel (0) target = $region25
    $region24: #{tpu_custom_call.1} parent=1 // pred_region
      _
    $region25: #{tpu_custom_call.1} parent=1 // pred_fallthru
      _
    // Predicated region
    $region26: #{tpu_custom_call.1} parent=1 // pred_check
      _
    $region27: #{tpu_custom_call.1} parent=1 // pred_check_branch
      %38 = sbr.rel (0) target = $region29
    $region28: #{tpu_custom_call.1} parent=1 // pred_region
      _
    $region29: #{tpu_custom_call.1} parent=1 // pred_fallthru
      _
    // Predicated region
    $region30: #{tpu_custom_call.1} parent=1 // pred_check
      _
    $region31: #{tpu_custom_call.1} parent=1 // pred_check_branch
      %40 = sbr.rel (0) target = $region33
    $region32: #{tpu_custom_call.1} parent=1 // pred_region
      _
    $region33: #{tpu_custom_call.1} parent=1 // pred_fallthru
      _
    // Predicated region
    $region34: #{tpu_custom_call.1} parent=1 // pred_check
      _
    $region35: #{tpu_custom_call.1} parent=1 // pred_check_branch
      %42 = sbr.rel (0) target = $region37
    $region36: #{tpu_custom_call.1} parent=1 // pred_region
      _
    $region37: #{tpu_custom_call.1} parent=1 // pred_fallthru
      _
    // Predicated region
    $region38: #{tpu_custom_call.1} parent=1 // pred_check
      _
    $region39: #{tpu_custom_call.1} parent=1 // pred_check_branch
      %44 = sbr.rel (0) target = $region41
    $region40: #{tpu_custom_call.1} parent=1 // pred_region
      _
    $region41: #{tpu_custom_call.1} parent=1 // pred_fallthru
      _
    // Predicated region
    $region42: #{tpu_custom_call.1} parent=1 // pred_check
      _
    $region43: #{tpu_custom_call.1} parent=1 // pred_check_branch
      %46 = sbr.rel (0) target = $region45
    $region44: #{tpu_custom_call.1} parent=1 // pred_region
      _
    $region45: #{tpu_custom_call.1} parent=1 // pred_fallthru
      _
    // Predicated region
    $region46: #{tpu_custom_call.1} parent=1 // pred_check
      _
    $region47: #{tpu_custom_call.1} parent=1 // pred_check_branch
      %48 = sbr.rel (0) target = $region49
    $region48: #{tpu_custom_call.1} parent=1 // pred_region
      _
    $region49: #{tpu_custom_call.1} parent=1 // pred_fallthru
      _
    // Predicated region
    $region50: #{tpu_custom_call.1} parent=1 // pred_check
      _
    $region51: #{tpu_custom_call.1} parent=1 // pred_check_branch
      %50 = sbr.rel (0) target = $region53
    $region52: #{tpu_custom_call.1} parent=1 // pred_region
      _
    $region53: #{tpu_custom_call.1} parent=1 // pred_fallthru
      _
    // Predicated region
    $region54: #{tpu_custom_call.1} parent=1 // pred_check
      _
    $region55: #{tpu_custom_call.1} parent=1 // pred_check_branch
      %52 = sbr.rel (0) target = $region57
    $region56: #{tpu_custom_call.1} parent=1 // pred_region
      _
    $region57: #{tpu_custom_call.1} parent=1 // pred_fallthru
      _
    // Predicated region
    $region58: #{tpu_custom_call.1} parent=1 // pred_check
      _
    $region59: #{tpu_custom_call.1} parent=1 // pred_check_branch
      %54 = sbr.rel (0) target = $region61
    $region60: #{tpu_custom_call.1} parent=1 // pred_region
      _
    $region61: #{tpu_custom_call.1} parent=1 // pred_fallthru
      _
    // Predicated region
    $region62: #{tpu_custom_call.1} parent=1 // pred_check
      _
    $region63: #{tpu_custom_call.1} parent=1 // pred_check_branch
      %56 = sbr.rel (0) target = $region65
    $region64: #{tpu_custom_call.1} parent=1 // pred_region
      _
    $region65: #{tpu_custom_call.1} parent=1 // pred_fallthru
      _
    // Predicated region
    $region66: #{tpu_custom_call.1} parent=1 // pred_check
      _
    $region67: #{tpu_custom_call.1} parent=1 // pred_check_branch
      %58 = sbr.rel (0) target = $region69
    $region68: #{tpu_custom_call.1} parent=1 // pred_region
      _
    $region69: #{tpu_custom_call.1} parent=1 // pred_fallthru
      _
    // Predicated region
    $region70: #{tpu_custom_call.1} parent=1 // pred_check
      _
    $region71: #{tpu_custom_call.1} parent=1 // pred_check_branch
      %60 = sbr.rel (0) target = $region73
    $region72: #{tpu_custom_call.1} parent=1 // pred_region
      _
    $region73: #{tpu_custom_call.1} parent=1 // pred_fallthru
      _
    // Predicated region
    $region74: #{tpu_custom_call.1} parent=1 // pred_check
      _
    $region75: #{tpu_custom_call.1} parent=1 // pred_check_branch
      %62 = sbr.rel (0) target = $region77
    $region76: #{tpu_custom_call.1} parent=1 // pred_region
      _
    $region77: #{tpu_custom_call.1} parent=1 // pred_fallthru
      _
    %v64 = vld [vmem:[%s0] sm:$0xf]
    %v65 = vld [vmem:[%s0 + $0x4] sm:$0xf]
    %v66 = vld [vmem:[%s0 + $0x8] sm:$0xf]
    %v67 = vld [vmem:[%s0 + $0xc] sm:$0xf]
    %v68 = vld [vmem:[%s0 + $0x10] sm:$0xf]
    %v69 = vld [vmem:[%s0 + $0x14] sm:$0xf]
    %v70 = vld [vmem:[%s0 + $0x18] sm:$0xf]
    %v71 = vld [vmem:[%s0 + $0x1c] sm:$0xf]
    %v72 = vld [vmem:[%s0 + $0x20] sm:$0xf]
    %v73 = vld [vmem:[%s0 + $0x24] sm:$0xf]
    %v74 = vld [vmem:[%s0 + $0x28] sm:$0xf]
    %v75 = vld [vmem:[%s0 + $0x2c] sm:$0xf]
    %v76 = vld [vmem:[%s0 + $0x30] sm:$0xf]
    %v77 = vld [vmem:[%s0 + $0x34] sm:$0xf]
    %v78 = vld [vmem:[%s0 + $0x38] sm:$0xf]
    %v79 = vld [vmem:[%s0 + $0x3c] sm:$0xf]
    %v80 = vld [vmem:[%s2] sm:$0xf]
    %v81 = vld [vmem:[%s2 + $0x4] sm:$0xf]
    %v82 = vld [vmem:[%s2 + $0x8] sm:$0xf]
    %v83 = vld [vmem:[%s2 + $0xc] sm:$0xf]
    %v84 = vld [vmem:[%s4] sm:$0x1]
    %v86 = vlaneseq
    %v87 = vshrl.u32 %v86, 7
    %v88 = vsub.s32 0, %v87
    %v89 = vrot.slane %v84, %v88
    %v107 = vunpack.c.l.b16 %v64
    %v108 = vunpack.c.l.b16 %v65
    %v109 = vunpack.c.l.b16 %v66
    %v110 = vunpack.c.l.b16 %v67
    %v111 = vunpack.c.l.b16 %v68
    %v112 = vunpack.c.l.b16 %v69
    %v113 = vunpack.c.l.b16 %v70
    %v114 = vunpack.c.l.b16 %v71
    %v115 = vunpack.c.l.b16 %v72
    %v116 = vunpack.c.l.b16 %v73
    %v117 = vunpack.c.l.b16 %v74
    %v118 = vunpack.c.l.b16 %v75
    %v119 = vunpack.c.l.b16 %v76
    %v120 = vunpack.c.l.b16 %v77
    %v121 = vunpack.c.l.b16 %v78
    %v122 = vunpack.c.l.b16 %v79
    %v123 = vpack.c.b16 %v108, %v107
    %v124 = vpack.c.b16 %v110, %v109
    %v125 = vpack.c.b16 %v112, %v111
    %v126 = vpack.c.b16 %v114, %v113
    %v127 = vpack.c.b16 %v116, %v115
    %v128 = vpack.c.b16 %v118, %v117
    %v129 = vpack.c.b16 %v120, %v119
    %v130 = vpack.c.b16 %v122, %v121
    %v135 = vunpack.c.l.b16 %v80
    %v136 = vunpack.c.l.b16 %v81
    %v137 = vunpack.c.l.b16 %v82
    %v138 = vunpack.c.l.b16 %v83
    %v139 = vpack.c.b16 %v136, %v135
    %v140 = vpack.c.b16 %v138, %v137
    %vm143 = vcmask 261120
    %v145 = vsel %vm143, %v123, 0
    %v148 = vsel %vm143, %v124, 0
    %v151 = vsel %vm143, %v125, 0
    %v154 = vsel %vm143, %v126, 0
    %v157 = vsel %vm143, %v127, 0
    %v160 = vsel %vm143, %v128, 0
    %v163 = vsel %vm143, %v129, 0
    %v166 = vsel %vm143, %v130, 0
    %168 = vmatprep.subr.bf16.mxu0 0
    %169 = vmatpush1.bf16.msra.mxu0 %v139
    %170 = vmatprep.subr.bf16.mxu0 0
    %171 = vmatpush1.bf16.msra.mxu0 %v140
    %172 = vmatprep.subr.bf16.mxu0 0
    %173 = vmatpush1.bf16.msra.mxu0 0
    %174 = vmatprep.subr.bf16.mxu0 0
    %175 = vmatpush1.bf16.msra.mxu0 0
    %176 = vmatprep.subr.bf16.mxu0 0
    %177 = vmatpush1.bf16.msra.mxu0 0
    %178 = vmatprep.subr.bf16.mxu0 0
    %179 = vmatpush1.bf16.msra.mxu0 0
    %180 = vmatprep.subr.bf16.mxu0 0
    %181 = vmatpush1.bf16.msra.mxu0 0
    %182 = vmatprep.subr.bf16.mxu0 0
    %183 = vmatpush1.bf16.msra.mxu0 0
    %184 = vmatprep.subr.bf16.mxu0 0
    %185 = vmatpush1.bf16.msra.mxu0 0
    %186 = vmatprep.subr.bf16.mxu0 0
    %187 = vmatpush1.bf16.msra.mxu0 0
    %188 = vmatprep.subr.bf16.mxu0 0
    %189 = vmatpush1.bf16.msra.mxu0 0
    %190 = vmatprep.subr.bf16.mxu0 0
    %191 = vmatpush1.bf16.msra.mxu0 0
    %192 = vmatprep.subr.bf16.mxu0 0
    %193 = vmatpush1.bf16.msra.mxu0 0
    %194 = vmatprep.subr.bf16.mxu0 0
    %195 = vmatpush1.bf16.msra.mxu0 0
    %196 = vmatprep.subr.bf16.mxu0 0
    %197 = vmatpush1.bf16.msra.mxu0 0
    %198 = vmatprep.subr.bf16.mxu0 0
    %199 = vmatpush1.bf16.msra.mxu0 0
    %200 = vmatprep.mubr.bf16.mxu0 0
    %201 = vmatmul.mubr.bf16.gmra.mrb[0].mxu0 %v145
    %v202 = vpop.f32.mrb[0].mxu0
    %v203 = vadd.f32 %v89, %v202
    %v204 = vpop.f32.mrb[0].mxu0
    %v205 = vpop.f32.mrb[0].mxu0
    %v206 = vadd.f32 %v89, %v205
    %v207 = vpop.f32.mrb[0].mxu0
    %208 = vmatprep.mubr.bf16.mxu0 0
    %209 = vmatmul.mubr.bf16.gmra.mrb[0].mxu0 %v148
    %v210 = vpop.f32.mrb[0].mxu0
    %v211 = vadd.f32 %v89, %v210
    %v212 = vpop.f32.mrb[0].mxu0
    %v213 = vpop.f32.mrb[0].mxu0
    %v214 = vadd.f32 %v89, %v213
    %v215 = vpop.f32.mrb[0].mxu0
    %216 = vmatprep.mubr.bf16.mxu0 0
    %217 = vmatmul.mubr.bf16.gmra.mrb[0].mxu0 %v151
    %v218 = vpop.f32.mrb[0].mxu0
    %v219 = vadd.f32 %v89, %v218
    %v220 = vpop.f32.mrb[0].mxu0
    %v221 = vpop.f32.mrb[0].mxu0
    %v222 = vadd.f32 %v89, %v221
    %v223 = vpop.f32.mrb[0].mxu0
    %224 = vmatprep.mubr.bf16.mxu0 0
    %225 = vmatmul.mubr.bf16.gmra.mrb[0].mxu0 %v154
    %v226 = vpop.f32.mrb[0].mxu0
    %v227 = vadd.f32 %v89, %v226
    %v228 = vpop.f32.mrb[0].mxu0
    %v229 = vpop.f32.mrb[0].mxu0
    %v230 = vadd.f32 %v89, %v229
    %v231 = vpop.f32.mrb[0].mxu0
    %232 = vmatprep.mubr.bf16.mxu0 0
    %233 = vmatmul.mubr.bf16.gmra.mrb[0].mxu0 %v157
    %v234 = vpop.f32.mrb[0].mxu0
    %v235 = vadd.f32 %v89, %v234
    %v236 = vpop.f32.mrb[0].mxu0
    %v237 = vpop.f32.mrb[0].mxu0
    %v238 = vadd.f32 %v89, %v237
    %v239 = vpop.f32.mrb[0].mxu0
    %240 = vmatprep.mubr.bf16.mxu0 0
    %241 = vmatmul.mubr.bf16.gmra.mrb[0].mxu0 %v160
    %v242 = vpop.f32.mrb[0].mxu0
    %v243 = vadd.f32 %v89, %v242
    %v244 = vpop.f32.mrb[0].mxu0
    %v245 = vpop.f32.mrb[0].mxu0
    %v246 = vadd.f32 %v89, %v245
    %v247 = vpop.f32.mrb[0].mxu0
    %248 = vmatprep.mubr.bf16.mxu0 0
    %249 = vmatmul.mubr.bf16.gmra.mrb[0].mxu0 %v163
    %v250 = vpop.f32.mrb[0].mxu0
    %v251 = vadd.f32 %v89, %v250
    %v252 = vpop.f32.mrb[0].mxu0
    %v253 = vpop.f32.mrb[0].mxu0
    %v254 = vadd.f32 %v89, %v253
    %v255 = vpop.f32.mrb[0].mxu0
    %256 = vmatprep.mubr.bf16.mxu0 0
    %257 = vmatmul.mubr.bf16.gmra.mrb[0].mxu0 %v166
    %v258 = vpop.f32.mrb[0].mxu0
    %v259 = vadd.f32 %v89, %v258
    %v260 = vpop.f32.mrb[0].mxu0
    %v261 = vpop.f32.mrb[0].mxu0
    %v262 = vadd.f32 %v89, %v261
    %v263 = vpop.f32.mrb[0].mxu0
    %264 = vdwg.mxu0
    %v265 = vld [vmem:[%s6] sm:$0xf]
    %v266 = vld [vmem:[%s6 + $0x4] sm:$0xf]
    %v267 = vld [vmem:[%s6 + $0x8] sm:$0xf]
    %v268 = vld [vmem:[%s6 + $0xc] sm:$0xf]
    %v269 = vld [vmem:[%s8] sm:$0x1]
    %v271 = vlaneseq
    %v272 = vshrl.u32 %v271, 7
    %v273 = vsub.s32 0, %v272
    %v274 = vrot.slane %v269, %v273
    %v280 = vunpack.c.l.b16 %v265
    %v281 = vunpack.c.l.b16 %v266
    %v282 = vunpack.c.l.b16 %v267
    %v283 = vunpack.c.l.b16 %v268
    %v284 = vpack.c.b16 %v281, %v280
    %v285 = vpack.c.b16 %v283, %v282
    %288 = vmatprep.subr.bf16.mxu0 0
    %289 = vmatpush1.bf16.msra.mxu0 %v284
    %290 = vmatprep.subr.bf16.mxu0 0
    %291 = vmatpush1.bf16.msra.mxu0 %v285
    %292 = vmatprep.subr.bf16.mxu0 0
    %293 = vmatpush1.bf16.msra.mxu0 0
    %294 = vmatprep.subr.bf16.mxu0 0
    %295 = vmatpush1.bf16.msra.mxu0 0
    %296 = vmatprep.subr.bf16.mxu0 0
    %297 = vmatpush1.bf16.msra.mxu0 0
    %298 = vmatprep.subr.bf16.mxu0 0
    %299 = vmatpush1.bf16.msra.mxu0 0
    %300 = vmatprep.subr.bf16.mxu0 0
    %301 = vmatpush1.bf16.msra.mxu0 0
    %302 = vmatprep.subr.bf16.mxu0 0
    %303 = vmatpush1.bf16.msra.mxu0 0
    %304 = vmatprep.subr.bf16.mxu0 0
    %305 = vmatpush1.bf16.msra.mxu0 0
    %306 = vmatprep.subr.bf16.mxu0 0
    %307 = vmatpush1.bf16.msra.mxu0 0
    %308 = vmatprep.subr.bf16.mxu0 0
    %309 = vmatpush1.bf16.msra.mxu0 0
    %310 = vmatprep.subr.bf16.mxu0 0
    %311 = vmatpush1.bf16.msra.mxu0 0
    %312 = vmatprep.subr.bf16.mxu0 0
    %313 = vmatpush1.bf16.msra.mxu0 0
    %314 = vmatprep.subr.bf16.mxu0 0
    %315 = vmatpush1.bf16.msra.mxu0 0
    %316 = vmatprep.subr.bf16.mxu0 0
    %317 = vmatpush1.bf16.msra.mxu0 0
    %318 = vmatprep.subr.bf16.mxu0 0
    %319 = vmatpush1.bf16.msra.mxu0 0
    %320 = vmatprep.mubr.bf16.mxu0 0
    %321 = vmatmul.mubr.bf16.gmra.mrb[0].mxu0 %v145
    %v322 = vpop.f32.mrb[0].mxu0
    %v323 = vadd.f32 %v274, %v322
    %v324 = vpop.f32.mrb[0].mxu0
    %v325 = vpop.f32.mrb[0].mxu0
    %v326 = vadd.f32 %v274, %v325
    %v327 = vpop.f32.mrb[0].mxu0
    %328 = vmatprep.mubr.bf16.mxu0 0
    %329 = vmatmul.mubr.bf16.gmra.mrb[0].mxu0 %v148
    %v330 = vpop.f32.mrb[0].mxu0
    %v331 = vadd.f32 %v274, %v330
    %v332 = vpop.f32.mrb[0].mxu0
    %v333 = vpop.f32.mrb[0].mxu0
    %v334 = vadd.f32 %v274, %v333
    %v335 = vpop.f32.mrb[0].mxu0
    %336 = vmatprep.mubr.bf16.mxu0 0
    %337 = vmatmul.mubr.bf16.gmra.mrb[0].mxu0 %v151
    %v338 = vpop.f32.mrb[0].mxu0
    %v339 = vadd.f32 %v274, %v338
    %v340 = vpop.f32.mrb[0].mxu0
    %v341 = vpop.f32.mrb[0].mxu0
    %v342 = vadd.f32 %v274, %v341
    %v343 = vpop.f32.mrb[0].mxu0
    %344 = vmatprep.mubr.bf16.mxu0 0
    %345 = vmatmul.mubr.bf16.gmra.mrb[0].mxu0 %v154
    %v346 = vpop.f32.mrb[0].mxu0
    %v347 = vadd.f32 %v274, %v346
    %v348 = vpop.f32.mrb[0].mxu0
    %v349 = vpop.f32.mrb[0].mxu0
    %v350 = vadd.f32 %v274, %v349
    %v351 = vpop.f32.mrb[0].mxu0
    %352 = vmatprep.mubr.bf16.mxu0 0
    %353 = vmatmul.mubr.bf16.gmra.mrb[0].mxu0 %v157
    %v354 = vpop.f32.mrb[0].mxu0
    %v355 = vadd.f32 %v274, %v354
    %v356 = vpop.f32.mrb[0].mxu0
    %v357 = vpop.f32.mrb[0].mxu0
    %v358 = vadd.f32 %v274, %v357
    %v359 = vpop.f32.mrb[0].mxu0
    %360 = vmatprep.mubr.bf16.mxu0 0
    %361 = vmatmul.mubr.bf16.gmra.mrb[0].mxu0 %v160
    %v362 = vpop.f32.mrb[0].mxu0
    %v363 = vadd.f32 %v274, %v362
    %v364 = vpop.f32.mrb[0].mxu0
    %v365 = vpop.f32.mrb[0].mxu0
    %v366 = vadd.f32 %v274, %v365
    %v367 = vpop.f32.mrb[0].mxu0
    %368 = vmatprep.mubr.bf16.mxu0 0
    %369 = vmatmul.mubr.bf16.gmra.mrb[0].mxu0 %v163
    %v370 = vpop.f32.mrb[0].mxu0
    %v371 = vadd.f32 %v274, %v370
    %v372 = vpop.f32.mrb[0].mxu0
    %v373 = vpop.f32.mrb[0].mxu0
    %v374 = vadd.f32 %v274, %v373
    %v375 = vpop.f32.mrb[0].mxu0
    %376 = vmatprep.mubr.bf16.mxu0 0
    %377 = vmatmul.mubr.bf16.gmra.mrb[0].mxu0 %v166
    %v378 = vpop.f32.mrb[0].mxu0
    %v379 = vadd.f32 %v274, %v378
    %v380 = vpop.f32.mrb[0].mxu0
    %v381 = vpop.f32.mrb[0].mxu0
    %v382 = vadd.f32 %v274, %v381
    %v383 = vpop.f32.mrb[0].mxu0
    %384 = vdwg.mxu0
    %vm385 = vcmask 785408
    %386 = vst.msk [vmem:[#allocation2] sm:$0xff] %vm385, %v203
    %387 = vst.msk [vmem:[#allocation2 + $0x8] sm:$0xff] %vm385, %v206
    %388 = vst.msk [vmem:[#allocation2 + $0x10] sm:$0xff] %vm385, %v211
    %389 = vst.msk [vmem:[#allocation2 + $0x18] sm:$0xff] %vm385, %v214
    %390 = vst.msk [vmem:[#allocation2 + $0x20] sm:$0xff] %vm385, %v219
    %391 = vst.msk [vmem:[#allocation2 + $0x28] sm:$0xff] %vm385, %v222
    %392 = vst.msk [vmem:[#allocation2 + $0x30] sm:$0xff] %vm385, %v227
    %393 = vst.msk [vmem:[#allocation2 + $0x38] sm:$0xff] %vm385, %v230
    %394 = vst.msk [vmem:[#allocation2 + $0x40] sm:$0xff] %vm385, %v235
    %395 = vst.msk [vmem:[#allocation2 + $0x48] sm:$0xff] %vm385, %v238
    %396 = vst.msk [vmem:[#allocation2 + $0x50] sm:$0xff] %vm385, %v243
    %397 = vst.msk [vmem:[#allocation2 + $0x58] sm:$0xff] %vm385, %v246
    %398 = vst.msk [vmem:[#allocation2 + $0x60] sm:$0xff] %vm385, %v251
    %399 = vst.msk [vmem:[#allocation2 + $0x68] sm:$0xff] %vm385, %v254
    %400 = vst.msk [vmem:[#allocation2 + $0x70] sm:$0xff] %vm385, %v259
    %401 = vst.msk [vmem:[#allocation2 + $0x78] sm:$0xff] %vm385, %v262
    %402 = vst.msk [vmem:[#allocation3] sm:$0xff] %vm385, %v323
    %403 = vst.msk [vmem:[#allocation3 + $0x8] sm:$0xff] %vm385, %v326
    %404 = vst.msk [vmem:[#allocation3 + $0x10] sm:$0xff] %vm385, %v331
    %405 = vst.msk [vmem:[#allocation3 + $0x18] sm:$0xff] %vm385, %v334
    %406 = vst.msk [vmem:[#allocation3 + $0x20] sm:$0xff] %vm385, %v339
    %407 = vst.msk [vmem:[#allocation3 + $0x28] sm:$0xff] %vm385, %v342
    %408 = vst.msk [vmem:[#allocation3 + $0x30] sm:$0xff] %vm385, %v347
    %409 = vst.msk [vmem:[#allocation3 + $0x38] sm:$0xff] %vm385, %v350
    %410 = vst.msk [vmem:[#allocation3 + $0x40] sm:$0xff] %vm385, %v355
    %411 = vst.msk [vmem:[#allocation3 + $0x48] sm:$0xff] %vm385, %v358
    %412 = vst.msk [vmem:[#allocation3 + $0x50] sm:$0xff] %vm385, %v363
    %413 = vst.msk [vmem:[#allocation3 + $0x58] sm:$0xff] %vm385, %v366
    %414 = vst.msk [vmem:[#allocation3 + $0x60] sm:$0xff] %vm385, %v371
    %415 = vst.msk [vmem:[#allocation3 + $0x68] sm:$0xff] %vm385, %v374
    %416 = vst.msk [vmem:[#allocation3 + $0x70] sm:$0xff] %vm385, %v379
    %417 = vst.msk [vmem:[#allocation3 + $0x78] sm:$0xff] %vm385, %v382
    %418 = vst.msk [vmem:[#allocation4] sm:$0xff] %vm143, 0.0
    %419 = vst.msk [vmem:[#allocation4 + $0x8] sm:$0xff] %vm143, 0.0
    %420 = vst.msk [vmem:[#allocation4 + $0x10] sm:$0xff] %vm143, 0.0
    %421 = vst.msk [vmem:[#allocation4 + $0x18] sm:$0xff] %vm143, 0.0
    %422 = vst.msk [vmem:[#allocation4 + $0x20] sm:$0xff] %vm143, 0.0
    %423 = vst.msk [vmem:[#allocation4 + $0x28] sm:$0xff] %vm143, 0.0
    %424 = vst.msk [vmem:[#allocation4 + $0x30] sm:$0xff] %vm143, 0.0
    %425 = vst.msk [vmem:[#allocation4 + $0x38] sm:$0xff] %vm143, 0.0
    %426 = vst.msk [vmem:[#allocation5] sm:$0xff] %vm143, 0.0
    %427 = vst.msk [vmem:[#allocation5 + $0x8] sm:$0xff] %vm143, 0.0
    %428 = vst.msk [vmem:[#allocation5 + $0x10] sm:$0xff] %vm143, 0.0
    %429 = vst.msk [vmem:[#allocation5 + $0x18] sm:$0xff] %vm143, 0.0
    %430 = vst.msk [vmem:[#allocation5 + $0x20] sm:$0xff] %vm143, 0.0
    %431 = vst.msk [vmem:[#allocation5 + $0x28] sm:$0xff] %vm143, 0.0
    %432 = vst.msk [vmem:[#allocation5 + $0x30] sm:$0xff] %vm143, 0.0
    %433 = vst.msk [vmem:[#allocation5 + $0x38] sm:$0xff] %vm143, 0.0
    %v434 = vld [vmem:[%s3] sm:$0xf]
    %v435 = vld [vmem:[%s3 + $0x4] sm:$0xf]
    %v436 = vld [vmem:[%s3 + $0x8] sm:$0xf]
    %v437 = vld [vmem:[%s3 + $0xc] sm:$0xf]
    %v438 = vld [vmem:[%s7] sm:$0xf]
    %v439 = vld [vmem:[%s7 + $0x4] sm:$0xf]
    %v440 = vld [vmem:[%s7 + $0x8] sm:$0xf]
    %v441 = vld [vmem:[%s7 + $0xc] sm:$0xf]
    %v442 = vld [vmem:[%s5] sm:$0x1]
    %v444 = vlaneseq
    %v445 = vshrl.u32 %v444, 7
    %v446 = vsub.s32 0, %v445
    %v447 = vrot.slane %v442, %v446
    %v448 = vld [vmem:[%s9] sm:$0x1]
    %v450 = vlaneseq
    %v451 = vshrl.u32 %v450, 7
    %v452 = vsub.s32 0, %v451
    %v453 = vrot.slane %v448, %v452
    %v454 = vld [vmem:[#allocation2] sm:$0xff]
    %v455 = vld [vmem:[#allocation2 + $0x10] sm:$0xff]
    %v456 = vld [vmem:[#allocation2 + $0x20] sm:$0xff]
    %v457 = vld [vmem:[#allocation2 + $0x30] sm:$0xff]
    %v458 = vld [vmem:[#allocation2 + $0x40] sm:$0xff]
    %v459 = vld [vmem:[#allocation2 + $0x50] sm:$0xff]
    %v460 = vld [vmem:[#allocation2 + $0x60] sm:$0xff]
    %v461 = vld [vmem:[#allocation2 + $0x70] sm:$0xff]
    %v462 = vld [vmem:[#allocation3 + $0x4] sm:$0xff]
    %v463 = vld [vmem:[#allocation3 + $0x14] sm:$0xff]
    %v464 = vld [vmem:[#allocation3 + $0x24] sm:$0xff]
    %v465 = vld [vmem:[#allocation3 + $0x34] sm:$0xff]
    %v466 = vld [vmem:[#allocation3 + $0x44] sm:$0xff]
    %v467 = vld [vmem:[#allocation3 + $0x54] sm:$0xff]
    %v468 = vld [vmem:[#allocation3 + $0x64] sm:$0xff]
    %v469 = vld [vmem:[#allocation3 + $0x74] sm:$0xff]
    %v470 = vld [vmem:[#allocation4] sm:$0xff]
    %v471 = vld [vmem:[#allocation4 + $0x8] sm:$0xff]
    %v472 = vld [vmem:[#allocation4 + $0x10] sm:$0xff]
    %v473 = vld [vmem:[#allocation4 + $0x18] sm:$0xff]
    %v474 = vld [vmem:[#allocation4 + $0x20] sm:$0xff]
    %v475 = vld [vmem:[#allocation4 + $0x28] sm:$0xff]
    %v476 = vld [vmem:[#allocation4 + $0x30] sm:$0xff]
    %v477 = vld [vmem:[#allocation4 + $0x38] sm:$0xff]
    %v478 = vpack.c.bf16 %v471, %v470
    %v479 = vpack.c.bf16 %v473, %v472
    %v480 = vpack.c.bf16 %v475, %v474
    %v481 = vpack.c.bf16 %v477, %v476
    %v486 = vunpack.c.l.b16 %v434
    %v487 = vunpack.c.l.b16 %v435
    %v488 = vunpack.c.l.b16 %v436
    %v489 = vunpack.c.l.b16 %v437
    %v490 = vpack.c.b16 %v487, %v486
    %v491 = vpack.c.b16 %v489, %v488
    %v495 = vsel %vm143, %v478, 0
    %v498 = vsel %vm143, %v479, 0
    %v501 = vsel %vm143, %v480, 0
    %v504 = vsel %vm143, %v481, 0
    %506 = vmatprep.subr.bf16.mxu0 0
    %507 = vmatpush1.bf16.msra.mxu0 %v490
    %508 = vmatprep.subr.bf16.mxu0 0
    %509 = vmatpush1.bf16.msra.mxu0 %v491
    %510 = vmatprep.subr.bf16.mxu0 0
    %511 = vmatpush1.bf16.msra.mxu0 0
    %512 = vmatprep.subr.bf16.mxu0 0
    %513 = vmatpush1.bf16.msra.mxu0 0
    %514 = vmatprep.subr.bf16.mxu0 0
    %515 = vmatpush1.bf16.msra.mxu0 0
    %516 = vmatprep.subr.bf16.mxu0 0
    %517 = vmatpush1.bf16.msra.mxu0 0
    %518 = vmatprep.subr.bf16.mxu0 0
    %519 = vmatpush1.bf16.msra.mxu0 0
    %520 = vmatprep.subr.bf16.mxu0 0
    %521 = vmatpush1.bf16.msra.mxu0 0
    %522 = vmatprep.subr.bf16.mxu0 0
    %523 = vmatpush1.bf16.msra.mxu0 0
    %524 = vmatprep.subr.bf16.mxu0 0
    %525 = vmatpush1.bf16.msra.mxu0 0
    %526 = vmatprep.subr.bf16.mxu0 0
    %527 = vmatpush1.bf16.msra.mxu0 0
    %528 = vmatprep.subr.bf16.mxu0 0
    %529 = vmatpush1.bf16.msra.mxu0 0
    %530 = vmatprep.subr.bf16.mxu0 0
    %531 = vmatpush1.bf16.msra.mxu0 0
    %532 = vmatprep.subr.bf16.mxu0 0
    %533 = vmatpush1.bf16.msra.mxu0 0
    %534 = vmatprep.subr.bf16.mxu0 0
    %535 = vmatpush1.bf16.msra.mxu0 0
    %536 = vmatprep.subr.bf16.mxu0 0
    %537 = vmatpush1.bf16.msra.mxu0 0
    %538 = vmatprep.mubr.bf16.mxu0 0
    %539 = vmatmul.mubr.bf16.gmra.mrb[0].mxu0 %v495
    %v540 = vpop.f32.mrb[0].mxu0
    %v541 = vadd.f32 0.0, %v540
    %v542 = vpop.f32.mrb[0].mxu0
    %v543 = vpop.f32.mrb[0].mxu0
    %v544 = vadd.f32 0.0, %v543
    %v545 = vpop.f32.mrb[0].mxu0
    %546 = vmatprep.mubr.bf16.mxu0 0
    %547 = vmatmul.mubr.bf16.gmra.mrb[0].mxu0 %v498
    %v548 = vpop.f32.mrb[0].mxu0
    %v549 = vadd.f32 0.0, %v548
    %v550 = vpop.f32.mrb[0].mxu0
    %v551 = vpop.f32.mrb[0].mxu0
    %v552 = vadd.f32 0.0, %v551
    %v553 = vpop.f32.mrb[0].mxu0
    %554 = vmatprep.mubr.bf16.mxu0 0
    %555 = vmatmul.mubr.bf16.gmra.mrb[0].mxu0 %v501
    %v556 = vpop.f32.mrb[0].mxu0
    %v557 = vadd.f32 0.0, %v556
    %v558 = vpop.f32.mrb[0].mxu0
    %v559 = vpop.f32.mrb[0].mxu0
    %v560 = vadd.f32 0.0, %v559
    %v561 = vpop.f32.mrb[0].mxu0
    %562 = vmatprep.mubr.bf16.mxu0 0
    %563 = vmatmul.mubr.bf16.gmra.mrb[0].mxu0 %v504
    %v564 = vpop.f32.mrb[0].mxu0
    %v565 = vadd.f32 0.0, %v564
    %v566 = vpop.f32.mrb[0].mxu0
    %v567 = vpop.f32.mrb[0].mxu0
    %v568 = vadd.f32 0.0, %v567
    %v569 = vpop.f32.mrb[0].mxu0
    %570 = vdwg.mxu0
    %v571 = vadd.f32 %v454, %v541
    %v572 = vadd.f32 %v455, %v544
    %v573 = vadd.f32 %v456, %v549
    %v574 = vadd.f32 %v457, %v552
    %v575 = vadd.f32 %v458, %v557
    %v576 = vadd.f32 %v459, %v560
    %v577 = vadd.f32 %v460, %v565
    %v578 = vadd.f32 %v461, %v568
    %v579 = vxor.u32 %v571, 2147483648
    %v580 = vxor.u32 %v572, 2147483648
    %v581 = vxor.u32 %v573, 2147483648
    %v582 = vxor.u32 %v574, 2147483648
    %v583 = vxor.u32 %v575, 2147483648
    %v584 = vxor.u32 %v576, 2147483648
    %v585 = vxor.u32 %v577, 2147483648
    %v586 = vxor.u32 %v578, 2147483648
    %v587 = vmul.f32 %v579, 1.442695
    %v588 = vpow.pop %v587
    %v589 = vmul.f32 %v580, 1.442695
    %v590 = vpow.pop %v589
    %v591 = vmul.f32 %v581, 1.442695
    %v592 = vpow.pop %v591
    %v593 = vmul.f32 %v582, 1.442695
    %v594 = vpow.pop %v593
    %v595 = vmul.f32 %v583, 1.442695
    %v596 = vpow.pop %v595
    %v597 = vmul.f32 %v584, 1.442695
    %v598 = vpow.pop %v597
    %v599 = vmul.f32 %v585, 1.442695
    %v600 = vpow.pop %v599
    %v601 = vmul.f32 %v586, 1.442695
    %v602 = vpow.pop %v601
    %v603 = vadd.f32 %v588, 1.0
    %v604 = vadd.f32 %v590, 1.0
    %v605 = vadd.f32 %v592, 1.0
    %v606 = vadd.f32 %v594, 1.0
    %v607 = vadd.f32 %v596, 1.0
    %v608 = vadd.f32 %v598, 1.0
    %v609 = vadd.f32 %v600, 1.0
    %v610 = vadd.f32 %v602, 1.0
    %v611 = vrcp.pop %v603
    %v612 = vmul.f32 1.0, %v611
    %v613 = vrcp.pop %v604
    %v614 = vmul.f32 1.0, %v613
    %v615 = vrcp.pop %v605
    %v616 = vmul.f32 1.0, %v615
    %v617 = vrcp.pop %v606
    %v618 = vmul.f32 1.0, %v617
    %v619 = vrcp.pop %v607
    %v620 = vmul.f32 1.0, %v619
    %v621 = vrcp.pop %v608
    %v622 = vmul.f32 1.0, %v621
    %v623 = vrcp.pop %v609
    %v624 = vmul.f32 1.0, %v623
    %v625 = vrcp.pop %v610
    %v626 = vmul.f32 1.0, %v625
    %627 = vrot.lane.b32.xlu0 %v447, 64
    %v628 = vpop.permute.xlu0 %627
    %v630 = vadd.f32 %v541, %v628
    %v631 = vadd.f32 %v544, %v628
    %v632 = vadd.f32 %v549, %v628
    %v633 = vadd.f32 %v552, %v628
    %v634 = vadd.f32 %v557, %v628
    %v635 = vadd.f32 %v560, %v628
    %v636 = vadd.f32 %v565, %v628
    %v637 = vadd.f32 %v568, %v628
    %646 = vrot.lane.b32.xlu0 %v630, 64
    %v647 = vpop.permute.xlu0 %646
    %648 = vrot.lane.b32.xlu0 %v631, 64
    %v649 = vpop.permute.xlu0 %648
    %650 = vrot.lane.b32.xlu0 %v632, 64
    %v651 = vpop.permute.xlu0 %650
    %652 = vrot.lane.b32.xlu0 %v633, 64
    %v653 = vpop.permute.xlu0 %652
    %654 = vrot.lane.b32.xlu0 %v634, 64
    %v655 = vpop.permute.xlu0 %654
    %656 = vrot.lane.b32.xlu0 %v635, 64
    %v657 = vpop.permute.xlu0 %656
    %658 = vrot.lane.b32.xlu0 %v636, 64
    %v659 = vpop.permute.xlu0 %658
    %660 = vrot.lane.b32.xlu0 %v637, 64
    %v661 = vpop.permute.xlu0 %660
    %v670 = vmul.f32 %v612, %v647
    %v671 = vmul.f32 %v614, %v649
    %v672 = vmul.f32 %v616, %v651
    %v673 = vmul.f32 %v618, %v653
    %v674 = vmul.f32 %v620, %v655
    %v675 = vmul.f32 %v622, %v657
    %v676 = vmul.f32 %v624, %v659
    %v677 = vmul.f32 %v626, %v661
    %686 = vrot.lane.b32.xlu0 %v670, 64
    %v687 = vpop.permute.xlu0 %686
    %688 = vrot.lane.b32.xlu0 %v671, 64
    %v689 = vpop.permute.xlu0 %688
    %690 = vrot.lane.b32.xlu0 %v672, 64
    %v691 = vpop.permute.xlu0 %690
    %692 = vrot.lane.b32.xlu0 %v673, 64
    %v693 = vpop.permute.xlu0 %692
    %694 = vrot.lane.b32.xlu0 %v674, 64
    %v695 = vpop.permute.xlu0 %694
    %696 = vrot.lane.b32.xlu0 %v675, 64
    %v697 = vpop.permute.xlu0 %696
    %698 = vrot.lane.b32.xlu0 %v676, 64
    %v699 = vpop.permute.xlu0 %698
    %700 = vrot.lane.b32.xlu0 %v677, 64
    %v701 = vpop.permute.xlu0 %700
    %v710 = vadd.f32 %v454, %v687
    %v711 = vadd.f32 %v455, %v689
    %v712 = vadd.f32 %v456, %v691
    %v713 = vadd.f32 %v457, %v693
    %v714 = vadd.f32 %v458, %v695
    %v715 = vadd.f32 %v459, %v697
    %v716 = vadd.f32 %v460, %v699
    %v717 = vadd.f32 %v461, %v701
    %v718 = vtanh.pop %v710
    %v719 = vtanh.pop %v711
    %v720 = vtanh.pop %v712
    %v721 = vtanh.pop %v713
    %v722 = vtanh.pop %v714
    %v723 = vtanh.pop %v715
    %v724 = vtanh.pop %v716
    %v725 = vtanh.pop %v717
    %v726 = vsub.f32 1.0, %v612
    %v727 = vsub.f32 1.0, %v614
    %v728 = vsub.f32 1.0, %v616
    %v729 = vsub.f32 1.0, %v618
    %v730 = vsub.f32 1.0, %v620
    %v731 = vsub.f32 1.0, %v622
    %v732 = vsub.f32 1.0, %v624
    %v733 = vsub.f32 1.0, %v626
    %742 = vrot.lane.b32.xlu0 %v718, 96
    %v743 = vpop.permute.xlu0 %742
    %744 = vrot.lane.b32.xlu0 %v719, 96
    %v745 = vpop.permute.xlu0 %744
    %746 = vrot.lane.b32.xlu0 %v720, 96
    %v747 = vpop.permute.xlu0 %746
    %748 = vrot.lane.b32.xlu0 %v721, 96
    %v749 = vpop.permute.xlu0 %748
    %750 = vrot.lane.b32.xlu0 %v722, 96
    %v751 = vpop.permute.xlu0 %750
    %752 = vrot.lane.b32.xlu0 %v723, 96
    %v753 = vpop.permute.xlu0 %752
    %754 = vrot.lane.b32.xlu0 %v724, 96
    %v755 = vpop.permute.xlu0 %754
    %756 = vrot.lane.b32.xlu0 %v725, 96
    %v757 = vpop.permute.xlu0 %756
    %v766 = vmul.f32 %v726, %v743
    %v767 = vmul.f32 %v727, %v745
    %v768 = vmul.f32 %v728, %v747
    %v769 = vmul.f32 %v729, %v749
    %v770 = vmul.f32 %v730, %v751
    %v771 = vmul.f32 %v731, %v753
    %v772 = vmul.f32 %v732, %v755
    %v773 = vmul.f32 %v733, %v757
    %782 = vrot.lane.b32.xlu0 %v470, 32
    %v783 = vpop.permute.xlu0 %782
    %784 = vrot.lane.b32.xlu0 %v471, 32
    %v785 = vpop.permute.xlu0 %784
    %786 = vrot.lane.b32.xlu0 %v472, 32
    %v787 = vpop.permute.xlu0 %786
    %788 = vrot.lane.b32.xlu0 %v473, 32
    %v789 = vpop.permute.xlu0 %788
    %790 = vrot.lane.b32.xlu0 %v474, 32
    %v791 = vpop.permute.xlu0 %790
    %792 = vrot.lane.b32.xlu0 %v475, 32
    %v793 = vpop.permute.xlu0 %792
    %794 = vrot.lane.b32.xlu0 %v476, 32
    %v795 = vpop.permute.xlu0 %794
    %796 = vrot.lane.b32.xlu0 %v477, 32
    %v797 = vpop.permute.xlu0 %796
    %v806 = vmul.f32 %v612, %v783
    %v807 = vmul.f32 %v614, %v785
    %v808 = vmul.f32 %v616, %v787
    %v809 = vmul.f32 %v618, %v789
    %v810 = vmul.f32 %v620, %v791
    %v811 = vmul.f32 %v622, %v793
    %v812 = vmul.f32 %v624, %v795
    %v813 = vmul.f32 %v626, %v797
    %v814 = vadd.f32 %v766, %v806
    %v815 = vadd.f32 %v767, %v807
    %v816 = vadd.f32 %v768, %v808
    %v817 = vadd.f32 %v769, %v809
    %v818 = vadd.f32 %v770, %v810
    %v819 = vadd.f32 %v771, %v811
    %v820 = vadd.f32 %v772, %v812
    %v821 = vadd.f32 %v773, %v813
    %830 = vrot.lane.b32.xlu0 %v814, 96
    %v831 = vpop.permute.xlu0 %830
    %832 = vrot.lane.b32.xlu0 %v815, 96
    %v833 = vpop.permute.xlu0 %832
    %834 = vrot.lane.b32.xlu0 %v816, 96
    %v835 = vpop.permute.xlu0 %834
    %836 = vrot.lane.b32.xlu0 %v817, 96
    %v837 = vpop.permute.xlu0 %836
    %838 = vrot.lane.b32.xlu0 %v818, 96
    %v839 = vpop.permute.xlu0 %838
    %840 = vrot.lane.b32.xlu0 %v819, 96
    %v841 = vpop.permute.xlu0 %840
    %842 = vrot.lane.b32.xlu0 %v820, 96
    %v843 = vpop.permute.xlu0 %842
    %844 = vrot.lane.b32.xlu0 %v821, 96
    %v845 = vpop.permute.xlu0 %844
    %854 = vst.msk [vmem:[#allocation4] sm:$0xff] %vm143, %v831
    %855 = vst.msk [vmem:[#allocation4 + $0x8] sm:$0xff] %vm143, %v833
    %856 = vst.msk [vmem:[#allocation4 + $0x10] sm:$0xff] %vm143, %v835
    %857 = vst.msk [vmem:[#allocation4 + $0x18] sm:$0xff] %vm143, %v837
    %858 = vst.msk [vmem:[#allocation4 + $0x20] sm:$0xff] %vm143, %v839
    %859 = vst.msk [vmem:[#allocation4 + $0x28] sm:$0xff] %vm143, %v841
    %860 = vst.msk [vmem:[#allocation4 + $0x30] sm:$0xff] %vm143, %v843
    %861 = vst.msk [vmem:[#allocation4 + $0x38] sm:$0xff] %vm143, %v845
    %v862 = vld [vmem:[#allocation5] sm:$0xff]
    %v863 = vld [vmem:[#allocation5 + $0x8] sm:$0xff]
    %v864 = vld [vmem:[#allocation5 + $0x10] sm:$0xff]
    %v865 = vld [vmem:[#allocation5 + $0x18] sm:$0xff]
    %v866 = vld [vmem:[#allocation5 + $0x20] sm:$0xff]
    %v867 = vld [vmem:[#allocation5 + $0x28] sm:$0xff]
    %v868 = vld [vmem:[#allocation5 + $0x30] sm:$0xff]
    %v869 = vld [vmem:[#allocation5 + $0x38] sm:$0xff]
    %v870 = vpack.c.bf16 %v863, %v862
    %v871 = vpack.c.bf16 %v865, %v864
    %v872 = vpack.c.bf16 %v867, %v866
    %v873 = vpack.c.bf16 %v869, %v868
    %v878 = vunpack.c.l.b16 %v438
    %v879 = vunpack.c.l.b16 %v439
    %v880 = vunpack.c.l.b16 %v440
    %v881 = vunpack.c.l.b16 %v441
    %v882 = vpack.c.b16 %v879, %v878
    %v883 = vpack.c.b16 %v881, %v880
    %v887 = vsel %vm143, %v870, 0
    %v890 = vsel %vm143, %v871, 0
    %v893 = vsel %vm143, %v872, 0
    %v896 = vsel %vm143, %v873, 0
    %898 = vmatprep.subr.bf16.mxu0 0
    %899 = vmatpush1.bf16.msra.mxu0 %v882
    %900 = vmatprep.subr.bf16.mxu0 0
    %901 = vmatpush1.bf16.msra.mxu0 %v883
    %902 = vmatprep.subr.bf16.mxu0 0
    %903 = vmatpush1.bf16.msra.mxu0 0
    %904 = vmatprep.subr.bf16.mxu0 0
    %905 = vmatpush1.bf16.msra.mxu0 0
    %906 = vmatprep.subr.bf16.mxu0 0
    %907 = vmatpush1.bf16.msra.mxu0 0
    %908 = vmatprep.subr.bf16.mxu0 0
    %909 = vmatpush1.bf16.msra.mxu0 0
    %910 = vmatprep.subr.bf16.mxu0 0
    %911 = vmatpush1.bf16.msra.mxu0 0
    %912 = vmatprep.subr.bf16.mxu0 0
    %913 = vmatpush1.bf16.msra.mxu0 0
    %914 = vmatprep.subr.bf16.mxu0 0
    %915 = vmatpush1.bf16.msra.mxu0 0
    %916 = vmatprep.subr.bf16.mxu0 0
    %917 = vmatpush1.bf16.msra.mxu0 0
    %918 = vmatprep.subr.bf16.mxu0 0
    %919 = vmatpush1.bf16.msra.mxu0 0
    %920 = vmatprep.subr.bf16.mxu0 0
    %921 = vmatpush1.bf16.msra.mxu0 0
    %922 = vmatprep.subr.bf16.mxu0 0
    %923 = vmatpush1.bf16.msra.mxu0 0
    %924 = vmatprep.subr.bf16.mxu0 0
    %925 = vmatpush1.bf16.msra.mxu0 0
    %926 = vmatprep.subr.bf16.mxu0 0
    %927 = vmatpush1.bf16.msra.mxu0 0
    %928 = vmatprep.subr.bf16.mxu0 0
    %929 = vmatpush1.bf16.msra.mxu0 0
    %930 = vmatprep.mubr.bf16.mxu0 0
    %931 = vmatmul.mubr.bf16.gmra.mrb[0].mxu0 %v887
    %v932 = vpop.f32.mrb[0].mxu0
    %v933 = vadd.f32 0.0, %v932
    %v934 = vpop.f32.mrb[0].mxu0
    %v935 = vpop.f32.mrb[0].mxu0
    %v936 = vadd.f32 0.0, %v935
    %v937 = vpop.f32.mrb[0].mxu0
    %938 = vmatprep.mubr.bf16.mxu0 0
    %939 = vmatmul.mubr.bf16.gmra.mrb[0].mxu0 %v890
    %v940 = vpop.f32.mrb[0].mxu0
    %v941 = vadd.f32 0.0, %v940
    %v942 = vpop.f32.mrb[0].mxu0
    %v943 = vpop.f32.mrb[0].mxu0
    %v944 = vadd.f32 0.0, %v943
    %v945 = vpop.f32.mrb[0].mxu0
    %946 = vmatprep.mubr.bf16.mxu0 0
    %947 = vmatmul.mubr.bf16.gmra.mrb[0].mxu0 %v893
    %v948 = vpop.f32.mrb[0].mxu0
    %v949 = vadd.f32 0.0, %v948
    %v950 = vpop.f32.mrb[0].mxu0
    %v951 = vpop.f32.mrb[0].mxu0
    %v952 = vadd.f32 0.0, %v951
    %v953 = vpop.f32.mrb[0].mxu0
    %954 = vmatprep.mubr.bf16.mxu0 0
    %955 = vmatmul.mubr.bf16.gmra.mrb[0].mxu0 %v896
    %v956 = vpop.f32.mrb[0].mxu0
    %v957 = vadd.f32 0.0, %v956
    %v958 = vpop.f32.mrb[0].mxu0
    %v959 = vpop.f32.mrb[0].mxu0
    %v960 = vadd.f32 0.0, %v959
    %v961 = vpop.f32.mrb[0].mxu0
    %962 = vdwg.mxu0
    %v963 = vadd.f32 %v462, %v933
    %v964 = vadd.f32 %v463, %v936
    %v965 = vadd.f32 %v464, %v941
    %v966 = vadd.f32 %v465, %v944
    %v967 = vadd.f32 %v466, %v949
    %v968 = vadd.f32 %v467, %v952
    %v969 = vadd.f32 %v468, %v957
    %v970 = vadd.f32 %v469, %v960
    %v971 = vxor.u32 %v963, 2147483648
    %v972 = vxor.u32 %v964, 2147483648
    %v973 = vxor.u32 %v965, 2147483648
    %v974 = vxor.u32 %v966, 2147483648
    %v975 = vxor.u32 %v967, 2147483648
    %v976 = vxor.u32 %v968, 2147483648
    %v977 = vxor.u32 %v969, 2147483648
    %v978 = vxor.u32 %v970, 2147483648
    %v979 = vmul.f32 %v971, 1.442695
    %v980 = vpow.pop %v979
    %v981 = vmul.f32 %v972, 1.442695
    %v982 = vpow.pop %v981
    %v983 = vmul.f32 %v973, 1.442695
    %v984 = vpow.pop %v983
    %v985 = vmul.f32 %v974, 1.442695
    %v986 = vpow.pop %v985
    %v987 = vmul.f32 %v975, 1.442695
    %v988 = vpow.pop %v987
    %v989 = vmul.f32 %v976, 1.442695
    %v990 = vpow.pop %v989
    %v991 = vmul.f32 %v977, 1.442695
    %v992 = vpow.pop %v991
    %v993 = vmul.f32 %v978, 1.442695
    %v994 = vpow.pop %v993
    %v995 = vadd.f32 %v980, 1.0
    %v996 = vadd.f32 %v982, 1.0
    %v997 = vadd.f32 %v984, 1.0
    %v998 = vadd.f32 %v986, 1.0
    %v999 = vadd.f32 %v988, 1.0
    %v1000 = vadd.f32 %v990, 1.0
    %v1001 = vadd.f32 %v992, 1.0
    %v1002 = vadd.f32 %v994, 1.0
    %v1003 = vrcp.pop %v995
    %v1004 = vmul.f32 1.0, %v1003
    %v1005 = vrcp.pop %v996
    %v1006 = vmul.f32 1.0, %v1005
    %v1007 = vrcp.pop %v997
    %v1008 = vmul.f32 1.0, %v1007
    %v1009 = vrcp.pop %v998
    %v1010 = vmul.f32 1.0, %v1009
    %v1011 = vrcp.pop %v999
    %v1012 = vmul.f32 1.0, %v1011
    %v1013 = vrcp.pop %v1000
    %v1014 = vmul.f32 1.0, %v1013
    %v1015 = vrcp.pop %v1001
    %v1016 = vmul.f32 1.0, %v1015
    %v1017 = vrcp.pop %v1002
    %v1018 = vmul.f32 1.0, %v1017
    %1019 = vrot.lane.b32.xlu0 %v453, 64
    %v1020 = vpop.permute.xlu0 %1019
    %v1022 = vadd.f32 %v933, %v1020
    %v1023 = vadd.f32 %v936, %v1020
    %v1024 = vadd.f32 %v941, %v1020
    %v1025 = vadd.f32 %v944, %v1020
    %v1026 = vadd.f32 %v949, %v1020
    %v1027 = vadd.f32 %v952, %v1020
    %v1028 = vadd.f32 %v957, %v1020
    %v1029 = vadd.f32 %v960, %v1020
    %1038 = vrot.lane.b32.xlu0 %v1022, 64
    %v1039 = vpop.permute.xlu0 %1038
    %1040 = vrot.lane.b32.xlu0 %v1023, 64
    %v1041 = vpop.permute.xlu0 %1040
    %1042 = vrot.lane.b32.xlu0 %v1024, 64
    %v1043 = vpop.permute.xlu0 %1042
    %1044 = vrot.lane.b32.xlu0 %v1025, 64
    %v1045 = vpop.permute.xlu0 %1044
    %1046 = vrot.lane.b32.xlu0 %v1026, 64
    %v1047 = vpop.permute.xlu0 %1046
    %1048 = vrot.lane.b32.xlu0 %v1027, 64
    %v1049 = vpop.permute.xlu0 %1048
    %1050 = vrot.lane.b32.xlu0 %v1028, 64
    %v1051 = vpop.permute.xlu0 %1050
    %1052 = vrot.lane.b32.xlu0 %v1029, 64
    %v1053 = vpop.permute.xlu0 %1052
    %v1062 = vmul.f32 %v1004, %v1039
    %v1063 = vmul.f32 %v1006, %v1041
    %v1064 = vmul.f32 %v1008, %v1043
    %v1065 = vmul.f32 %v1010, %v1045
    %v1066 = vmul.f32 %v1012, %v1047
    %v1067 = vmul.f32 %v1014, %v1049
    %v1068 = vmul.f32 %v1016, %v1051
    %v1069 = vmul.f32 %v1018, %v1053
    %1078 = vrot.lane.b32.xlu0 %v1062, 64
    %v1079 = vpop.permute.xlu0 %1078
    %1080 = vrot.lane.b32.xlu0 %v1063, 64
    %v1081 = vpop.permute.xlu0 %1080
    %1082 = vrot.lane.b32.xlu0 %v1064, 64
    %v1083 = vpop.permute.xlu0 %1082
    %1084 = vrot.lane.b32.xlu0 %v1065, 64
    %v1085 = vpop.permute.xlu0 %1084
    %1086 = vrot.lane.b32.xlu0 %v1066, 64
    %v1087 = vpop.permute.xlu0 %1086
    %1088 = vrot.lane.b32.xlu0 %v1067, 64
    %v1089 = vpop.permute.xlu0 %1088
    %1090 = vrot.lane.b32.xlu0 %v1068, 64
    %v1091 = vpop.permute.xlu0 %1090
    %1092 = vrot.lane.b32.xlu0 %v1069, 64
    %v1093 = vpop.permute.xlu0 %1092
    %v1102 = vadd.f32 %v462, %v1079
    %v1103 = vadd.f32 %v463, %v1081
    %v1104 = vadd.f32 %v464, %v1083
    %v1105 = vadd.f32 %v465, %v1085
    %v1106 = vadd.f32 %v466, %v1087
    %v1107 = vadd.f32 %v467, %v1089
    %v1108 = vadd.f32 %v468, %v1091
    %v1109 = vadd.f32 %v469, %v1093
    %v1110 = vtanh.pop %v1102
    %v1111 = vtanh.pop %v1103
    %v1112 = vtanh.pop %v1104
    %v1113 = vtanh.pop %v1105
    %v1114 = vtanh.pop %v1106
    %v1115 = vtanh.pop %v1107
    %v1116 = vtanh.pop %v1108
    %v1117 = vtanh.pop %v1109
    %v1118 = vsub.f32 1.0, %v1004
    %v1119 = vsub.f32 1.0, %v1006
    %v1120 = vsub.f32 1.0, %v1008
    %v1121 = vsub.f32 1.0, %v1010
    %v1122 = vsub.f32 1.0, %v1012
    %v1123 = vsub.f32 1.0, %v1014
    %v1124 = vsub.f32 1.0, %v1016
    %v1125 = vsub.f32 1.0, %v1018
    %1134 = vrot.lane.b32.xlu0 %v1110, 96
    %v1135 = vpop.permute.xlu0 %1134
    %1136 = vrot.lane.b32.xlu0 %v1111, 96
    %v1137 = vpop.permute.xlu0 %1136
    %1138 = vrot.lane.b32.xlu0 %v1112, 96
    %v1139 = vpop.permute.xlu0 %1138
    %1140 = vrot.lane.b32.xlu0 %v1113, 96
    %v1141 = vpop.permute.xlu0 %1140
    %1142 = vrot.lane.b32.xlu0 %v1114, 96
    %v1143 = vpop.permute.xlu0 %1142
    %1144 = vrot.lane.b32.xlu0 %v1115, 96
    %v1145 = vpop.permute.xlu0 %1144
    %1146 = vrot.lane.b32.xlu0 %v1116, 96
    %v1147 = vpop.permute.xlu0 %1146
    %1148 = vrot.lane.b32.xlu0 %v1117, 96
    %v1149 = vpop.permute.xlu0 %1148
    %v1158 = vmul.f32 %v1118, %v1135
    %v1159 = vmul.f32 %v1119, %v1137
    %v1160 = vmul.f32 %v1120, %v1139
    %v1161 = vmul.f32 %v1121, %v1141
    %v1162 = vmul.f32 %v1122, %v1143
    %v1163 = vmul.f32 %v1123, %v1145
    %v1164 = vmul.f32 %v1124, %v1147
    %v1165 = vmul.f32 %v1125, %v1149
    %1174 = vrot.lane.b32.xlu0 %v862, 32
    %v1175 = vpop.permute.xlu0 %1174
    %1176 = vrot.lane.b32.xlu0 %v863, 32
    %v1177 = vpop.permute.xlu0 %1176
    %1178 = vrot.lane.b32.xlu0 %v864, 32
    %v1179 = vpop.permute.xlu0 %1178
    %1180 = vrot.lane.b32.xlu0 %v865, 32
    %v1181 = vpop.permute.xlu0 %1180
    %1182 = vrot.lane.b32.xlu0 %v866, 32
    %v1183 = vpop.permute.xlu0 %1182
    %1184 = vrot.lane.b32.xlu0 %v867, 32
    %v1185 = vpop.permute.xlu0 %1184
    %1186 = vrot.lane.b32.xlu0 %v868, 32
    %v1187 = vpop.permute.xlu0 %1186
    %1188 = vrot.lane.b32.xlu0 %v869, 32
    %v1189 = vpop.permute.xlu0 %1188
    %v1198 = vmul.f32 %v1004, %v1175
    %v1199 = vmul.f32 %v1006, %v1177
    %v1200 = vmul.f32 %v1008, %v1179
    %v1201 = vmul.f32 %v1010, %v1181
    %v1202 = vmul.f32 %v1012, %v1183
    %v1203 = vmul.f32 %v1014, %v1185
    %v1204 = vmul.f32 %v1016, %v1187
    %v1205 = vmul.f32 %v1018, %v1189
    %v1206 = vadd.f32 %v1158, %v1198
    %v1207 = vadd.f32 %v1159, %v1199
    %v1208 = vadd.f32 %v1160, %v1200
    %v1209 = vadd.f32 %v1161, %v1201
    %v1210 = vadd.f32 %v1162, %v1202
    %v1211 = vadd.f32 %v1163, %v1203
    %v1212 = vadd.f32 %v1164, %v1204
    %v1213 = vadd.f32 %v1165, %v1205
    %1222 = vrot.lane.b32.xlu0 %v1206, 96
    %v1223 = vpop.permute.xlu0 %1222
    %1224 = vrot.lane.b32.xlu0 %v1207, 96
    %v1225 = vpop.permute.xlu0 %1224
    %1226 = vrot.lane.b32.xlu0 %v1208, 96
    %v1227 = vpop.permute.xlu0 %1226
    %1228 = vrot.lane.b32.xlu0 %v1209, 96
    %v1229 = vpop.permute.xlu0 %1228
    %1230 = vrot.lane.b32.xlu0 %v1210, 96
    %v1231 = vpop.permute.xlu0 %1230
    %1232 = vrot.lane.b32.xlu0 %v1211, 96
    %v1233 = vpop.permute.xlu0 %1232
    %1234 = vrot.lane.b32.xlu0 %v1212, 96
    %v1235 = vpop.permute.xlu0 %1234
    %1236 = vrot.lane.b32.xlu0 %v1213, 96
    %v1237 = vpop.permute.xlu0 %1236
    %1246 = vst.msk [vmem:[#allocation5] sm:$0xff] %vm143, %v1223
    %1247 = vst.msk [vmem:[#allocation5 + $0x8] sm:$0xff] %vm143, %v1225
    %1248 = vst.msk [vmem:[#allocation5 + $0x10] sm:$0xff] %vm143, %v1227
    %1249 = vst.msk [vmem:[#allocation5 + $0x18] sm:$0xff] %vm143, %v1229
    %1250 = vst.msk [vmem:[#allocation5 + $0x20] sm:$0xff] %vm143, %v1231
    %1251 = vst.msk [vmem:[#allocation5 + $0x28] sm:$0xff] %vm143, %v1233
    %1252 = vst.msk [vmem:[#allocation5 + $0x30] sm:$0xff] %vm143, %v1235
    %1253 = vst.msk [vmem:[#allocation5 + $0x38] sm:$0xff] %vm143, %v1237
    %v1254 = vld [vmem:[#allocation2 + $0x1] sm:$0xff]
    %v1255 = vld [vmem:[#allocation2 + $0x11] sm:$0xff]
    %v1256 = vld [vmem:[#allocation2 + $0x21] sm:$0xff]
    %v1257 = vld [vmem:[#allocation2 + $0x31] sm:$0xff]
    %v1258 = vld [vmem:[#allocation2 + $0x41] sm:$0xff]
    %v1259 = vld [vmem:[#allocation2 + $0x51] sm:$0xff]
    %v1260 = vld [vmem:[#allocation2 + $0x61] sm:$0xff]
    %v1261 = vld [vmem:[#allocation2 + $0x71] sm:$0xff]
    %v1262 = vld [vmem:[#allocation3 + $0x3] sm:$0xff]
    %v1263 = vld [vmem:[#allocation3 + $0x13] sm:$0xff]
    %v1264 = vld [vmem:[#allocation3 + $0x23] sm:$0xff]
    %v1265 = vld [vmem:[#allocation3 + $0x33] sm:$0xff]
    %v1266 = vld [vmem:[#allocation3 + $0x43] sm:$0xff]
    %v1267 = vld [vmem:[#allocation3 + $0x53] sm:$0xff]
    %v1268 = vld [vmem:[#allocation3 + $0x63] sm:$0xff]
    %v1269 = vld [vmem:[#allocation3 + $0x73] sm:$0xff]
    %v1270 = vld [vmem:[#allocation4] sm:$0xff]
    %v1271 = vld [vmem:[#allocation4 + $0x8] sm:$0xff]
    %v1272 = vld [vmem:[#allocation4 + $0x10] sm:$0xff]
    %v1273 = vld [vmem:[#allocation4 + $0x18] sm:$0xff]
    %v1274 = vld [vmem:[#allocation4 + $0x20] sm:$0xff]
    %v1275 = vld [vmem:[#allocation4 + $0x28] sm:$0xff]
    %v1276 = vld [vmem:[#allocation4 + $0x30] sm:$0xff]
    %v1277 = vld [vmem:[#allocation4 + $0x38] sm:$0xff]
    %v1278 = vpack.c.bf16 %v1271, %v1270
    %v1279 = vpack.c.bf16 %v1273, %v1272
    %v1280 = vpack.c.bf16 %v1275, %v1274
    %v1281 = vpack.c.bf16 %v1277, %v1276
    %v1283 = vsel %vm143, %v1278, 0
    %v1286 = vsel %vm143, %v1279, 0
    %v1289 = vsel %vm143, %v1280, 0
    %v1292 = vsel %vm143, %v1281, 0
    %1294 = vmatprep.subr.bf16.mxu0 0
    %1295 = vmatpush1.bf16.msra.mxu0 %v490
    %1296 = vmatprep.subr.bf16.mxu0 0
    %1297 = vmatpush1.bf16.msra.mxu0 %v491
    %1298 = vmatprep.subr.bf16.mxu0 0
    %1299 = vmatpush1.bf16.msra.mxu0 0
    %1300 = vmatprep.subr.bf16.mxu0 0
    %1301 = vmatpush1.bf16.msra.mxu0 0
    %1302 = vmatprep.subr.bf16.mxu0 0
    %1303 = vmatpush1.bf16.msra.mxu0 0
    %1304 = vmatprep.subr.bf16.mxu0 0
    %1305 = vmatpush1.bf16.msra.mxu0 0
    %1306 = vmatprep.subr.bf16.mxu0 0
    %1307 = vmatpush1.bf16.msra.mxu0 0
    %1308 = vmatprep.subr.bf16.mxu0 0
    %1309 = vmatpush1.bf16.msra.mxu0 0
    %1310 = vmatprep.subr.bf16.mxu0 0
    %1311 = vmatpush1.bf16.msra.mxu0 0
    %1312 = vmatprep.subr.bf16.mxu0 0
    %1313 = vmatpush1.bf16.msra.mxu0 0
    %1314 = vmatprep.subr.bf16.mxu0 0
    %1315 = vmatpush1.bf16.msra.mxu0 0
    %1316 = vmatprep.subr.bf16.mxu0 0
    %1317 = vmatpush1.bf16.msra.mxu0 0
    %1318 = vmatprep.subr.bf16.mxu0 0
    %1319 = vmatpush1.bf16.msra.mxu0 0
    %1320 = vmatprep.subr.bf16.mxu0 0
    %1321 = vmatpush1.bf16.msra.mxu0 0
    %1322 = vmatprep.subr.bf16.mxu0 0
    %1323 = vmatpush1.bf16.msra.mxu0 0
    %1324 = vmatprep.subr.bf16.mxu0 0
    %1325 = vmatpush1.bf16.msra.mxu0 0
    %1326 = vmatprep.mubr.bf16.mxu0 0
    %1327 = vmatmul.mubr.bf16.gmra.mrb[0].mxu0 %v1283
    %v1328 = vpop.f32.mrb[0].mxu0
    %v1329 = vadd.f32 0.0, %v1328
    %v1330 = vpop.f32.mrb[0].mxu0
    %v1331 = vpop.f32.mrb[0].mxu0
    %v1332 = vadd.f32 0.0, %v1331
    %v1333 = vpop.f32.mrb[0].mxu0
    %1334 = vmatprep.mubr.bf16.mxu0 0
    %1335 = vmatmul.mubr.bf16.gmra.mrb[0].mxu0 %v1286
    %v1336 = vpop.f32.mrb[0].mxu0
    %v1337 = vadd.f32 0.0, %v1336
    %v1338 = vpop.f32.mrb[0].mxu0
    %v1339 = vpop.f32.mrb[0].mxu0
    %v1340 = vadd.f32 0.0, %v1339
    %v1341 = vpop.f32.mrb[0].mxu0
    %1342 = vmatprep.mubr.bf16.mxu0 0
    %1343 = vmatmul.mubr.bf16.gmra.mrb[0].mxu0 %v1289
    %v1344 = vpop.f32.mrb[0].mxu0
    %v1345 = vadd.f32 0.0, %v1344
    %v1346 = vpop.f32.mrb[0].mxu0
    %v1347 = vpop.f32.mrb[0].mxu0
    %v1348 = vadd.f32 0.0, %v1347
    %v1349 = vpop.f32.mrb[0].mxu0
    %1350 = vmatprep.mubr.bf16.mxu0 0
    %1351 = vmatmul.mubr.bf16.gmra.mrb[0].mxu0 %v1292
    %v1352 = vpop.f32.mrb[0].mxu0
    %v1353 = vadd.f32 0.0, %v1352
    %v1354 = vpop.f32.mrb[0].mxu0
    %v1355 = vpop.f32.mrb[0].mxu0
    %v1356 = vadd.f32 0.0, %v1355
    %v1357 = vpop.f32.mrb[0].mxu0
    %1358 = vdwg.mxu0
    %v1359 = vadd.f32 %v1254, %v1329
    %v1360 = vadd.f32 %v1255, %v1332
    %v1361 = vadd.f32 %v1256, %v1337
    %v1362 = vadd.f32 %v1257, %v1340
    %v1363 = vadd.f32 %v1258, %v1345
    %v1364 = vadd.f32 %v1259, %v1348
    %v1365 = vadd.f32 %v1260, %v1353
    %v1366 = vadd.f32 %v1261, %v1356
    %v1367 = vxor.u32 %v1359, 2147483648
    %v1368 = vxor.u32 %v1360, 2147483648
    %v1369 = vxor.u32 %v1361, 2147483648
    %v1370 = vxor.u32 %v1362, 2147483648
    %v1371 = vxor.u32 %v1363, 2147483648
    %v1372 = vxor.u32 %v1364, 2147483648
    %v1373 = vxor.u32 %v1365, 2147483648
    %v1374 = vxor.u32 %v1366, 2147483648
    %v1375 = vmul.f32 %v1367, 1.442695
    %v1376 = vpow.pop %v1375
    %v1377 = vmul.f32 %v1368, 1.442695
    %v1378 = vpow.pop %v1377
    %v1379 = vmul.f32 %v1369, 1.442695
    %v1380 = vpow.pop %v1379
    %v1381 = vmul.f32 %v1370, 1.442695
    %v1382 = vpow.pop %v1381
    %v1383 = vmul.f32 %v1371, 1.442695
    %v1384 = vpow.pop %v1383
    %v1385 = vmul.f32 %v1372, 1.442695
    %v1386 = vpow.pop %v1385
    %v1387 = vmul.f32 %v1373, 1.442695
    %v1388 = vpow.pop %v1387
    %v1389 = vmul.f32 %v1374, 1.442695
    %v1390 = vpow.pop %v1389
    %v1391 = vadd.f32 %v1376, 1.0
    %v1392 = vadd.f32 %v1378, 1.0
    %v1393 = vadd.f32 %v1380, 1.0
    %v1394 = vadd.f32 %v1382, 1.0
    %v1395 = vadd.f32 %v1384, 1.0
    %v1396 = vadd.f32 %v1386, 1.0
    %v1397 = vadd.f32 %v1388, 1.0
    %v1398 = vadd.f32 %v1390, 1.0
    %v1399 = vrcp.pop %v1391
    %v1400 = vmul.f32 1.0, %v1399
    %v1401 = vrcp.pop %v1392
    %v1402 = vmul.f32 1.0, %v1401
    %v1403 = vrcp.pop %v1393
    %v1404 = vmul.f32 1.0, %v1403
    %v1405 = vrcp.pop %v1394
    %v1406 = vmul.f32 1.0, %v1405
    %v1407 = vrcp.pop %v1395
    %v1408 = vmul.f32 1.0, %v1407
    %v1409 = vrcp.pop %v1396
    %v1410 = vmul.f32 1.0, %v1409
    %v1411 = vrcp.pop %v1397
    %v1412 = vmul.f32 1.0, %v1411
    %v1413 = vrcp.pop %v1398
    %v1414 = vmul.f32 1.0, %v1413
    %v1415 = vadd.f32 %v1329, %v628
    %v1416 = vadd.f32 %v1332, %v628
    %v1417 = vadd.f32 %v1337, %v628
    %v1418 = vadd.f32 %v1340, %v628
    %v1419 = vadd.f32 %v1345, %v628
    %v1420 = vadd.f32 %v1348, %v628
    %v1421 = vadd.f32 %v1353, %v628
    %v1422 = vadd.f32 %v1356, %v628
    %1431 = vrot.lane.b32.xlu0 %v1415, 64
    %v1432 = vpop.permute.xlu0 %1431
    %1433 = vrot.lane.b32.xlu0 %v1416, 64
    %v1434 = vpop.permute.xlu0 %1433
    %1435 = vrot.lane.b32.xlu0 %v1417, 64
    %v1436 = vpop.permute.xlu0 %1435
    %1437 = vrot.lane.b32.xlu0 %v1418, 64
    %v1438 = vpop.permute.xlu0 %1437
    %1439 = vrot.lane.b32.xlu0 %v1419, 64
    %v1440 = vpop.permute.xlu0 %1439
    %1441 = vrot.lane.b32.xlu0 %v1420, 64
    %v1442 = vpop.permute.xlu0 %1441
    %1443 = vrot.lane.b32.xlu0 %v1421, 64
    %v1444 = vpop.permute.xlu0 %1443
    %1445 = vrot.lane.b32.xlu0 %v1422, 64
    %v1446 = vpop.permute.xlu0 %1445
    %v1455 = vmul.f32 %v1400, %v1432
    %v1456 = vmul.f32 %v1402, %v1434
    %v1457 = vmul.f32 %v1404, %v1436
    %v1458 = vmul.f32 %v1406, %v1438
    %v1459 = vmul.f32 %v1408, %v1440
    %v1460 = vmul.f32 %v1410, %v1442
    %v1461 = vmul.f32 %v1412, %v1444
    %v1462 = vmul.f32 %v1414, %v1446
    %1471 = vrot.lane.b32.xlu0 %v1455, 64
    %v1472 = vpop.permute.xlu0 %1471
    %1473 = vrot.lane.b32.xlu0 %v1456, 64
    %v1474 = vpop.permute.xlu0 %1473
    %1475 = vrot.lane.b32.xlu0 %v1457, 64
    %v1476 = vpop.permute.xlu0 %1475
    %1477 = vrot.lane.b32.xlu0 %v1458, 64
    %v1478 = vpop.permute.xlu0 %1477
    %1479 = vrot.lane.b32.xlu0 %v1459, 64
    %v1480 = vpop.permute.xlu0 %1479
    %1481 = vrot.lane.b32.xlu0 %v1460, 64
    %v1482 = vpop.permute.xlu0 %1481
    %1483 = vrot.lane.b32.xlu0 %v1461, 64
    %v1484 = vpop.permute.xlu0 %1483
    %1485 = vrot.lane.b32.xlu0 %v1462, 64
    %v1486 = vpop.permute.xlu0 %1485
    %v1495 = vadd.f32 %v1254, %v1472
    %v1496 = vadd.f32 %v1255, %v1474
    %v1497 = vadd.f32 %v1256, %v1476
    %v1498 = vadd.f32 %v1257, %v1478
    %v1499 = vadd.f32 %v1258, %v1480
    %v1500 = vadd.f32 %v1259, %v1482
    %v1501 = vadd.f32 %v1260, %v1484
    %v1502 = vadd.f32 %v1261, %v1486
    %v1503 = vtanh.pop %v1495
    %v1504 = vtanh.pop %v1496
    %v1505 = vtanh.pop %v1497
    %v1506 = vtanh.pop %v1498
    %v1507 = vtanh.pop %v1499
    %v1508 = vtanh.pop %v1500
    %v1509 = vtanh.pop %v1501
    %v1510 = vtanh.pop %v1502
    %v1511 = vsub.f32 1.0, %v1400
    %v1512 = vsub.f32 1.0, %v1402
    %v1513 = vsub.f32 1.0, %v1404
    %v1514 = vsub.f32 1.0, %v1406
    %v1515 = vsub.f32 1.0, %v1408
    %v1516 = vsub.f32 1.0, %v1410
    %v1517 = vsub.f32 1.0, %v1412
    %v1518 = vsub.f32 1.0, %v1414
    %1527 = vrot.lane.b32.xlu0 %v1503, 96
    %v1528 = vpop.permute.xlu0 %1527
    %1529 = vrot.lane.b32.xlu0 %v1504, 96
    %v1530 = vpop.permute.xlu0 %1529
    %1531 = vrot.lane.b32.xlu0 %v1505, 96
    %v1532 = vpop.permute.xlu0 %1531
    %1533 = vrot.lane.b32.xlu0 %v1506, 96
    %v1534 = vpop.permute.xlu0 %1533
    %1535 = vrot.lane.b32.xlu0 %v1507, 96
    %v1536 = vpop.permute.xlu0 %1535
    %1537 = vrot.lane.b32.xlu0 %v1508, 96
    %v1538 = vpop.permute.xlu0 %1537
    %1539 = vrot.lane.b32.xlu0 %v1509, 96
    %v1540 = vpop.permute.xlu0 %1539
    %1541 = vrot.lane.b32.xlu0 %v1510, 96
    %v1542 = vpop.permute.xlu0 %1541
    %v1551 = vmul.f32 %v1511, %v1528
    %v1552 = vmul.f32 %v1512, %v1530
    %v1553 = vmul.f32 %v1513, %v1532
    %v1554 = vmul.f32 %v1514, %v1534
    %v1555 = vmul.f32 %v1515, %v1536
    %v1556 = vmul.f32 %v1516, %v1538
    %v1557 = vmul.f32 %v1517, %v1540
    %v1558 = vmul.f32 %v1518, %v1542
    %1567 = vrot.lane.b32.xlu0 %v1270, 32
    %v1568 = vpop.permute.xlu0 %1567
    %1569 = vrot.lane.b32.xlu0 %v1271, 32
    %v1570 = vpop.permute.xlu0 %1569
    %1571 = vrot.lane.b32.xlu0 %v1272, 32
    %v1572 = vpop.permute.xlu0 %1571
    %1573 = vrot.lane.b32.xlu0 %v1273, 32
    %v1574 = vpop.permute.xlu0 %1573
    %1575 = vrot.lane.b32.xlu0 %v1274, 32
    %v1576 = vpop.permute.xlu0 %1575
    %1577 = vrot.lane.b32.xlu0 %v1275, 32
    %v1578 = vpop.permute.xlu0 %1577
    %1579 = vrot.lane.b32.xlu0 %v1276, 32
    %v1580 = vpop.permute.xlu0 %1579
    %1581 = vrot.lane.b32.xlu0 %v1277, 32
    %v1582 = vpop.permute.xlu0 %1581
    %v1591 = vmul.f32 %v1400, %v1568
    %v1592 = vmul.f32 %v1402, %v1570
    %v1593 = vmul.f32 %v1404, %v1572
    %v1594 = vmul.f32 %v1406, %v1574
    %v1595 = vmul.f32 %v1408, %v1576
    %v1596 = vmul.f32 %v1410, %v1578
    %v1597 = vmul.f32 %v1412, %v1580
    %v1598 = vmul.f32 %v1414, %v1582
    %v1599 = vadd.f32 %v1551, %v1591
    %v1600 = vadd.f32 %v1552, %v1592
    %v1601 = vadd.f32 %v1553, %v1593
    %v1602 = vadd.f32 %v1554, %v1594
    %v1603 = vadd.f32 %v1555, %v1595
    %v1604 = vadd.f32 %v1556, %v1596
    %v1605 = vadd.f32 %v1557, %v1597
    %v1606 = vadd.f32 %v1558, %v1598
    %1615 = vrot.lane.b32.xlu0 %v1599, 96
    %v1616 = vpop.permute.xlu0 %1615
    %1617 = vrot.lane.b32.xlu0 %v1600, 96
    %v1618 = vpop.permute.xlu0 %1617
    %1619 = vrot.lane.b32.xlu0 %v1601, 96
    %v1620 = vpop.permute.xlu0 %1619
    %1621 = vrot.lane.b32.xlu0 %v1602, 96
    %v1622 = vpop.permute.xlu0 %1621
    %1623 = vrot.lane.b32.xlu0 %v1603, 96
    %v1624 = vpop.permute.xlu0 %1623
    %1625 = vrot.lane.b32.xlu0 %v1604, 96
    %v1626 = vpop.permute.xlu0 %1625
    %1627 = vrot.lane.b32.xlu0 %v1605, 96
    %v1628 = vpop.permute.xlu0 %1627
    %1629 = vrot.lane.b32.xlu0 %v1606, 96
    %v1630 = vpop.permute.xlu0 %1629
    %1639 = vst.msk [vmem:[#allocation4] sm:$0xff] %vm143, %v1616
    %1640 = vst.msk [vmem:[#allocation4 + $0x8] sm:$0xff] %vm143, %v1618
    %1641 = vst.msk [vmem:[#allocation4 + $0x10] sm:$0xff] %vm143, %v1620
    %1642 = vst.msk [vmem:[#allocation4 + $0x18] sm:$0xff] %vm143, %v1622
    %1643 = vst.msk [vmem:[#allocation4 + $0x20] sm:$0xff] %vm143, %v1624
    %1644 = vst.msk [vmem:[#allocation4 + $0x28] sm:$0xff] %vm143, %v1626
    %1645 = vst.msk [vmem:[#allocation4 + $0x30] sm:$0xff] %vm143, %v1628
    %1646 = vst.msk [vmem:[#allocation4 + $0x38] sm:$0xff] %vm143, %v1630
    %v1647 = vld [vmem:[#allocation5] sm:$0xff]
    %v1648 = vld [vmem:[#allocation5 + $0x8] sm:$0xff]
    %v1649 = vld [vmem:[#allocation5 + $0x10] sm:$0xff]
    %v1650 = vld [vmem:[#allocation5 + $0x18] sm:$0xff]
    %v1651 = vld [vmem:[#allocation5 + $0x20] sm:$0xff]
    %v1652 = vld [vmem:[#allocation5 + $0x28] sm:$0xff]
    %v1653 = vld [vmem:[#allocation5 + $0x30] sm:$0xff]
    %v1654 = vld [vmem:[#allocation5 + $0x38] sm:$0xff]
    %v1655 = vpack.c.bf16 %v1648, %v1647
    %v1656 = vpack.c.bf16 %v1650, %v1649
    %v1657 = vpack.c.bf16 %v1652, %v1651
    %v1658 = vpack.c.bf16 %v1654, %v1653
    %v1660 = vsel %vm143, %v1655, 0
    %v1663 = vsel %vm143, %v1656, 0
    %v1666 = vsel %vm143, %v1657, 0
    %v1669 = vsel %vm143, %v1658, 0
    %1671 = vmatprep.subr.bf16.mxu0 0
    %1672 = vmatpush1.bf16.msra.mxu0 %v882
    %1673 = vmatprep.subr.bf16.mxu0 0
    %1674 = vmatpush1.bf16.msra.mxu0 %v883
    %1675 = vmatprep.subr.bf16.mxu0 0
    %1676 = vmatpush1.bf16.msra.mxu0 0
    %1677 = vmatprep.subr.bf16.mxu0 0
    %1678 = vmatpush1.bf16.msra.mxu0 0
    %1679 = vmatprep.subr.bf16.mxu0 0
    %1680 = vmatpush1.bf16.msra.mxu0 0
    %1681 = vmatprep.subr.bf16.mxu0 0
    %1682 = vmatpush1.bf16.msra.mxu0 0
    %1683 = vmatprep.subr.bf16.mxu0 0
    %1684 = vmatpush1.bf16.msra.mxu0 0
    %1685 = vmatprep.subr.bf16.mxu0 0
    %1686 = vmatpush1.bf16.msra.mxu0 0
    %1687 = vmatprep.subr.bf16.mxu0 0
    %1688 = vmatpush1.bf16.msra.mxu0 0
    %1689 = vmatprep.subr.bf16.mxu0 0
    %1690 = vmatpush1.bf16.msra.mxu0 0
    %1691 = vmatprep.subr.bf16.mxu0 0
    %1692 = vmatpush1.bf16.msra.mxu0 0
    %1693 = vmatprep.subr.bf16.mxu0 0
    %1694 = vmatpush1.bf16.msra.mxu0 0
    %1695 = vmatprep.subr.bf16.mxu0 0
    %1696 = vmatpush1.bf16.msra.mxu0 0
    %1697 = vmatprep.subr.bf16.mxu0 0
    %1698 = vmatpush1.bf16.msra.mxu0 0
    %1699 = vmatprep.subr.bf16.mxu0 0
    %1700 = vmatpush1.bf16.msra.mxu0 0
    %1701 = vmatprep.subr.bf16.mxu0 0
    %1702 = vmatpush1.bf16.msra.mxu0 0
    %1703 = vmatprep.mubr.bf16.mxu0 0
    %1704 = vmatmul.mubr.bf16.gmra.mrb[0].mxu0 %v1660
    %v1705 = vpop.f32.mrb[0].mxu0
    %v1706 = vadd.f32 0.0, %v1705
    %v1707 = vpop.f32.mrb[0].mxu0
    %v1708 = vpop.f32.mrb[0].mxu0
    %v1709 = vadd.f32 0.0, %v1708
    %v1710 = vpop.f32.mrb[0].mxu0
    %1711 = vmatprep.mubr.bf16.mxu0 0
    %1712 = vmatmul.mubr.bf16.gmra.mrb[0].mxu0 %v1663
    %v1713 = vpop.f32.mrb[0].mxu0
    %v1714 = vadd.f32 0.0, %v1713
    %v1715 = vpop.f32.mrb[0].mxu0
    %v1716 = vpop.f32.mrb[0].mxu0
    %v1717 = vadd.f32 0.0, %v1716
    %v1718 = vpop.f32.mrb[0].mxu0
    %1719 = vmatprep.mubr.bf16.mxu0 0
    %1720 = vmatmul.mubr.bf16.gmra.mrb[0].mxu0 %v1666
    %v1721 = vpop.f32.mrb[0].mxu0
    %v1722 = vadd.f32 0.0, %v1721
    %v1723 = vpop.f32.mrb[0].mxu0
    %v1724 = vpop.f32.mrb[0].mxu0
    %v1725 = vadd.f32 0.0, %v1724
    %v1726 = vpop.f32.mrb[0].mxu0
    %1727 = vmatprep.mubr.bf16.mxu0 0
    %1728 = vmatmul.mubr.bf16.gmra.mrb[0].mxu0 %v1669
    %v1729 = vpop.f32.mrb[0].mxu0
    %v1730 = vadd.f32 0.0, %v1729
    %v1731 = vpop.f32.mrb[0].mxu0
    %v1732 = vpop.f32.mrb[0].mxu0
    %v1733 = vadd.f32 0.0, %v1732
    %v1734 = vpop.f32.mrb[0].mxu0
    %1735 = vdwg.mxu0
    %v1736 = vadd.f32 %v1262, %v1706
    %v1737 = vadd.f32 %v1263, %v1709
    %v1738 = vadd.f32 %v1264, %v1714
    %v1739 = vadd.f32 %v1265, %v1717
    %v1740 = vadd.f32 %v1266, %v1722
    %v1741 = vadd.f32 %v1267, %v1725
    %v1742 = vadd.f32 %v1268, %v1730
    %v1743 = vadd.f32 %v1269, %v1733
    %v1744 = vxor.u32 %v1736, 2147483648
    %v1745 = vxor.u32 %v1737, 2147483648
    %v1746 = vxor.u32 %v1738, 2147483648
    %v1747 = vxor.u32 %v1739, 2147483648
    %v1748 = vxor.u32 %v1740, 2147483648
    %v1749 = vxor.u32 %v1741, 2147483648
    %v1750 = vxor.u32 %v1742, 2147483648
    %v1751 = vxor.u32 %v1743, 2147483648
    %v1752 = vmul.f32 %v1744, 1.442695
    %v1753 = vpow.pop %v1752
    %v1754 = vmul.f32 %v1745, 1.442695
    %v1755 = vpow.pop %v1754
    %v1756 = vmul.f32 %v1746, 1.442695
    %v1757 = vpow.pop %v1756
    %v1758 = vmul.f32 %v1747, 1.442695
    %v1759 = vpow.pop %v1758
    %v1760 = vmul.f32 %v1748, 1.442695
    %v1761 = vpow.pop %v1760
    %v1762 = vmul.f32 %v1749, 1.442695
    %v1763 = vpow.pop %v1762
    %v1764 = vmul.f32 %v1750, 1.442695
    %v1765 = vpow.pop %v1764
    %v1766 = vmul.f32 %v1751, 1.442695
    %v1767 = vpow.pop %v1766
    %v1768 = vadd.f32 %v1753, 1.0
    %v1769 = vadd.f32 %v1755, 1.0
    %v1770 = vadd.f32 %v1757, 1.0
    %v1771 = vadd.f32 %v1759, 1.0
    %v1772 = vadd.f32 %v1761, 1.0
    %v1773 = vadd.f32 %v1763, 1.0
    %v1774 = vadd.f32 %v1765, 1.0
    %v1775 = vadd.f32 %v1767, 1.0
    %v1776 = vrcp.pop %v1768
    %v1777 = vmul.f32 1.0, %v1776
    %v1778 = vrcp.pop %v1769
    %v1779 = vmul.f32 1.0, %v1778
    %v1780 = vrcp.pop %v1770
    %v1781 = vmul.f32 1.0, %v1780
    %v1782 = vrcp.pop %v1771
    %v1783 = vmul.f32 1.0, %v1782
    %v1784 = vrcp.pop %v1772
    %v1785 = vmul.f32 1.0, %v1784
    %v1786 = vrcp.pop %v1773
    %v1787 = vmul.f32 1.0, %v1786
    %v1788 = vrcp.pop %v1774
    %v1789 = vmul.f32 1.0, %v1788
    %v1790 = vrcp.pop %v1775
    %v1791 = vmul.f32 1.0, %v1790
    %v1792 = vadd.f32 %v1706, %v1020
    %v1793 = vadd.f32 %v1709, %v1020
    %v1794 = vadd.f32 %v1714, %v1020
    %v1795 = vadd.f32 %v1717, %v1020
    %v1796 = vadd.f32 %v1722, %v1020
    %v1797 = vadd.f32 %v1725, %v1020
    %v1798 = vadd.f32 %v1730, %v1020
    %v1799 = vadd.f32 %v1733, %v1020
    %1808 = vrot.lane.b32.xlu0 %v1792, 64
    %v1809 = vpop.permute.xlu0 %1808
    %1810 = vrot.lane.b32.xlu0 %v1793, 64
    %v1811 = vpop.permute.xlu0 %1810
    %1812 = vrot.lane.b32.xlu0 %v1794, 64
    %v1813 = vpop.permute.xlu0 %1812
    %1814 = vrot.lane.b32.xlu0 %v1795, 64
    %v1815 = vpop.permute.xlu0 %1814
    %1816 = vrot.lane.b32.xlu0 %v1796, 64
    %v1817 = vpop.permute.xlu0 %1816
    %1818 = vrot.lane.b32.xlu0 %v1797, 64
    %v1819 = vpop.permute.xlu0 %1818
    %1820 = vrot.lane.b32.xlu0 %v1798, 64
    %v1821 = vpop.permute.xlu0 %1820
    %1822 = vrot.lane.b32.xlu0 %v1799, 64
    %v1823 = vpop.permute.xlu0 %1822
    %v1832 = vmul.f32 %v1777, %v1809
    %v1833 = vmul.f32 %v1779, %v1811
    %v1834 = vmul.f32 %v1781, %v1813
    %v1835 = vmul.f32 %v1783, %v1815
    %v1836 = vmul.f32 %v1785, %v1817
    %v1837 = vmul.f32 %v1787, %v1819
    %v1838 = vmul.f32 %v1789, %v1821
    %v1839 = vmul.f32 %v1791, %v1823
    %1848 = vrot.lane.b32.xlu0 %v1832, 64
    %v1849 = vpop.permute.xlu0 %1848
    %1850 = vrot.lane.b32.xlu0 %v1833, 64
    %v1851 = vpop.permute.xlu0 %1850
    %1852 = vrot.lane.b32.xlu0 %v1834, 64
    %v1853 = vpop.permute.xlu0 %1852
    %1854 = vrot.lane.b32.xlu0 %v1835, 64
    %v1855 = vpop.permute.xlu0 %1854
    %1856 = vrot.lane.b32.xlu0 %v1836, 64
    %v1857 = vpop.permute.xlu0 %1856
    %1858 = vrot.lane.b32.xlu0 %v1837, 64
    %v1859 = vpop.permute.xlu0 %1858
    %1860 = vrot.lane.b32.xlu0 %v1838, 64
    %v1861 = vpop.permute.xlu0 %1860
    %1862 = vrot.lane.b32.xlu0 %v1839, 64
    %v1863 = vpop.permute.xlu0 %1862
    %v1872 = vadd.f32 %v1262, %v1849
    %v1873 = vadd.f32 %v1263, %v1851
    %v1874 = vadd.f32 %v1264, %v1853
    %v1875 = vadd.f32 %v1265, %v1855
    %v1876 = vadd.f32 %v1266, %v1857
    %v1877 = vadd.f32 %v1267, %v1859
    %v1878 = vadd.f32 %v1268, %v1861
    %v1879 = vadd.f32 %v1269, %v1863
    %v1880 = vtanh.pop %v1872
    %v1881 = vtanh.pop %v1873
    %v1882 = vtanh.pop %v1874
    %v1883 = vtanh.pop %v1875
    %v1884 = vtanh.pop %v1876
    %v1885 = vtanh.pop %v1877
    %v1886 = vtanh.pop %v1878
    %v1887 = vtanh.pop %v1879
    %v1888 = vsub.f32 1.0, %v1777
    %v1889 = vsub.f32 1.0, %v1779
    %v1890 = vsub.f32 1.0, %v1781
    %v1891 = vsub.f32 1.0, %v1783
    %v1892 = vsub.f32 1.0, %v1785
    %v1893 = vsub.f32 1.0, %v1787
    %v1894 = vsub.f32 1.0, %v1789
    %v1895 = vsub.f32 1.0, %v1791
    %1904 = vrot.lane.b32.xlu0 %v1880, 96
    %v1905 = vpop.permute.xlu0 %1904
    %1906 = vrot.lane.b32.xlu0 %v1881, 96
    %v1907 = vpop.permute.xlu0 %1906
    %1908 = vrot.lane.b32.xlu0 %v1882, 96
    %v1909 = vpop.permute.xlu0 %1908
    %1910 = vrot.lane.b32.xlu0 %v1883, 96
    %v1911 = vpop.permute.xlu0 %1910
    %1912 = vrot.lane.b32.xlu0 %v1884, 96
    %v1913 = vpop.permute.xlu0 %1912
    %1914 = vrot.lane.b32.xlu0 %v1885, 96
    %v1915 = vpop.permute.xlu0 %1914
    %1916 = vrot.lane.b32.xlu0 %v1886, 96
    %v1917 = vpop.permute.xlu0 %1916
    %1918 = vrot.lane.b32.xlu0 %v1887, 96
    %v1919 = vpop.permute.xlu0 %1918
    %v1928 = vmul.f32 %v1888, %v1905
    %v1929 = vmul.f32 %v1889, %v1907
    %v1930 = vmul.f32 %v1890, %v1909
    %v1931 = vmul.f32 %v1891, %v1911
    %v1932 = vmul.f32 %v1892, %v1913
    %v1933 = vmul.f32 %v1893, %v1915
    %v1934 = vmul.f32 %v1894, %v1917
    %v1935 = vmul.f32 %v1895, %v1919
    %1944 = vrot.lane.b32.xlu0 %v1647, 32
    %v1945 = vpop.permute.xlu0 %1944
    %1946 = vrot.lane.b32.xlu0 %v1648, 32
    %v1947 = vpop.permute.xlu0 %1946
    %1948 = vrot.lane.b32.xlu0 %v1649, 32
    %v1949 = vpop.permute.xlu0 %1948
    %1950 = vrot.lane.b32.xlu0 %v1650, 32
    %v1951 = vpop.permute.xlu0 %1950
    %1952 = vrot.lane.b32.xlu0 %v1651, 32
    %v1953 = vpop.permute.xlu0 %1952
    %1954 = vrot.lane.b32.xlu0 %v1652, 32
    %v1955 = vpop.permute.xlu0 %1954
    %1956 = vrot.lane.b32.xlu0 %v1653, 32
    %v1957 = vpop.permute.xlu0 %1956
    %1958 = vrot.lane.b32.xlu0 %v1654, 32
    %v1959 = vpop.permute.xlu0 %1958
    %v1968 = vmul.f32 %v1777, %v1945
    %v1969 = vmul.f32 %v1779, %v1947
    %v1970 = vmul.f32 %v1781, %v1949
    %v1971 = vmul.f32 %v1783, %v1951
    %v1972 = vmul.f32 %v1785, %v1953
    %v1973 = vmul.f32 %v1787, %v1955
    %v1974 = vmul.f32 %v1789, %v1957
    %v1975 = vmul.f32 %v1791, %v1959
    %v1976 = vadd.f32 %v1928, %v1968
    %v1977 = vadd.f32 %v1929, %v1969
    %v1978 = vadd.f32 %v1930, %v1970
    %v1979 = vadd.f32 %v1931, %v1971
    %v1980 = vadd.f32 %v1932, %v1972
    %v1981 = vadd.f32 %v1933, %v1973
    %v1982 = vadd.f32 %v1934, %v1974
    %v1983 = vadd.f32 %v1935, %v1975
    %1992 = vrot.lane.b32.xlu0 %v1976, 96
    %v1993 = vpop.permute.xlu0 %1992
    %1994 = vrot.lane.b32.xlu0 %v1977, 96
    %v1995 = vpop.permute.xlu0 %1994
    %1996 = vrot.lane.b32.xlu0 %v1978, 96
    %v1997 = vpop.permute.xlu0 %1996
    %1998 = vrot.lane.b32.xlu0 %v1979, 96
    %v1999 = vpop.permute.xlu0 %1998
    %2000 = vrot.lane.b32.xlu0 %v1980, 96
    %v2001 = vpop.permute.xlu0 %2000
    %2002 = vrot.lane.b32.xlu0 %v1981, 96
    %v2003 = vpop.permute.xlu0 %2002
    %2004 = vrot.lane.b32.xlu0 %v1982, 96
    %v2005 = vpop.permute.xlu0 %2004
    %2006 = vrot.lane.b32.xlu0 %v1983, 96
    %v2007 = vpop.permute.xlu0 %2006
    %2016 = vst.msk [vmem:[#allocation5] sm:$0xff] %vm143, %v1993
    %2017 = vst.msk [vmem:[#allocation5 + $0x8] sm:$0xff] %vm143, %v1995
    %2018 = vst.msk [vmem:[#allocation5 + $0x10] sm:$0xff] %vm143, %v1997
    %2019 = vst.msk [vmem:[#allocation5 + $0x18] sm:$0xff] %vm143, %v1999
    %2020 = vst.msk [vmem:[#allocation5 + $0x20] sm:$0xff] %vm143, %v2001
    %2021 = vst.msk [vmem:[#allocation5 + $0x28] sm:$0xff] %vm143, %v2003
    %2022 = vst.msk [vmem:[#allocation5 + $0x30] sm:$0xff] %vm143, %v2005
    %2023 = vst.msk [vmem:[#allocation5 + $0x38] sm:$0xff] %vm143, %v2007
    %v2024 = vld [vmem:[#allocation2 + $0x2] sm:$0xff]
    %v2025 = vld [vmem:[#allocation2 + $0x12] sm:$0xff]
    %v2026 = vld [vmem:[#allocation2 + $0x22] sm:$0xff]
    %v2027 = vld [vmem:[#allocation2 + $0x32] sm:$0xff]
    %v2028 = vld [vmem:[#allocation2 + $0x42] sm:$0xff]
    %v2029 = vld [vmem:[#allocation2 + $0x52] sm:$0xff]
    %v2030 = vld [vmem:[#allocation2 + $0x62] sm:$0xff]
    %v2031 = vld [vmem:[#allocation2 + $0x72] sm:$0xff]
    %v2032 = vld [vmem:[#allocation3 + $0x2] sm:$0xff]
    %v2033 = vld [vmem:[#allocation3 + $0x12] sm:$0xff]
    %v2034 = vld [vmem:[#allocation3 + $0x22] sm:$0xff]
    %v2035 = vld [vmem:[#allocation3 + $0x32] sm:$0xff]
    %v2036 = vld [vmem:[#allocation3 + $0x42] sm:$0xff]
    %v2037 = vld [vmem:[#allocation3 + $0x52] sm:$0xff]
    %v2038 = vld [vmem:[#allocation3 + $0x62] sm:$0xff]
    %v2039 = vld [vmem:[#allocation3 + $0x72] sm:$0xff]
    %v2040 = vld [vmem:[#allocation4] sm:$0xff]
    %v2041 = vld [vmem:[#allocation4 + $0x8] sm:$0xff]
    %v2042 = vld [vmem:[#allocation4 + $0x10] sm:$0xff]
    %v2043 = vld [vmem:[#allocation4 + $0x18] sm:$0xff]
    %v2044 = vld [vmem:[#allocation4 + $0x20] sm:$0xff]
    %v2045 = vld [vmem:[#allocation4 + $0x28] sm:$0xff]
    %v2046 = vld [vmem:[#allocation4 + $0x30] sm:$0xff]
    %v2047 = vld [vmem:[#allocation4 + $0x38] sm:$0xff]
    %v2048 = vpack.c.bf16 %v2041, %v2040
    %v2049 = vpack.c.bf16 %v2043, %v2042
    %v2050 = vpack.c.bf16 %v2045, %v2044
    %v2051 = vpack.c.bf16 %v2047, %v2046
    %v2053 = vsel %vm143, %v2048, 0
    %v2056 = vsel %vm143, %v2049, 0
    %v2059 = vsel %vm143, %v2050, 0
    %v2062 = vsel %vm143, %v2051, 0
    %2064 = vmatprep.subr.bf16.mxu0 0
    %2065 = vmatpush1.bf16.msra.mxu0 %v490
    %2066 = vmatprep.subr.bf16.mxu0 0
    %2067 = vmatpush1.bf16.msra.mxu0 %v491
    %2068 = vmatprep.subr.bf16.mxu0 0
    %2069 = vmatpush1.bf16.msra.mxu0 0
    %2070 = vmatprep.subr.bf16.mxu0 0
    %2071 = vmatpush1.bf16.msra.mxu0 0
    %2072 = vmatprep.subr.bf16.mxu0 0
    %2073 = vmatpush1.bf16.msra.mxu0 0
    %2074 = vmatprep.subr.bf16.mxu0 0
    %2075 = vmatpush1.bf16.msra.mxu0 0
    %2076 = vmatprep.subr.bf16.mxu0 0
    %2077 = vmatpush1.bf16.msra.mxu0 0
    %2078 = vmatprep.subr.bf16.mxu0 0
    %2079 = vmatpush1.bf16.msra.mxu0 0
    %2080 = vmatprep.subr.bf16.mxu0 0
    %2081 = vmatpush1.bf16.msra.mxu0 0
    %2082 = vmatprep.subr.bf16.mxu0 0
    %2083 = vmatpush1.bf16.msra.mxu0 0
    %2084 = vmatprep.subr.bf16.mxu0 0
    %2085 = vmatpush1.bf16.msra.mxu0 0
    %2086 = vmatprep.subr.bf16.mxu0 0
    %2087 = vmatpush1.bf16.msra.mxu0 0
    %2088 = vmatprep.subr.bf16.mxu0 0
    %2089 = vmatpush1.bf16.msra.mxu0 0
    %2090 = vmatprep.subr.bf16.mxu0 0
    %2091 = vmatpush1.bf16.msra.mxu0 0
    %2092 = vmatprep.subr.bf16.mxu0 0
    %2093 = vmatpush1.bf16.msra.mxu0 0
    %2094 = vmatprep.subr.bf16.mxu0 0
    %2095 = vmatpush1.bf16.msra.mxu0 0
    %2096 = vmatprep.mubr.bf16.mxu0 0
    %2097 = vmatmul.mubr.bf16.gmra.mrb[0].mxu0 %v2053
    %v2098 = vpop.f32.mrb[0].mxu0
    %v2099 = vadd.f32 0.0, %v2098
    %v2100 = vpop.f32.mrb[0].mxu0
    %v2101 = vpop.f32.mrb[0].mxu0
    %v2102 = vadd.f32 0.0, %v2101
    %v2103 = vpop.f32.mrb[0].mxu0
    %2104 = vmatprep.mubr.bf16.mxu0 0
    %2105 = vmatmul.mubr.bf16.gmra.mrb[0].mxu0 %v2056
    %v2106 = vpop.f32.mrb[0].mxu0
    %v2107 = vadd.f32 0.0, %v2106
    %v2108 = vpop.f32.mrb[0].mxu0
    %v2109 = vpop.f32.mrb[0].mxu0
    %v2110 = vadd.f32 0.0, %v2109
    %v2111 = vpop.f32.mrb[0].mxu0
    %2112 = vmatprep.mubr.bf16.mxu0 0
    %2113 = vmatmul.mubr.bf16.gmra.mrb[0].mxu0 %v2059
    %v2114 = vpop.f32.mrb[0].mxu0
    %v2115 = vadd.f32 0.0, %v2114
    %v2116 = vpop.f32.mrb[0].mxu0
    %v2117 = vpop.f32.mrb[0].mxu0
    %v2118 = vadd.f32 0.0, %v2117
    %v2119 = vpop.f32.mrb[0].mxu0
    %2120 = vmatprep.mubr.bf16.mxu0 0
    %2121 = vmatmul.mubr.bf16.gmra.mrb[0].mxu0 %v2062
    %v2122 = vpop.f32.mrb[0].mxu0
    %v2123 = vadd.f32 0.0, %v2122
    %v2124 = vpop.f32.mrb[0].mxu0
    %v2125 = vpop.f32.mrb[0].mxu0
    %v2126 = vadd.f32 0.0, %v2125
    %v2127 = vpop.f32.mrb[0].mxu0
    %2128 = vdwg.mxu0
    %v2129 = vadd.f32 %v2024, %v2099
    %v2130 = vadd.f32 %v2025, %v2102
    %v2131 = vadd.f32 %v2026, %v2107
    %v2132 = vadd.f32 %v2027, %v2110
    %v2133 = vadd.f32 %v2028, %v2115
    %v2134 = vadd.f32 %v2029, %v2118
    %v2135 = vadd.f32 %v2030, %v2123
    %v2136 = vadd.f32 %v2031, %v2126
    %v2137 = vxor.u32 %v2129, 2147483648
    %v2138 = vxor.u32 %v2130, 2147483648
    %v2139 = vxor.u32 %v2131, 2147483648
    %v2140 = vxor.u32 %v2132, 2147483648
    %v2141 = vxor.u32 %v2133, 2147483648
    %v2142 = vxor.u32 %v2134, 2147483648
    %v2143 = vxor.u32 %v2135, 2147483648
    %v2144 = vxor.u32 %v2136, 2147483648
    %v2145 = vmul.f32 %v2137, 1.442695
    %v2146 = vpow.pop %v2145
    %v2147 = vmul.f32 %v2138, 1.442695
    %v2148 = vpow.pop %v2147
    %v2149 = vmul.f32 %v2139, 1.442695
    %v2150 = vpow.pop %v2149
    %v2151 = vmul.f32 %v2140, 1.442695
    %v2152 = vpow.pop %v2151
    %v2153 = vmul.f32 %v2141, 1.442695
    %v2154 = vpow.pop %v2153
    %v2155 = vmul.f32 %v2142, 1.442695
    %v2156 = vpow.pop %v2155
    %v2157 = vmul.f32 %v2143, 1.442695
    %v2158 = vpow.pop %v2157
    %v2159 = vmul.f32 %v2144, 1.442695
    %v2160 = vpow.pop %v2159
    %v2161 = vadd.f32 %v2146, 1.0
    %v2162 = vadd.f32 %v2148, 1.0
    %v2163 = vadd.f32 %v2150, 1.0
    %v2164 = vadd.f32 %v2152, 1.0
    %v2165 = vadd.f32 %v2154, 1.0
    %v2166 = vadd.f32 %v2156, 1.0
    %v2167 = vadd.f32 %v2158, 1.0
    %v2168 = vadd.f32 %v2160, 1.0
    %v2169 = vrcp.pop %v2161
    %v2170 = vmul.f32 1.0, %v2169
    %v2171 = vrcp.pop %v2162
    %v2172 = vmul.f32 1.0, %v2171
    %v2173 = vrcp.pop %v2163
    %v2174 = vmul.f32 1.0, %v2173
    %v2175 = vrcp.pop %v2164
    %v2176 = vmul.f32 1.0, %v2175
    %v2177 = vrcp.pop %v2165
    %v2178 = vmul.f32 1.0, %v2177
    %v2179 = vrcp.pop %v2166
    %v2180 = vmul.f32 1.0, %v2179
    %v2181 = vrcp.pop %v2167
    %v2182 = vmul.f32 1.0, %v2181
    %v2183 = vrcp.pop %v2168
    %v2184 = vmul.f32 1.0, %v2183
    %v2185 = vadd.f32 %v2099, %v628
    %v2186 = vadd.f32 %v2102, %v628
    %v2187 = vadd.f32 %v2107, %v628
    %v2188 = vadd.f32 %v2110, %v628
    %v2189 = vadd.f32 %v2115, %v628
    %v2190 = vadd.f32 %v2118, %v628
    %v2191 = vadd.f32 %v2123, %v628
    %v2192 = vadd.f32 %v2126, %v628
    %2201 = vrot.lane.b32.xlu0 %v2185, 64
    %v2202 = vpop.permute.xlu0 %2201
    %2203 = vrot.lane.b32.xlu0 %v2186, 64
    %v2204 = vpop.permute.xlu0 %2203
    %2205 = vrot.lane.b32.xlu0 %v2187, 64
    %v2206 = vpop.permute.xlu0 %2205
    %2207 = vrot.lane.b32.xlu0 %v2188, 64
    %v2208 = vpop.permute.xlu0 %2207
    %2209 = vrot.lane.b32.xlu0 %v2189, 64
    %v2210 = vpop.permute.xlu0 %2209
    %2211 = vrot.lane.b32.xlu0 %v2190, 64
    %v2212 = vpop.permute.xlu0 %2211
    %2213 = vrot.lane.b32.xlu0 %v2191, 64
    %v2214 = vpop.permute.xlu0 %2213
    %2215 = vrot.lane.b32.xlu0 %v2192, 64
    %v2216 = vpop.permute.xlu0 %2215
    %v2225 = vmul.f32 %v2170, %v2202
    %v2226 = vmul.f32 %v2172, %v2204
    %v2227 = vmul.f32 %v2174, %v2206
    %v2228 = vmul.f32 %v2176, %v2208
    %v2229 = vmul.f32 %v2178, %v2210
    %v2230 = vmul.f32 %v2180, %v2212
    %v2231 = vmul.f32 %v2182, %v2214
    %v2232 = vmul.f32 %v2184, %v2216
    %2241 = vrot.lane.b32.xlu0 %v2225, 64
    %v2242 = vpop.permute.xlu0 %2241
    %2243 = vrot.lane.b32.xlu0 %v2226, 64
    %v2244 = vpop.permute.xlu0 %2243
    %2245 = vrot.lane.b32.xlu0 %v2227, 64
    %v2246 = vpop.permute.xlu0 %2245
    %2247 = vrot.lane.b32.xlu0 %v2228, 64
    %v2248 = vpop.permute.xlu0 %2247
    %2249 = vrot.lane.b32.xlu0 %v2229, 64
    %v2250 = vpop.permute.xlu0 %2249
    %2251 = vrot.lane.b32.xlu0 %v2230, 64
    %v2252 = vpop.permute.xlu0 %2251
    %2253 = vrot.lane.b32.xlu0 %v2231, 64
    %v2254 = vpop.permute.xlu0 %2253
    %2255 = vrot.lane.b32.xlu0 %v2232, 64
    %v2256 = vpop.permute.xlu0 %2255
    %v2265 = vadd.f32 %v2024, %v2242
    %v2266 = vadd.f32 %v2025, %v2244
    %v2267 = vadd.f32 %v2026, %v2246
    %v2268 = vadd.f32 %v2027, %v2248
    %v2269 = vadd.f32 %v2028, %v2250
    %v2270 = vadd.f32 %v2029, %v2252
    %v2271 = vadd.f32 %v2030, %v2254
    %v2272 = vadd.f32 %v2031, %v2256
    %v2273 = vtanh.pop %v2265
    %v2274 = vtanh.pop %v2266
    %v2275 = vtanh.pop %v2267
    %v2276 = vtanh.pop %v2268
    %v2277 = vtanh.pop %v2269
    %v2278 = vtanh.pop %v2270
    %v2279 = vtanh.pop %v2271
    %v2280 = vtanh.pop %v2272
    %v2281 = vsub.f32 1.0, %v2170
    %v2282 = vsub.f32 1.0, %v2172
    %v2283 = vsub.f32 1.0, %v2174
    %v2284 = vsub.f32 1.0, %v2176
    %v2285 = vsub.f32 1.0, %v2178
    %v2286 = vsub.f32 1.0, %v2180
    %v2287 = vsub.f32 1.0, %v2182
    %v2288 = vsub.f32 1.0, %v2184
    %2297 = vrot.lane.b32.xlu0 %v2273, 96
    %v2298 = vpop.permute.xlu0 %2297
    %2299 = vrot.lane.b32.xlu0 %v2274, 96
    %v2300 = vpop.permute.xlu0 %2299
    %2301 = vrot.lane.b32.xlu0 %v2275, 96
    %v2302 = vpop.permute.xlu0 %2301
    %2303 = vrot.lane.b32.xlu0 %v2276, 96
    %v2304 = vpop.permute.xlu0 %2303
    %2305 = vrot.lane.b32.xlu0 %v2277, 96
    %v2306 = vpop.permute.xlu0 %2305
    %2307 = vrot.lane.b32.xlu0 %v2278, 96
    %v2308 = vpop.permute.xlu0 %2307
    %2309 = vrot.lane.b32.xlu0 %v2279, 96
    %v2310 = vpop.permute.xlu0 %2309
    %2311 = vrot.lane.b32.xlu0 %v2280, 96
    %v2312 = vpop.permute.xlu0 %2311
    %v2321 = vmul.f32 %v2281, %v2298
    %v2322 = vmul.f32 %v2282, %v2300
    %v2323 = vmul.f32 %v2283, %v2302
    %v2324 = vmul.f32 %v2284, %v2304
    %v2325 = vmul.f32 %v2285, %v2306
    %v2326 = vmul.f32 %v2286, %v2308
    %v2327 = vmul.f32 %v2287, %v2310
    %v2328 = vmul.f32 %v2288, %v2312
    %2337 = vrot.lane.b32.xlu0 %v2040, 32
    %v2338 = vpop.permute.xlu0 %2337
    %2339 = vrot.lane.b32.xlu0 %v2041, 32
    %v2340 = vpop.permute.xlu0 %2339
    %2341 = vrot.lane.b32.xlu0 %v2042, 32
    %v2342 = vpop.permute.xlu0 %2341
    %2343 = vrot.lane.b32.xlu0 %v2043, 32
    %v2344 = vpop.permute.xlu0 %2343
    %2345 = vrot.lane.b32.xlu0 %v2044, 32
    %v2346 = vpop.permute.xlu0 %2345
    %2347 = vrot.lane.b32.xlu0 %v2045, 32
    %v2348 = vpop.permute.xlu0 %2347
    %2349 = vrot.lane.b32.xlu0 %v2046, 32
    %v2350 = vpop.permute.xlu0 %2349
    %2351 = vrot.lane.b32.xlu0 %v2047, 32
    %v2352 = vpop.permute.xlu0 %2351
    %v2361 = vmul.f32 %v2170, %v2338
    %v2362 = vmul.f32 %v2172, %v2340
    %v2363 = vmul.f32 %v2174, %v2342
    %v2364 = vmul.f32 %v2176, %v2344
    %v2365 = vmul.f32 %v2178, %v2346
    %v2366 = vmul.f32 %v2180, %v2348
    %v2367 = vmul.f32 %v2182, %v2350
    %v2368 = vmul.f32 %v2184, %v2352
    %v2369 = vadd.f32 %v2321, %v2361
    %v2370 = vadd.f32 %v2322, %v2362
    %v2371 = vadd.f32 %v2323, %v2363
    %v2372 = vadd.f32 %v2324, %v2364
    %v2373 = vadd.f32 %v2325, %v2365
    %v2374 = vadd.f32 %v2326, %v2366
    %v2375 = vadd.f32 %v2327, %v2367
    %v2376 = vadd.f32 %v2328, %v2368
    %2385 = vrot.lane.b32.xlu0 %v2369, 96
    %v2386 = vpop.permute.xlu0 %2385
    %2387 = vrot.lane.b32.xlu0 %v2370, 96
    %v2388 = vpop.permute.xlu0 %2387
    %2389 = vrot.lane.b32.xlu0 %v2371, 96
    %v2390 = vpop.permute.xlu0 %2389
    %2391 = vrot.lane.b32.xlu0 %v2372, 96
    %v2392 = vpop.permute.xlu0 %2391
    %2393 = vrot.lane.b32.xlu0 %v2373, 96
    %v2394 = vpop.permute.xlu0 %2393
    %2395 = vrot.lane.b32.xlu0 %v2374, 96
    %v2396 = vpop.permute.xlu0 %2395
    %2397 = vrot.lane.b32.xlu0 %v2375, 96
    %v2398 = vpop.permute.xlu0 %2397
    %2399 = vrot.lane.b32.xlu0 %v2376, 96
    %v2400 = vpop.permute.xlu0 %2399
    %2409 = vst.msk [vmem:[#allocation4] sm:$0xff] %vm143, %v2386
    %2410 = vst.msk [vmem:[#allocation4 + $0x8] sm:$0xff] %vm143, %v2388
    %2411 = vst.msk [vmem:[#allocation4 + $0x10] sm:$0xff] %vm143, %v2390
    %2412 = vst.msk [vmem:[#allocation4 + $0x18] sm:$0xff] %vm143, %v2392
    %2413 = vst.msk [vmem:[#allocation4 + $0x20] sm:$0xff] %vm143, %v2394
    %2414 = vst.msk [vmem:[#allocation4 + $0x28] sm:$0xff] %vm143, %v2396
    %2415 = vst.msk [vmem:[#allocation4 + $0x30] sm:$0xff] %vm143, %v2398
    %2416 = vst.msk [vmem:[#allocation4 + $0x38] sm:$0xff] %vm143, %v2400
    %v2417 = vld [vmem:[#allocation5] sm:$0xff]
    %v2418 = vld [vmem:[#allocation5 + $0x8] sm:$0xff]
    %v2419 = vld [vmem:[#allocation5 + $0x10] sm:$0xff]
    %v2420 = vld [vmem:[#allocation5 + $0x18] sm:$0xff]
    %v2421 = vld [vmem:[#allocation5 + $0x20] sm:$0xff]
    %v2422 = vld [vmem:[#allocation5 + $0x28] sm:$0xff]
    %v2423 = vld [vmem:[#allocation5 + $0x30] sm:$0xff]
    %v2424 = vld [vmem:[#allocation5 + $0x38] sm:$0xff]
    %v2425 = vpack.c.bf16 %v2418, %v2417
    %v2426 = vpack.c.bf16 %v2420, %v2419
    %v2427 = vpack.c.bf16 %v2422, %v2421
    %v2428 = vpack.c.bf16 %v2424, %v2423
    %v2430 = vsel %vm143, %v2425, 0
    %v2433 = vsel %vm143, %v2426, 0
    %v2436 = vsel %vm143, %v2427, 0
    %v2439 = vsel %vm143, %v2428, 0
    %2441 = vmatprep.subr.bf16.mxu0 0
    %2442 = vmatpush1.bf16.msra.mxu0 %v882
    %2443 = vmatprep.subr.bf16.mxu0 0
    %2444 = vmatpush1.bf16.msra.mxu0 %v883
    %2445 = vmatprep.subr.bf16.mxu0 0
    %2446 = vmatpush1.bf16.msra.mxu0 0
    %2447 = vmatprep.subr.bf16.mxu0 0
    %2448 = vmatpush1.bf16.msra.mxu0 0
    %2449 = vmatprep.subr.bf16.mxu0 0
    %2450 = vmatpush1.bf16.msra.mxu0 0
    %2451 = vmatprep.subr.bf16.mxu0 0
    %2452 = vmatpush1.bf16.msra.mxu0 0
    %2453 = vmatprep.subr.bf16.mxu0 0
    %2454 = vmatpush1.bf16.msra.mxu0 0
    %2455 = vmatprep.subr.bf16.mxu0 0
    %2456 = vmatpush1.bf16.msra.mxu0 0
    %2457 = vmatprep.subr.bf16.mxu0 0
    %2458 = vmatpush1.bf16.msra.mxu0 0
    %2459 = vmatprep.subr.bf16.mxu0 0
    %2460 = vmatpush1.bf16.msra.mxu0 0
    %2461 = vmatprep.subr.bf16.mxu0 0
    %2462 = vmatpush1.bf16.msra.mxu0 0
    %2463 = vmatprep.subr.bf16.mxu0 0
    %2464 = vmatpush1.bf16.msra.mxu0 0
    %2465 = vmatprep.subr.bf16.mxu0 0
    %2466 = vmatpush1.bf16.msra.mxu0 0
    %2467 = vmatprep.subr.bf16.mxu0 0
    %2468 = vmatpush1.bf16.msra.mxu0 0
    %2469 = vmatprep.subr.bf16.mxu0 0
    %2470 = vmatpush1.bf16.msra.mxu0 0
    %2471 = vmatprep.subr.bf16.mxu0 0
    %2472 = vmatpush1.bf16.msra.mxu0 0
    %2473 = vmatprep.mubr.bf16.mxu0 0
    %2474 = vmatmul.mubr.bf16.gmra.mrb[0].mxu0 %v2430
    %v2475 = vpop.f32.mrb[0].mxu0
    %v2476 = vadd.f32 0.0, %v2475
    %v2477 = vpop.f32.mrb[0].mxu0
    %v2478 = vpop.f32.mrb[0].mxu0
    %v2479 = vadd.f32 0.0, %v2478
    %v2480 = vpop.f32.mrb[0].mxu0
    %2481 = vmatprep.mubr.bf16.mxu0 0
    %2482 = vmatmul.mubr.bf16.gmra.mrb[0].mxu0 %v2433
    %v2483 = vpop.f32.mrb[0].mxu0
    %v2484 = vadd.f32 0.0, %v2483
    %v2485 = vpop.f32.mrb[0].mxu0
    %v2486 = vpop.f32.mrb[0].mxu0
    %v2487 = vadd.f32 0.0, %v2486
    %v2488 = vpop.f32.mrb[0].mxu0
    %2489 = vmatprep.mubr.bf16.mxu0 0
    %2490 = vmatmul.mubr.bf16.gmra.mrb[0].mxu0 %v2436
    %v2491 = vpop.f32.mrb[0].mxu0
    %v2492 = vadd.f32 0.0, %v2491
    %v2493 = vpop.f32.mrb[0].mxu0
    %v2494 = vpop.f32.mrb[0].mxu0
    %v2495 = vadd.f32 0.0, %v2494
    %v2496 = vpop.f32.mrb[0].mxu0
    %2497 = vmatprep.mubr.bf16.mxu0 0
    %2498 = vmatmul.mubr.bf16.gmra.mrb[0].mxu0 %v2439
    %v2499 = vpop.f32.mrb[0].mxu0
    %v2500 = vadd.f32 0.0, %v2499
    %v2501 = vpop.f32.mrb[0].mxu0
    %v2502 = vpop.f32.mrb[0].mxu0
    %v2503 = vadd.f32 0.0, %v2502
    %v2504 = vpop.f32.mrb[0].mxu0
    %2505 = vdwg.mxu0
    %v2506 = vadd.f32 %v2032, %v2476
    %v2507 = vadd.f32 %v2033, %v2479
    %v2508 = vadd.f32 %v2034, %v2484
    %v2509 = vadd.f32 %v2035, %v2487
    %v2510 = vadd.f32 %v2036, %v2492
    %v2511 = vadd.f32 %v2037, %v2495
    %v2512 = vadd.f32 %v2038, %v2500
    %v2513 = vadd.f32 %v2039, %v2503
    %v2514 = vxor.u32 %v2506, 2147483648
    %v2515 = vxor.u32 %v2507, 2147483648
    %v2516 = vxor.u32 %v2508, 2147483648
    %v2517 = vxor.u32 %v2509, 2147483648
    %v2518 = vxor.u32 %v2510, 2147483648
    %v2519 = vxor.u32 %v2511, 2147483648
    %v2520 = vxor.u32 %v2512, 2147483648
    %v2521 = vxor.u32 %v2513, 2147483648
    %v2522 = vmul.f32 %v2514, 1.442695
    %v2523 = vpow.pop %v2522
    %v2524 = vmul.f32 %v2515, 1.442695
    %v2525 = vpow.pop %v2524
    %v2526 = vmul.f32 %v2516, 1.442695
    %v2527 = vpow.pop %v2526
    %v2528 = vmul.f32 %v2517, 1.442695
    %v2529 = vpow.pop %v2528
    %v2530 = vmul.f32 %v2518, 1.442695
    %v2531 = vpow.pop %v2530
    %v2532 = vmul.f32 %v2519, 1.442695
    %v2533 = vpow.pop %v2532
    %v2534 = vmul.f32 %v2520, 1.442695
    %v2535 = vpow.pop %v2534
    %v2536 = vmul.f32 %v2521, 1.442695
    %v2537 = vpow.pop %v2536
    %v2538 = vadd.f32 %v2523, 1.0
    %v2539 = vadd.f32 %v2525, 1.0
    %v2540 = vadd.f32 %v2527, 1.0
    %v2541 = vadd.f32 %v2529, 1.0
    %v2542 = vadd.f32 %v2531, 1.0
    %v2543 = vadd.f32 %v2533, 1.0
    %v2544 = vadd.f32 %v2535, 1.0
    %v2545 = vadd.f32 %v2537, 1.0
    %v2546 = vrcp.pop %v2538
    %v2547 = vmul.f32 1.0, %v2546
    %v2548 = vrcp.pop %v2539
    %v2549 = vmul.f32 1.0, %v2548
    %v2550 = vrcp.pop %v2540
    %v2551 = vmul.f32 1.0, %v2550
    %v2552 = vrcp.pop %v2541
    %v2553 = vmul.f32 1.0, %v2552
    %v2554 = vrcp.pop %v2542
    %v2555 = vmul.f32 1.0, %v2554
    %v2556 = vrcp.pop %v2543
    %v2557 = vmul.f32 1.0, %v2556
    %v2558 = vrcp.pop %v2544
    %v2559 = vmul.f32 1.0, %v2558
    %v2560 = vrcp.pop %v2545
    %v2561 = vmul.f32 1.0, %v2560
    %v2562 = vadd.f32 %v2476, %v1020
    %v2563 = vadd.f32 %v2479, %v1020
    %v2564 = vadd.f32 %v2484, %v1020
    %v2565 = vadd.f32 %v2487, %v1020
    %v2566 = vadd.f32 %v2492, %v1020
    %v2567 = vadd.f32 %v2495, %v1020
    %v2568 = vadd.f32 %v2500, %v1020
    %v2569 = vadd.f32 %v2503, %v1020
    %2578 = vrot.lane.b32.xlu0 %v2562, 64
    %v2579 = vpop.permute.xlu0 %2578
    %2580 = vrot.lane.b32.xlu0 %v2563, 64
    %v2581 = vpop.permute.xlu0 %2580
    %2582 = vrot.lane.b32.xlu0 %v2564, 64
    %v2583 = vpop.permute.xlu0 %2582
    %2584 = vrot.lane.b32.xlu0 %v2565, 64
    %v2585 = vpop.permute.xlu0 %2584
    %2586 = vrot.lane.b32.xlu0 %v2566, 64
    %v2587 = vpop.permute.xlu0 %2586
    %2588 = vrot.lane.b32.xlu0 %v2567, 64
    %v2589 = vpop.permute.xlu0 %2588
    %2590 = vrot.lane.b32.xlu0 %v2568, 64
    %v2591 = vpop.permute.xlu0 %2590
    %2592 = vrot.lane.b32.xlu0 %v2569, 64
    %v2593 = vpop.permute.xlu0 %2592
    %v2602 = vmul.f32 %v2547, %v2579
    %v2603 = vmul.f32 %v2549, %v2581
    %v2604 = vmul.f32 %v2551, %v2583
    %v2605 = vmul.f32 %v2553, %v2585
    %v2606 = vmul.f32 %v2555, %v2587
    %v2607 = vmul.f32 %v2557, %v2589
    %v2608 = vmul.f32 %v2559, %v2591
    %v2609 = vmul.f32 %v2561, %v2593
    %2618 = vrot.lane.b32.xlu0 %v2602, 64
    %v2619 = vpop.permute.xlu0 %2618
    %2620 = vrot.lane.b32.xlu0 %v2603, 64
    %v2621 = vpop.permute.xlu0 %2620
    %2622 = vrot.lane.b32.xlu0 %v2604, 64
    %v2623 = vpop.permute.xlu0 %2622
    %2624 = vrot.lane.b32.xlu0 %v2605, 64
    %v2625 = vpop.permute.xlu0 %2624
    %2626 = vrot.lane.b32.xlu0 %v2606, 64
    %v2627 = vpop.permute.xlu0 %2626
    %2628 = vrot.lane.b32.xlu0 %v2607, 64
    %v2629 = vpop.permute.xlu0 %2628
    %2630 = vrot.lane.b32.xlu0 %v2608, 64
    %v2631 = vpop.permute.xlu0 %2630
    %2632 = vrot.lane.b32.xlu0 %v2609, 64
    %v2633 = vpop.permute.xlu0 %2632
    %v2642 = vadd.f32 %v2032, %v2619
    %v2643 = vadd.f32 %v2033, %v2621
    %v2644 = vadd.f32 %v2034, %v2623
    %v2645 = vadd.f32 %v2035, %v2625
    %v2646 = vadd.f32 %v2036, %v2627
    %v2647 = vadd.f32 %v2037, %v2629
    %v2648 = vadd.f32 %v2038, %v2631
    %v2649 = vadd.f32 %v2039, %v2633
    %v2650 = vtanh.pop %v2642
    %v2651 = vtanh.pop %v2643
    %v2652 = vtanh.pop %v2644
    %v2653 = vtanh.pop %v2645
    %v2654 = vtanh.pop %v2646
    %v2655 = vtanh.pop %v2647
    %v2656 = vtanh.pop %v2648
    %v2657 = vtanh.pop %v2649
    %v2658 = vsub.f32 1.0, %v2547
    %v2659 = vsub.f32 1.0, %v2549
    %v2660 = vsub.f32 1.0, %v2551
    %v2661 = vsub.f32 1.0, %v2553
    %v2662 = vsub.f32 1.0, %v2555
    %v2663 = vsub.f32 1.0, %v2557
    %v2664 = vsub.f32 1.0, %v2559
    %v2665 = vsub.f32 1.0, %v2561
    %2674 = vrot.lane.b32.xlu0 %v2650, 96
    %v2675 = vpop.permute.xlu0 %2674
    %2676 = vrot.lane.b32.xlu0 %v2651, 96
    %v2677 = vpop.permute.xlu0 %2676
    %2678 = vrot.lane.b32.xlu0 %v2652, 96
    %v2679 = vpop.permute.xlu0 %2678
    %2680 = vrot.lane.b32.xlu0 %v2653, 96
    %v2681 = vpop.permute.xlu0 %2680
    %2682 = vrot.lane.b32.xlu0 %v2654, 96
    %v2683 = vpop.permute.xlu0 %2682
    %2684 = vrot.lane.b32.xlu0 %v2655, 96
    %v2685 = vpop.permute.xlu0 %2684
    %2686 = vrot.lane.b32.xlu0 %v2656, 96
    %v2687 = vpop.permute.xlu0 %2686
    %2688 = vrot.lane.b32.xlu0 %v2657, 96
    %v2689 = vpop.permute.xlu0 %2688
    %v2698 = vmul.f32 %v2658, %v2675
    %v2699 = vmul.f32 %v2659, %v2677
    %v2700 = vmul.f32 %v2660, %v2679
    %v2701 = vmul.f32 %v2661, %v2681
    %v2702 = vmul.f32 %v2662, %v2683
    %v2703 = vmul.f32 %v2663, %v2685
    %v2704 = vmul.f32 %v2664, %v2687
    %v2705 = vmul.f32 %v2665, %v2689
    %2714 = vrot.lane.b32.xlu0 %v2417, 32
    %v2715 = vpop.permute.xlu0 %2714
    %2716 = vrot.lane.b32.xlu0 %v2418, 32
    %v2717 = vpop.permute.xlu0 %2716
    %2718 = vrot.lane.b32.xlu0 %v2419, 32
    %v2719 = vpop.permute.xlu0 %2718
    %2720 = vrot.lane.b32.xlu0 %v2420, 32
    %v2721 = vpop.permute.xlu0 %2720
    %2722 = vrot.lane.b32.xlu0 %v2421, 32
    %v2723 = vpop.permute.xlu0 %2722
    %2724 = vrot.lane.b32.xlu0 %v2422, 32
    %v2725 = vpop.permute.xlu0 %2724
    %2726 = vrot.lane.b32.xlu0 %v2423, 32
    %v2727 = vpop.permute.xlu0 %2726
    %2728 = vrot.lane.b32.xlu0 %v2424, 32
    %v2729 = vpop.permute.xlu0 %2728
    %v2738 = vmul.f32 %v2547, %v2715
    %v2739 = vmul.f32 %v2549, %v2717
    %v2740 = vmul.f32 %v2551, %v2719
    %v2741 = vmul.f32 %v2553, %v2721
    %v2742 = vmul.f32 %v2555, %v2723
    %v2743 = vmul.f32 %v2557, %v2725
    %v2744 = vmul.f32 %v2559, %v2727
    %v2745 = vmul.f32 %v2561, %v2729
    %v2746 = vadd.f32 %v2698, %v2738
    %v2747 = vadd.f32 %v2699, %v2739
    %v2748 = vadd.f32 %v2700, %v2740
    %v2749 = vadd.f32 %v2701, %v2741
    %v2750 = vadd.f32 %v2702, %v2742
    %v2751 = vadd.f32 %v2703, %v2743
    %v2752 = vadd.f32 %v2704, %v2744
    %v2753 = vadd.f32 %v2705, %v2745
    %2762 = vrot.lane.b32.xlu0 %v2746, 96
    %v2763 = vpop.permute.xlu0 %2762
    %2764 = vrot.lane.b32.xlu0 %v2747, 96
    %v2765 = vpop.permute.xlu0 %2764
    %2766 = vrot.lane.b32.xlu0 %v2748, 96
    %v2767 = vpop.permute.xlu0 %2766
    %2768 = vrot.lane.b32.xlu0 %v2749, 96
    %v2769 = vpop.permute.xlu0 %2768
    %2770 = vrot.lane.b32.xlu0 %v2750, 96
    %v2771 = vpop.permute.xlu0 %2770
    %2772 = vrot.lane.b32.xlu0 %v2751, 96
    %v2773 = vpop.permute.xlu0 %2772
    %2774 = vrot.lane.b32.xlu0 %v2752, 96
    %v2775 = vpop.permute.xlu0 %2774
    %2776 = vrot.lane.b32.xlu0 %v2753, 96
    %v2777 = vpop.permute.xlu0 %2776
    %2786 = vst.msk [vmem:[#allocation5] sm:$0xff] %vm143, %v2763
    %2787 = vst.msk [vmem:[#allocation5 + $0x8] sm:$0xff] %vm143, %v2765
    %2788 = vst.msk [vmem:[#allocation5 + $0x10] sm:$0xff] %vm143, %v2767
    %2789 = vst.msk [vmem:[#allocation5 + $0x18] sm:$0xff] %vm143, %v2769
    %2790 = vst.msk [vmem:[#allocation5 + $0x20] sm:$0xff] %vm143, %v2771
    %2791 = vst.msk [vmem:[#allocation5 + $0x28] sm:$0xff] %vm143, %v2773
    %2792 = vst.msk [vmem:[#allocation5 + $0x30] sm:$0xff] %vm143, %v2775
    %2793 = vst.msk [vmem:[#allocation5 + $0x38] sm:$0xff] %vm143, %v2777
    %v2794 = vld [vmem:[%s1] sm:$0xff]
    %v2795 = vld [vmem:[%s1 + $0x8] sm:$0xff]
    %v2796 = vld [vmem:[%s1 + $0x10] sm:$0xff]
    %v2797 = vld [vmem:[%s1 + $0x18] sm:$0xff]
    %v2798 = vld [vmem:[%s1 + $0x20] sm:$0xff]
    %v2799 = vld [vmem:[%s1 + $0x28] sm:$0xff]
    %v2800 = vld [vmem:[%s1 + $0x30] sm:$0xff]
    %v2801 = vld [vmem:[%s1 + $0x38] sm:$0xff]
    %v2802 = vld [vmem:[#allocation4] sm:$0xff]
    %v2803 = vld [vmem:[#allocation4 + $0x8] sm:$0xff]
    %v2804 = vld [vmem:[#allocation4 + $0x10] sm:$0xff]
    %v2805 = vld [vmem:[#allocation4 + $0x18] sm:$0xff]
    %v2806 = vld [vmem:[#allocation4 + $0x20] sm:$0xff]
    %v2807 = vld [vmem:[#allocation4 + $0x28] sm:$0xff]
    %v2808 = vld [vmem:[#allocation4 + $0x30] sm:$0xff]
    %v2809 = vld [vmem:[#allocation4 + $0x38] sm:$0xff]
    %2811 = vset.pattern.permute.xlu0 0
    %2812 = vperm.xlu0 %2811, %v2794
    %v2813 = vpop.permute.xlu0 %2812
    %2816 = vset.pattern.permute.xlu0 0
    %2817 = vperm.xlu0 %2816, %v2795
    %v2818 = vpop.permute.xlu0 %2817
    %2821 = vset.pattern.permute.xlu0 0
    %2822 = vperm.xlu0 %2821, %v2796
    %v2823 = vpop.permute.xlu0 %2822
    %2826 = vset.pattern.permute.xlu0 0
    %2827 = vperm.xlu0 %2826, %v2797
    %v2828 = vpop.permute.xlu0 %2827
    %2831 = vset.pattern.permute.xlu0 0
    %2832 = vperm.xlu0 %2831, %v2798
    %v2833 = vpop.permute.xlu0 %2832
    %2836 = vset.pattern.permute.xlu0 0
    %2837 = vperm.xlu0 %2836, %v2799
    %v2838 = vpop.permute.xlu0 %2837
    %2841 = vset.pattern.permute.xlu0 0
    %2842 = vperm.xlu0 %2841, %v2800
    %v2843 = vpop.permute.xlu0 %2842
    %2846 = vset.pattern.permute.xlu0 0
    %2847 = vperm.xlu0 %2846, %v2801
    %v2848 = vpop.permute.xlu0 %2847
    %v2850 = vmul.f32 %v2802, %v2813
    %v2851 = vmul.f32 %v2803, %v2818
    %v2852 = vmul.f32 %v2804, %v2823
    %v2853 = vmul.f32 %v2805, %v2828
    %v2854 = vmul.f32 %v2806, %v2833
    %v2855 = vmul.f32 %v2807, %v2838
    %v2856 = vmul.f32 %v2808, %v2843
    %v2857 = vmul.f32 %v2809, %v2848
    %v2858 = vld [vmem:[#allocation5] sm:$0xff]
    %v2859 = vld [vmem:[#allocation5 + $0x8] sm:$0xff]
    %v2860 = vld [vmem:[#allocation5 + $0x10] sm:$0xff]
    %v2861 = vld [vmem:[#allocation5 + $0x18] sm:$0xff]
    %v2862 = vld [vmem:[#allocation5 + $0x20] sm:$0xff]
    %v2863 = vld [vmem:[#allocation5 + $0x28] sm:$0xff]
    %v2864 = vld [vmem:[#allocation5 + $0x30] sm:$0xff]
    %v2865 = vld [vmem:[#allocation5 + $0x38] sm:$0xff]
    %v2866 = vmul.f32 %v2858, %v2813
    %v2867 = vmul.f32 %v2859, %v2818
    %v2868 = vmul.f32 %v2860, %v2823
    %v2869 = vmul.f32 %v2861, %v2828
    %v2870 = vmul.f32 %v2862, %v2833
    %v2871 = vmul.f32 %v2863, %v2838
    %v2872 = vmul.f32 %v2864, %v2843
    %v2873 = vmul.f32 %v2865, %v2848
    %v2874 = vld [vmem:[%s10] sm:$0x1]
    %v2876 = vlaneseq
    %v2877 = vshrl.u32 %v2876, 7
    %v2878 = vsub.s32 0, %v2877
    %v2879 = vrot.slane %v2874, %v2878
    %v2881 = vmul.f32 %v2850, %v2879
    %v2882 = vmul.f32 %v2851, %v2879
    %v2883 = vmul.f32 %v2852, %v2879
    %v2884 = vmul.f32 %v2853, %v2879
    %v2885 = vmul.f32 %v2854, %v2879
    %v2886 = vmul.f32 %v2855, %v2879
    %v2887 = vmul.f32 %v2856, %v2879
    %v2888 = vmul.f32 %v2857, %v2879
    %v2889 = vld [vmem:[%s12] sm:$0x1]
    %v2891 = vlaneseq
    %v2892 = vshrl.u32 %v2891, 7
    %v2893 = vsub.s32 0, %v2892
    %v2894 = vrot.slane %v2889, %v2893
    %v2896 = vadd.f32 %v2881, %v2894
    %v2897 = vadd.f32 %v2882, %v2894
    %v2898 = vadd.f32 %v2883, %v2894
    %v2899 = vadd.f32 %v2884, %v2894
    %v2900 = vadd.f32 %v2885, %v2894
    %v2901 = vadd.f32 %v2886, %v2894
    %v2902 = vadd.f32 %v2887, %v2894
    %v2903 = vadd.f32 %v2888, %v2894
    %v2904 = vmul.f32 %v2896, %v2813
    %v2905 = vmul.f32 %v2897, %v2818
    %v2906 = vmul.f32 %v2898, %v2823
    %v2907 = vmul.f32 %v2899, %v2828
    %v2908 = vmul.f32 %v2900, %v2833
    %v2909 = vmul.f32 %v2901, %v2838
    %v2910 = vmul.f32 %v2902, %v2843
    %v2911 = vmul.f32 %v2903, %v2848
    %v2912 = vld [vmem:[%s11] sm:$0x1]
    %v2914 = vlaneseq
    %v2915 = vshrl.u32 %v2914, 7
    %v2916 = vsub.s32 0, %v2915
    %v2917 = vrot.slane %v2912, %v2916
    %v2919 = vmul.f32 %v2866, %v2917
    %v2920 = vmul.f32 %v2867, %v2917
    %v2921 = vmul.f32 %v2868, %v2917
    %v2922 = vmul.f32 %v2869, %v2917
    %v2923 = vmul.f32 %v2870, %v2917
    %v2924 = vmul.f32 %v2871, %v2917
    %v2925 = vmul.f32 %v2872, %v2917
    %v2926 = vmul.f32 %v2873, %v2917
    %v2927 = vld [vmem:[%s13] sm:$0x1]
    %v2929 = vlaneseq
    %v2930 = vshrl.u32 %v2929, 7
    %v2931 = vsub.s32 0, %v2930
    %v2932 = vrot.slane %v2927, %v2931
    %v2934 = vadd.f32 %v2919, %v2932
    %v2935 = vadd.f32 %v2920, %v2932
    %v2936 = vadd.f32 %v2921, %v2932
    %v2937 = vadd.f32 %v2922, %v2932
    %v2938 = vadd.f32 %v2923, %v2932
    %v2939 = vadd.f32 %v2924, %v2932
    %v2940 = vadd.f32 %v2925, %v2932
    %v2941 = vadd.f32 %v2926, %v2932
    %v2942 = vmul.f32 %v2934, %v2813
    %v2943 = vmul.f32 %v2935, %v2818
    %v2944 = vmul.f32 %v2936, %v2823
    %v2945 = vmul.f32 %v2937, %v2828
    %v2946 = vmul.f32 %v2938, %v2833
    %v2947 = vmul.f32 %v2939, %v2838
    %v2948 = vmul.f32 %v2940, %v2843
    %v2949 = vmul.f32 %v2941, %v2848
    %v2950 = vpack.c.bf16 %v2905, %v2904
    %v2951 = vpack.c.bf16 %v2907, %v2906
    %v2952 = vpack.c.bf16 %v2909, %v2908
    %v2953 = vpack.c.bf16 %v2911, %v2910
    %v2954 = vld [vmem:[%s14] sm:$0xf]
    %v2955 = vld [vmem:[%s14 + $0x4] sm:$0xf]
    %v2956 = vld [vmem:[%s14 + $0x8] sm:$0xf]
    %v2957 = vld [vmem:[%s14 + $0xc] sm:$0xf]
    %v2958 = vpack.c.bf16 %v2943, %v2942
    %v2959 = vpack.c.bf16 %v2945, %v2944
    %v2960 = vpack.c.bf16 %v2947, %v2946
    %v2961 = vpack.c.bf16 %v2949, %v2948
    %v2962 = vld [vmem:[%s15] sm:$0xf]
    %v2963 = vld [vmem:[%s15 + $0x4] sm:$0xf]
    %v2964 = vld [vmem:[%s15 + $0x8] sm:$0xf]
    %v2965 = vld [vmem:[%s15 + $0xc] sm:$0xf]
    %v2970 = vunpack.c.l.b16 %v2962
    %v2971 = vunpack.c.l.b16 %v2963
    %v2972 = vunpack.c.l.b16 %v2964
    %v2973 = vunpack.c.l.b16 %v2965
    %v2974 = vpack.c.b16 %v2971, %v2970
    %v2975 = vpack.c.b16 %v2973, %v2972
    %v2979 = vsel %vm143, %v2958, 0
    %v2982 = vsel %vm143, %v2959, 0
    %v2985 = vsel %vm143, %v2960, 0
    %v2988 = vsel %vm143, %v2961, 0
    %2990 = vmatprep.subr.bf16.mxu0 0
    %2991 = vmatpush1.bf16.msra.mxu0 %v2974
    %2992 = vmatprep.subr.bf16.mxu0 0
    %2993 = vmatpush1.bf16.msra.mxu0 %v2975
    %2994 = vmatprep.subr.bf16.mxu0 0
    %2995 = vmatpush1.bf16.msra.mxu0 0
    %2996 = vmatprep.subr.bf16.mxu0 0
    %2997 = vmatpush1.bf16.msra.mxu0 0
    %2998 = vmatprep.subr.bf16.mxu0 0
    %2999 = vmatpush1.bf16.msra.mxu0 0
    %3000 = vmatprep.subr.bf16.mxu0 0
    %3001 = vmatpush1.bf16.msra.mxu0 0
    %3002 = vmatprep.subr.bf16.mxu0 0
    %3003 = vmatpush1.bf16.msra.mxu0 0
    %3004 = vmatprep.subr.bf16.mxu0 0
    %3005 = vmatpush1.bf16.msra.mxu0 0
    %3006 = vmatprep.subr.bf16.mxu0 0
    %3007 = vmatpush1.bf16.msra.mxu0 0
    %3008 = vmatprep.subr.bf16.mxu0 0
    %3009 = vmatpush1.bf16.msra.mxu0 0
    %3010 = vmatprep.subr.bf16.mxu0 0
    %3011 = vmatpush1.bf16.msra.mxu0 0
    %3012 = vmatprep.subr.bf16.mxu0 0
    %3013 = vmatpush1.bf16.msra.mxu0 0
    %3014 = vmatprep.subr.bf16.mxu0 0
    %3015 = vmatpush1.bf16.msra.mxu0 0
    %3016 = vmatprep.subr.bf16.mxu0 0
    %3017 = vmatpush1.bf16.msra.mxu0 0
    %3018 = vmatprep.subr.bf16.mxu0 0
    %3019 = vmatpush1.bf16.msra.mxu0 0
    %3020 = vmatprep.subr.bf16.mxu0 0
    %3021 = vmatpush1.bf16.msra.mxu0 0
    %3022 = vmatprep.mubr.bf16.mxu0 0
    %3023 = vmatmul.mubr.bf16.gmra.mrb[0].mxu0 %v2979
    %v3024 = vpop.f32.mrb[0].mxu0
    %v3025 = vadd.f32 0.0, %v3024
    %v3026 = vpop.f32.mrb[0].mxu0
    %v3027 = vpop.f32.mrb[0].mxu0
    %v3028 = vadd.f32 0.0, %v3027
    %v3029 = vpop.f32.mrb[0].mxu0
    %3030 = vmatprep.mubr.bf16.mxu0 0
    %3031 = vmatmul.mubr.bf16.gmra.mrb[0].mxu0 %v2982
    %v3032 = vpop.f32.mrb[0].mxu0
    %v3033 = vadd.f32 0.0, %v3032
    %v3034 = vpop.f32.mrb[0].mxu0
    %v3035 = vpop.f32.mrb[0].mxu0
    %v3036 = vadd.f32 0.0, %v3035
    %v3037 = vpop.f32.mrb[0].mxu0
    %3038 = vmatprep.mubr.bf16.mxu0 0
    %3039 = vmatmul.mubr.bf16.gmra.mrb[0].mxu0 %v2985
    %v3040 = vpop.f32.mrb[0].mxu0
    %v3041 = vadd.f32 0.0, %v3040
    %v3042 = vpop.f32.mrb[0].mxu0
    %v3043 = vpop.f32.mrb[0].mxu0
    %v3044 = vadd.f32 0.0, %v3043
    %v3045 = vpop.f32.mrb[0].mxu0
    %3046 = vmatprep.mubr.bf16.mxu0 0
    %3047 = vmatmul.mubr.bf16.gmra.mrb[0].mxu0 %v2988
    %v3048 = vpop.f32.mrb[0].mxu0
    %v3049 = vadd.f32 0.0, %v3048
    %v3050 = vpop.f32.mrb[0].mxu0
    %v3051 = vpop.f32.mrb[0].mxu0
    %v3052 = vadd.f32 0.0, %v3051
    %v3053 = vpop.f32.mrb[0].mxu0
    %3054 = vdwg.mxu0
    %v3059 = vunpack.c.l.b16 %v2954
    %v3060 = vunpack.c.l.b16 %v2955
    %v3061 = vunpack.c.l.b16 %v2956
    %v3062 = vunpack.c.l.b16 %v2957
    %v3063 = vpack.c.b16 %v3060, %v3059
    %v3064 = vpack.c.b16 %v3062, %v3061
    %v3068 = vsel %vm143, %v2950, 0
    %v3071 = vsel %vm143, %v2951, 0
    %v3074 = vsel %vm143, %v2952, 0
    %v3077 = vsel %vm143, %v2953, 0
    %3079 = vmatprep.subr.bf16.mxu0 0
    %3080 = vmatpush1.bf16.msra.mxu0 %v3063
    %3081 = vmatprep.subr.bf16.mxu0 0
    %3082 = vmatpush1.bf16.msra.mxu0 %v3064
    %3083 = vmatprep.subr.bf16.mxu0 0
    %3084 = vmatpush1.bf16.msra.mxu0 0
    %3085 = vmatprep.subr.bf16.mxu0 0
    %3086 = vmatpush1.bf16.msra.mxu0 0
    %3087 = vmatprep.subr.bf16.mxu0 0
    %3088 = vmatpush1.bf16.msra.mxu0 0
    %3089 = vmatprep.subr.bf16.mxu0 0
    %3090 = vmatpush1.bf16.msra.mxu0 0
    %3091 = vmatprep.subr.bf16.mxu0 0
    %3092 = vmatpush1.bf16.msra.mxu0 0
    %3093 = vmatprep.subr.bf16.mxu0 0
    %3094 = vmatpush1.bf16.msra.mxu0 0
    %3095 = vmatprep.subr.bf16.mxu0 0
    %3096 = vmatpush1.bf16.msra.mxu0 0
    %3097 = vmatprep.subr.bf16.mxu0 0
    %3098 = vmatpush1.bf16.msra.mxu0 0
    %3099 = vmatprep.subr.bf16.mxu0 0
    %3100 = vmatpush1.bf16.msra.mxu0 0
    %3101 = vmatprep.subr.bf16.mxu0 0
    %3102 = vmatpush1.bf16.msra.mxu0 0
    %3103 = vmatprep.subr.bf16.mxu0 0
    %3104 = vmatpush1.bf16.msra.mxu0 0
    %3105 = vmatprep.subr.bf16.mxu0 0
    %3106 = vmatpush1.bf16.msra.mxu0 0
    %3107 = vmatprep.subr.bf16.mxu0 0
    %3108 = vmatpush1.bf16.msra.mxu0 0
    %3109 = vmatprep.subr.bf16.mxu0 0
    %3110 = vmatpush1.bf16.msra.mxu0 0
    %3111 = vmatprep.mubr.bf16.mxu0 0
    %3112 = vmatmul.mubr.bf16.gmra.mrb[0].mxu0 %v3068
    %v3113 = vpop.f32.mrb[0].mxu0
    %v3114 = vadd.f32 %v3025, %v3113
    %v3115 = vpop.f32.mrb[0].mxu0
    %v3116 = vpop.f32.mrb[0].mxu0
    %v3117 = vadd.f32 %v3028, %v3116
    %v3118 = vpop.f32.mrb[0].mxu0
    %3119 = vmatprep.mubr.bf16.mxu0 0
    %3120 = vmatmul.mubr.bf16.gmra.mrb[0].mxu0 %v3071
    %v3121 = vpop.f32.mrb[0].mxu0
    %v3122 = vadd.f32 %v3033, %v3121
    %v3123 = vpop.f32.mrb[0].mxu0
    %v3124 = vpop.f32.mrb[0].mxu0
    %v3125 = vadd.f32 %v3036, %v3124
    %v3126 = vpop.f32.mrb[0].mxu0
    %3127 = vmatprep.mubr.bf16.mxu0 0
    %3128 = vmatmul.mubr.bf16.gmra.mrb[0].mxu0 %v3074
    %v3129 = vpop.f32.mrb[0].mxu0
    %v3130 = vadd.f32 %v3041, %v3129
    %v3131 = vpop.f32.mrb[0].mxu0
    %v3132 = vpop.f32.mrb[0].mxu0
    %v3133 = vadd.f32 %v3044, %v3132
    %v3134 = vpop.f32.mrb[0].mxu0
    %3135 = vmatprep.mubr.bf16.mxu0 0
    %3136 = vmatmul.mubr.bf16.gmra.mrb[0].mxu0 %v3077
    %v3137 = vpop.f32.mrb[0].mxu0
    %v3138 = vadd.f32 %v3049, %v3137
    %v3139 = vpop.f32.mrb[0].mxu0
    %v3140 = vpop.f32.mrb[0].mxu0
    %v3141 = vadd.f32 %v3052, %v3140
    %v3142 = vpop.f32.mrb[0].mxu0
    %3143 = vdwg.mxu0
    %v3144 = vld [vmem:[%s16] sm:$0x1]
    %v3146 = vlaneseq
    %v3147 = vshrl.u32 %v3146, 7
    %v3148 = vsub.s32 0, %v3147
    %v3149 = vrot.slane %v3144, %v3148
    %v3151 = vadd.f32 %v3114, %v3149
    %v3152 = vadd.f32 %v3117, %v3149
    %v3153 = vadd.f32 %v3122, %v3149
    %v3154 = vadd.f32 %v3125, %v3149
    %v3155 = vadd.f32 %v3130, %v3149
    %v3156 = vadd.f32 %v3133, %v3149
    %v3157 = vadd.f32 %v3138, %v3149
    %v3158 = vadd.f32 %v3141, %v3149
    %v3159 = vmul.f32 %v3151, %v2813
    %v3160 = vmul.f32 %v3152, %v2818
    %v3161 = vmul.f32 %v3153, %v2823
    %v3162 = vmul.f32 %v3154, %v2828
    %v3163 = vmul.f32 %v3155, %v2833
    %v3164 = vmul.f32 %v3156, %v2838
    %v3165 = vmul.f32 %v3157, %v2843
    %v3166 = vmul.f32 %v3158, %v2848
    %v3167 = vsub.f32 %v2794, 1.0
    %v3168 = vsub.f32 %v2795, 1.0
    %v3169 = vsub.f32 %v2796, 1.0
    %v3170 = vsub.f32 %v2797, 1.0
    %v3171 = vsub.f32 %v2798, 1.0
    %v3172 = vsub.f32 %v2799, 1.0
    %v3173 = vsub.f32 %v2800, 1.0
    %v3174 = vsub.f32 %v2801, 1.0
    %v3175 = vmul.f32 %v3167, 65500.0
    %v3176 = vmul.f32 %v3168, 65500.0
    %v3177 = vmul.f32 %v3169, 65500.0
    %v3178 = vmul.f32 %v3170, 65500.0
    %v3179 = vmul.f32 %v3171, 65500.0
    %v3180 = vmul.f32 %v3172, 65500.0
    %v3181 = vmul.f32 %v3173, 65500.0
    %v3182 = vmul.f32 %v3174, 65500.0
    %3184 = vset.pattern.permute.xlu0 0
    %3185 = vperm.xlu0 %3184, %v3175
    %v3186 = vpop.permute.xlu0 %3185
    %3189 = vset.pattern.permute.xlu0 0
    %3190 = vperm.xlu0 %3189, %v3176
    %v3191 = vpop.permute.xlu0 %3190
    %3194 = vset.pattern.permute.xlu0 0
    %3195 = vperm.xlu0 %3194, %v3177
    %v3196 = vpop.permute.xlu0 %3195
    %3199 = vset.pattern.permute.xlu0 0
    %3200 = vperm.xlu0 %3199, %v3178
    %v3201 = vpop.permute.xlu0 %3200
    %3204 = vset.pattern.permute.xlu0 0
    %3205 = vperm.xlu0 %3204, %v3179
    %v3206 = vpop.permute.xlu0 %3205
    %3209 = vset.pattern.permute.xlu0 0
    %3210 = vperm.xlu0 %3209, %v3180
    %v3211 = vpop.permute.xlu0 %3210
    %3214 = vset.pattern.permute.xlu0 0
    %3215 = vperm.xlu0 %3214, %v3181
    %v3216 = vpop.permute.xlu0 %3215
    %3219 = vset.pattern.permute.xlu0 0
    %3220 = vperm.xlu0 %3219, %v3182
    %v3221 = vpop.permute.xlu0 %3220
    %v3223 = vadd.f32 %v3159, %v3186
    %v3224 = vadd.f32 %v3160, %v3191
    %v3225 = vadd.f32 %v3161, %v3196
    %v3226 = vadd.f32 %v3162, %v3201
    %v3227 = vadd.f32 %v3163, %v3206
    %v3228 = vadd.f32 %v3164, %v3211
    %v3229 = vadd.f32 %v3165, %v3216
    %v3230 = vadd.f32 %v3166, %v3221
    %vm3231 = vcmask 523264
    %v3232 = vsel %vm3231, %v3223, -inf
    %v3233 = vrot.slane %v3232, 4
    %v3234 = vmax.f32 %v3232, %v3233
    %v3235 = vrot.slane %v3234, 2
    %v3236 = vmax.f32 %v3234, %v3235
    %v3237 = vrot.slane %v3236, 1
    %v3238 = vmax.f32 %v3236, %v3237
    %v3239 = vsel %vm3231, %v3224, -inf
    %v3240 = vrot.slane %v3239, 4
    %v3241 = vmax.f32 %v3239, %v3240
    %v3242 = vrot.slane %v3241, 2
    %v3243 = vmax.f32 %v3241, %v3242
    %v3244 = vrot.slane %v3243, 1
    %v3245 = vmax.f32 %v3243, %v3244
    %v3246 = vsel %vm3231, %v3225, -inf
    %v3247 = vrot.slane %v3246, 4
    %v3248 = vmax.f32 %v3246, %v3247
    %v3249 = vrot.slane %v3248, 2
    %v3250 = vmax.f32 %v3248, %v3249
    %v3251 = vrot.slane %v3250, 1
    %v3252 = vmax.f32 %v3250, %v3251
    %v3253 = vsel %vm3231, %v3226, -inf
    %v3254 = vrot.slane %v3253, 4
    %v3255 = vmax.f32 %v3253, %v3254
    %v3256 = vrot.slane %v3255, 2
    %v3257 = vmax.f32 %v3255, %v3256
    %v3258 = vrot.slane %v3257, 1
    %v3259 = vmax.f32 %v3257, %v3258
    %v3260 = vsel %vm3231, %v3227, -inf
    %v3261 = vrot.slane %v3260, 4
    %v3262 = vmax.f32 %v3260, %v3261
    %v3263 = vrot.slane %v3262, 2
    %v3264 = vmax.f32 %v3262, %v3263
    %v3265 = vrot.slane %v3264, 1
    %v3266 = vmax.f32 %v3264, %v3265
    %v3267 = vsel %vm3231, %v3228, -inf
    %v3268 = vrot.slane %v3267, 4
    %v3269 = vmax.f32 %v3267, %v3268
    %v3270 = vrot.slane %v3269, 2
    %v3271 = vmax.f32 %v3269, %v3270
    %v3272 = vrot.slane %v3271, 1
    %v3273 = vmax.f32 %v3271, %v3272
    %v3274 = vsel %vm3231, %v3229, -inf
    %v3275 = vrot.slane %v3274, 4
    %v3276 = vmax.f32 %v3274, %v3275
    %v3277 = vrot.slane %v3276, 2
    %v3278 = vmax.f32 %v3276, %v3277
    %v3279 = vrot.slane %v3278, 1
    %v3280 = vmax.f32 %v3278, %v3279
    %v3281 = vsel %vm3231, %v3230, -inf
    %v3282 = vrot.slane %v3281, 4
    %v3283 = vmax.f32 %v3281, %v3282
    %v3284 = vrot.slane %v3283, 2
    %v3285 = vmax.f32 %v3283, %v3284
    %v3286 = vrot.slane %v3285, 1
    %v3287 = vmax.f32 %v3285, %v3286
    %v3288 = vpack.c.bf16 %v3238, %v3238
    %v3289 = vpack.c.bf16 %v3245, %v3245
    %v3290 = vpack.c.bf16 %v3252, %v3252
    %v3291 = vpack.c.bf16 %v3259, %v3259
    %v3292 = vpack.c.bf16 %v3266, %v3266
    %v3293 = vpack.c.bf16 %v3273, %v3273
    %v3294 = vpack.c.bf16 %v3280, %v3280
    %v3295 = vpack.c.bf16 %v3287, %v3287
    %v3296 = vld [vmem:[%s17] sm:$0xf]
    %v3297 = vld [vmem:[%s17 + $0x4] sm:$0xf]
    %v3298 = vld [vmem:[%s17 + $0x8] sm:$0xf]
    %v3299 = vld [vmem:[%s17 + $0xc] sm:$0xf]
    %v3300 = vld [vmem:[%s17 + $0x10] sm:$0xf]
    %v3301 = vld [vmem:[%s17 + $0x14] sm:$0xf]
    %v3302 = vld [vmem:[%s17 + $0x18] sm:$0xf]
    %v3303 = vld [vmem:[%s17 + $0x1c] sm:$0xf]
    %v3304 = vld [vmem:[%s18] sm:$0x1]
    %v3306 = vlaneseq
    %v3307 = vshrl.u32 %v3306, 7
    %v3308 = vsub.s32 0, %v3307
    %v3309 = vrot.slane %v3304, %v3308
    %v3319 = vunpack.c.l.b16 %v3288
    %v3320 = vunpack.c.l.b16 %v3289
    %v3321 = vunpack.c.l.b16 %v3290
    %v3322 = vunpack.c.l.b16 %v3291
    %v3323 = vunpack.c.l.b16 %v3292
    %v3324 = vunpack.c.l.b16 %v3293
    %v3325 = vunpack.c.l.b16 %v3294
    %v3326 = vunpack.c.l.b16 %v3295
    %vm3327 = vcmask 1041409
    %v3328 = vsel %vm3327, %v3320, %v3319
    %vm3329 = vcmask 1042434
    %v3330 = vsel %vm3329, %v3321, %v3328
    %vm3331 = vcmask 1043459
    %v3332 = vsel %vm3331, %v3322, %v3330
    %vm3333 = vcmask 1044484
    %v3334 = vsel %vm3333, %v3323, %v3332
    %vm3335 = vcmask 1045509
    %v3336 = vsel %vm3335, %v3324, %v3334
    %vm3337 = vcmask 1046534
    %v3338 = vsel %vm3337, %v3325, %v3336
    %vm3339 = vcmask 1047559
    %v3340 = vsel %vm3339, %v3326, %v3338
    %v3341 = vpack.c.b16 %v3340, %v3340
    %v3350 = vunpack.c.l.b16 %v3296
    %v3351 = vunpack.c.l.b16 %v3297
    %v3352 = vunpack.c.l.b16 %v3298
    %v3353 = vunpack.c.l.b16 %v3299
    %v3354 = vunpack.c.l.b16 %v3300
    %v3355 = vunpack.c.l.b16 %v3301
    %v3356 = vunpack.c.l.b16 %v3302
    %v3357 = vunpack.c.l.b16 %v3303
    %v3358 = vpack.c.b16 %v3351, %v3350
    %v3359 = vpack.c.b16 %v3353, %v3352
    %v3360 = vpack.c.b16 %v3355, %v3354
    %v3361 = vpack.c.b16 %v3357, %v3356
    %v3367 = vsel %vm3231, %v3341, 0
    %3369 = vmatprep.subr.bf16.mxu0 0
    %3370 = vmatpush1.bf16.msra.mxu0 %v3358
    %3371 = vmatprep.subr.bf16.mxu0 0
    %3372 = vmatpush1.bf16.msra.mxu0 %v3359
    %3373 = vmatprep.subr.bf16.mxu0 0
    %3374 = vmatpush1.bf16.msra.mxu0 %v3360
    %3375 = vmatprep.subr.bf16.mxu0 0
    %3376 = vmatpush1.bf16.msra.mxu0 %v3361
    %3377 = vmatprep.subr.bf16.mxu0 0
    %3378 = vmatpush1.bf16.msra.mxu0 0
    %3379 = vmatprep.subr.bf16.mxu0 0
    %3380 = vmatpush1.bf16.msra.mxu0 0
    %3381 = vmatprep.subr.bf16.mxu0 0
    %3382 = vmatpush1.bf16.msra.mxu0 0
    %3383 = vmatprep.subr.bf16.mxu0 0
    %3384 = vmatpush1.bf16.msra.mxu0 0
    %3385 = vmatprep.subr.bf16.mxu0 0
    %3386 = vmatpush1.bf16.msra.mxu0 0
    %3387 = vmatprep.subr.bf16.mxu0 0
    %3388 = vmatpush1.bf16.msra.mxu0 0
    %3389 = vmatprep.subr.bf16.mxu0 0
    %3390 = vmatpush1.bf16.msra.mxu0 0
    %3391 = vmatprep.subr.bf16.mxu0 0
    %3392 = vmatpush1.bf16.msra.mxu0 0
    %3393 = vmatprep.subr.bf16.mxu0 0
    %3394 = vmatpush1.bf16.msra.mxu0 0
    %3395 = vmatprep.subr.bf16.mxu0 0
    %3396 = vmatpush1.bf16.msra.mxu0 0
    %3397 = vmatprep.subr.bf16.mxu0 0
    %3398 = vmatpush1.bf16.msra.mxu0 0
    %3399 = vmatprep.subr.bf16.mxu0 0
    %3400 = vmatpush1.bf16.msra.mxu0 0
    %3401 = vmatprep.mubr.bf16.mxu0 0
    %3402 = vmatmul.mubr.bf16.gmra.mrb[0].mxu0 %v3367
    %v3403 = vpop.f32.mrb[0].mxu0
    %v3404 = vadd.f32 %v3309, %v3403
    %v3405 = vpop.f32.mrb[0].mxu0
    %v3406 = vpop.f32.mrb[0].mxu0
    %v3407 = vpop.f32.mrb[0].mxu0
    %3408 = vdwg.mxu0
    %vm3409 = vcmask 64512
    %3410 = vst.msk [vmem:[#allocation6] sm:$0xff] %vm3409, %v3404
    // Predicated region
    $region78: #{tpu_custom_call.1} parent=1 // pred_check
      _
    $region79: #{tpu_custom_call.1} parent=1 // pred_check_branch
      %3412 = sbr.rel (0) target = $region81
    $region80: #{tpu_custom_call.1} parent=1 // pred_region
      %s3414 = ssub.s32 128, 128
      %3415 = vsyncadd [#allocation7], %s3414
      %s3417 = sshll.u32 [#allocation6], 4
      %s3418 = int_to_ptr.vmem [resolvable:$true] %s3417
      %3420 = dma.vmem_to_hbm [thread:$0]  %s3418, 128, %s19, [#allocation7]
    $region81: #{tpu_custom_call.1} parent=1 // pred_fallthru
      _
    // Predicated region
    $region82: #{tpu_custom_call.1} parent=1 // pred_check
      _
    $region83: #{tpu_custom_call.1} parent=1 // pred_check_branch
      %3422 = sbr.rel (0) target = $region85
    $region84: #{tpu_custom_call.1} parent=1 // pred_region
      %3423 = dma.done [#allocation7], 128
    $region85: #{tpu_custom_call.1} parent=1 // pred_fallthru
      _
    %3424 = vsyncpa [#allocation7], 1

</llo_original>
